<compile_context>
chip_gen: v5e
topology: v5e:2x2
jax: 0.10.0
libtpu: 0.0.40
codegen_flags: <defaults>
</compile_context>

<pallas_src>
import functools
import math

import jax
import jax.numpy as jnp
from jax import lax
from jax.experimental import pallas as pl
from jax.experimental.pallas import tpu as pltpu


_BF16 = jnp.bfloat16

_CPARAMS = pltpu.CompilerParams(
    dimension_semantics=("parallel",),
    vmem_limit_bytes=48 * 1024 * 1024,
)


# ----------------------------- in-kernel helpers -----------------------------

def _elu(x):
    return jnp.where(x > 0, x, jnp.exp(jnp.minimum(x, 0.0)) - 1.0)


def _sigmoid(x):
    return 1.0 / (1.0 + jnp.exp(-x))


def _mxdot(a, b):
    """MXU matmul: bf16 operands, f32 accumulation."""
    return jnp.dot(a.astype(_BF16), b.astype(_BF16),
                   preferred_element_type=jnp.float32)


def _mxdot_t(a, b):
    """a @ b.T on the MXU (contract last dims), bf16 operands, f32 acc."""
    return lax.dot_general(a.astype(_BF16), b.astype(_BF16),
                           (((1,), (1,)), ((), ())),
                           preferred_element_type=jnp.float32)


def _im2col_2x2(xpad, H, W):
    """(H+1, W+1, C) zero-padded tile -> (H*W, 4*C) tap-major patch matrix."""
    C = xpad.shape[-1]
    cols = [xpad[di:di + H, dj:dj + W, :].reshape(H * W, C)
            for di in range(2) for dj in range(2)]
    return jnp.concatenate(cols, axis=-1)


# ----------------------------- Pallas kernels -----------------------------

def _stem_kernel(x_ref, w_ref, b_ref, o_ref, xpad_ref, *, H, W):
    # Masked 3x3 stem conv (mask 'A' baked into the weights at init).  The
    # input channel count is tiny (ch=1) so the per-tap K=C form is kept here;
    # the hot BasicBlock convs use the single large-K im2col matmul instead.
    xpad_ref[...] = jnp.zeros_like(xpad_ref)
    xpad_ref[1:1 + H, 1:1 + W, :] = x_ref[0]
    xp = xpad_ref[...]
    C = xp.shape[-1]
    acc = None
    t = 0
    for di in range(3):
        for dj in range(3):
            win = xp[di:di + H, dj:dj + W, :].reshape(H * W, C)
            y = jnp.dot(win.astype(_BF16), w_ref[t],
                        preferred_element_type=jnp.float32)
            acc = y if acc is None else acc + y
            t += 1
    o_ref[0] = (acc + b_ref[...]).reshape(H, W, -1)


def _basic_block_kernel(x_ref, w1_ref, b1_ref, w2_ref, b2_ref, o_ref, pad_ref,
                        *, H, W, hidden):
    # Fused BasicBlock.  conv(k=2, padding=1)[:, :, :H, :W] == pad top/left
    # only; the same VMEM scratch is reused for both convs (halo stays zero,
    # and elu(0) == 0 so zero padding of elu(x) is exact).
    pad_ref[...] = jnp.zeros_like(pad_ref)
    ex = _elu(x_ref[0])                      # residual base = elu(x) (inplace ELU)
    pad_ref[1:1 + H, 1:1 + W, :] = ex
    c1 = _elu(_mxdot(_im2col_2x2(pad_ref[...], H, W), w1_ref[...]) + b1_ref[...])
    pad_ref[1:1 + H, 1:1 + W, :] = c1.reshape(H, W, hidden)
    y = _mxdot(_im2col_2x2(pad_ref[...], H, W), w2_ref[...]) + b2_ref[...]
    gated = y[:, :hidden] * _sigmoid(y[:, hidden:])
    o_ref[0] = (ex.reshape(H * W, hidden) + gated).reshape(H, W, hidden)


def _attn_out_kernel(conv_ref, res_ref, posb_ref, wqc_ref, wproj_ref, bproj_ref,
                     woc_ref, boc_ref, woa_ref, boa_ref, wop_ref, bop_ref,
                     o_ref, *, head, qk_dim, v_dim, S):
    conv = conv_ref[0]                                           # (S, hidden) f32
    # qkv 1x1 conv; positional channels + bias were folded into posb outside
    # the kernel, and the 1/sqrt(dq) query scale is folded into the weights.
    qkv = _mxdot(conv, wqc_ref[...]) + posb_ref[...]             # (S, 2qk+v) f32
    dq = qk_dim // head
    dv = v_dim // head
    rows = lax.broadcasted_iota(jnp.int32, (S, S), 0)
    cols = lax.broadcasted_iota(jnp.int32, (S, S), 1)
    neg = jnp.where(cols <= rows, 0.0, -1e30)                    # additive causal mask
    # TODO(synk): for large S (>~2k) tile KV with an online-softmax (flash)
    # loop and add a q-tile grid axis instead of materializing SxS scores.
    heads = []
    for h in range(head):
        q = qkv[:, h * dq:(h + 1) * dq]
        k = qkv[:, qk_dim + h * dq:qk_dim + (h + 1) * dq]
        v = qkv[:, 2 * qk_dim + h * dv:2 * qk_dim + (h + 1) * dv]
        s = _mxdot_t(q, k) + neg
        m = jnp.max(s, axis=-1, keepdims=True)
        e = jnp.exp(s - m)                    # masked entries underflow to exactly 0
        p = e * pl.reciprocal(jnp.sum(e, axis=-1, keepdims=True), approx=True)
        heads.append(_mxdot(p, v))            # (S, dv)
    # Single stacked (S, v_dim) x (v_dim, hidden) projection (head-major cols).
    attn = _mxdot(jnp.concatenate(heads, axis=-1), wproj_ref[...]) + bproj_ref[...]
    # SnailBlock output stack fused with the outer stage residual:
    #   conv_b = elu(out_conv(elu(conv)));  attn_b = elu(out_attn(elu(attn)))
    #   out    = elu(out_proj(elu(conv_b + attn_b))) + elu(res)
    # (kept as two matmuls: each branch has its own ELU before the sum).
    conv_b = _elu(_mxdot(_elu(conv), woc_ref[...]) + boc_ref[...])
    attn_b = _elu(_mxdot(_elu(attn), woa_ref[...]) + boa_ref[...])
    y = _elu(_mxdot(_elu(conv_b + attn_b), wop_ref[...]) + bop_ref[...])
    o_ref[0] = y + _elu(res_ref[0])


def _fc_sample_kernel(x_ref, w_ref, b_ref, u_ref, logit_ref, samp_ref):
    # Final ELU + 1x1 conv fused with Bernoulli(sigmoid(logit)) sampling.
    # Uniform variates come from jax.random outside the kernel.
    logits = _mxdot(_elu(x_ref[...]), w_ref[...]) + b_ref[...]
    logit_ref[...] = logits
    samp_ref[...] = (u_ref[...] < _sigmoid(logits)).astype(samp_ref.dtype)


# ----------------------------- pallas_call wrappers -----------------------------

def stem_conv(x_nhwc, w_taps, b):
    B, H, W, C = x_nhwc.shape
    O = w_taps.shape[-1]
    return pl.pallas_call(
        functools.partial(_stem_kernel, H=H, W=W),
        out_shape=jax.ShapeDtypeStruct((B, H, W, O), jnp.float32),
        grid=(B,),
        in_specs=[
            pl.BlockSpec((1, H, W, C), lambda i: (i, 0, 0, 0)),
            pl.BlockSpec((9, C, O), lambda i: (0, 0, 0)),
            pl.BlockSpec((1, O), lambda i: (0, 0)),
        ],
        out_specs=pl.BlockSpec((1, H, W, O), lambda i: (i, 0, 0, 0)),
        scratch_shapes=[pltpu.VMEM((H + 2, W + 2, C), jnp.float32)],
        compiler_params=_CPARAMS,
    )(x_nhwc, w_taps, b.reshape(1, O))


def basic_block(x_nhwc, w1, b1, w2, b2):
    B, H, W, hidden = x_nhwc.shape
    return pl.pallas_call(
        functools.partial(_basic_block_kernel, H=H, W=W, hidden=hidden),
        out_shape=jax.ShapeDtypeStruct((B, H, W, hidden), jnp.float32),
        grid=(B,),
        in_specs=[
            pl.BlockSpec((1, H, W, hidden), lambda i: (i, 0, 0, 0)),
            pl.BlockSpec((4 * hidden, hidden), lambda i: (0, 0)),
            pl.BlockSpec((1, hidden), lambda i: (0, 0)),
            pl.BlockSpec((4 * hidden, 2 * hidden), lambda i: (0, 0)),
            pl.BlockSpec((1, 2 * hidden), lambda i: (0, 0)),
        ],
        out_specs=pl.BlockSpec((1, H, W, hidden), lambda i: (i, 0, 0, 0)),
        scratch_shapes=[pltpu.VMEM((H + 1, W + 1, hidden), jnp.float32)],
        compiler_params=_CPARAMS,
    )(x_nhwc, w1, b1.reshape(1, hidden), w2, b2.reshape(1, 2 * hidden))


def attn_output(conv_nhwc, res_nhwc, pos_bias, sp, head, qk_dim, v_dim):
    B, H, W, hidden = conv_nhwc.shape
    S = H * W
    nq = 2 * qk_dim + v_dim
    conv = conv_nhwc.reshape(B, S, hidden)
    res = res_nhwc.reshape(B, S, hidden)
    row = pl.BlockSpec((1, S, hidden), lambda i: (i, 0, 0))

    def full2(r, c):
        return pl.BlockSpec((r, c), lambda i: (0, 0))

    out = pl.pallas_call(
        functools.partial(_attn_out_kernel, head=head, qk_dim=qk_dim,
                          v_dim=v_dim, S=S),
        out_shape=jax.ShapeDtypeStruct((B, S, hidden), jnp.float32),
        grid=(B,),
        in_specs=[
            row, row,
            full2(S, nq),
            full2(hidden, nq),
            full2(v_dim, hidden), full2(1, hidden),
            full2(hidden, hidden), full2(1, hidden),
            full2(hidden, hidden), full2(1, hidden),
            full2(hidden, hidden), full2(1, hidden),
        ],
        out_specs=row,
        compiler_params=_CPARAMS,
    )(conv, res, pos_bias,
      sp['w_qc'], sp['w_proj'], sp['b_proj'].reshape(1, hidden),
      sp['w_oc'], sp['b_oc'].reshape(1, hidden),
      sp['w_oa'], sp['b_oa'].reshape(1, hidden),
      sp['w_op'], sp['b_op'].reshape(1, hidden))
    return out.reshape(B, H, W, hidden)


def _row_tiling(m):
    # Single full-M step for small slabs (latency-bound); 512/1024-row tiles otherwise.
    if m <= 1024:
        t = ((m + 7) // 8) * 8
        return t, t - m
    for t in (1024, 512, 256, 128):
        if m % t == 0:
            return t, 0
    return 512, (-m) % 512


def _pad_rows(x, pad):
    return jnp.pad(x, ((0, pad), (0, 0))) if pad else x


def fc_and_sample(x, w, b, u):
    m, hidden = x.shape
    ch = w.shape[1]
    tm, pad = _row_tiling(m)
    x = _pad_rows(x, pad)
    u = _pad_rows(u, pad)
    mt = m + pad
    logits, sample = pl.pallas_call(
        _fc_sample_kernel,
        out_shape=(jax.ShapeDtypeStruct((mt, ch), jnp.float32),
                   jax.ShapeDtypeStruct((mt, ch), jnp.float32)),
        grid=(mt // tm,),
        in_specs=[
            pl.BlockSpec((tm, hidden), lambda i: (i, 0)),
            pl.BlockSpec((hidden, ch), lambda i: (0, 0)),
            pl.BlockSpec((1, ch), lambda i: (0, 0)),
            pl.BlockSpec((tm, ch), lambda i: (i, 0)),
        ],
        out_specs=(pl.BlockSpec((tm, ch), lambda i: (i, 0)),
                   pl.BlockSpec((tm, ch), lambda i: (i, 0))),
        compiler_params=_CPARAMS,
    )(x, w, b.reshape(1, ch), u)
    if pad:
        logits, sample = logits[:m], sample[:m]
    return logits, sample


# ----------------------------- parameter init -----------------------------

def init_conv(key, out_ch, in_ch, kh, kw):
    kw_, kb = jax.random.split(key)
    bound = 1.0 / math.sqrt(in_ch * kh * kw)
    w = jax.random.uniform(kw_, (out_ch, in_ch, kh, kw), jnp.float32, -bound, bound)
    b = jax.random.uniform(kb, (out_ch,), jnp.float32, -bound, bound)
    return w, b


def conv_to_mat(w):           # (O,I,KH,KW) -> (KH*KW*I, O), tap-major rows
    o, i, kh, kw = w.shape
    return jnp.transpose(w, (2, 3, 1, 0)).reshape(kh * kw * i, o)


def stem_mask_A(kh, kw):      # MaskConv2d spatial_mask='A'
    m = jnp.ones((kh, kw), jnp.float32)
    m = m.at[kh // 2 + 1:, :].set(0.0)
    m = m.at[kh // 2:, kw // 2:].set(0.0)
    return m


def init_params(key, ch, hidden, layer, stage, head, qk_dim, v_dim):
    keys = jax.random.split(key, 2 + stage)
    p = {}
    w, b = init_conv(keys[0], hidden, ch, 3, 3)
    w = w * stem_mask_A(3, 3)[None, None]
    p['stem_w'] = conv_to_mat(w).reshape(9, ch, hidden).astype(_BF16)
    p['stem_b'] = b
    # fold the 1/sqrt(dq) query scale into the q columns of the qkv weights/bias
    dq = qk_dim // head
    qscale = jnp.concatenate([jnp.full((qk_dim,), dq ** -0.5, jnp.float32),
                              jnp.ones((qk_dim + v_dim,), jnp.float32)])
    stages = []
    for s in range(stage):
        sk = jax.random.split(keys[1 + s], 2 * layer + 5)
        blocks = []
        for l in range(layer):
            w1, b1 = init_conv(sk[2 * l], hidden, hidden, 2, 2)
            w2, b2 = init_conv(sk[2 * l + 1], hidden * 2, hidden, 2, 2)
            blocks.append(dict(w1=conv_to_mat(w1).astype(_BF16), b1=b1,
                               w2=conv_to_mat(w2).astype(_BF16), b2=b2))
        wq, bq = init_conv(sk[2 * layer + 0], qk_dim * 2 + v_dim, hidden + 2, 1, 1)
        wq = conv_to_mat(wq) * qscale[None, :]              # (hidden+2, 2qk+v)
        bq = bq * qscale
        wp, bp = init_conv(sk[2 * layer + 1], hidden, v_dim, 1, 1)
        woc, boc = init_conv(sk[2 * layer + 2], hidden, hidden, 1, 1)
        woa, boa = init_conv(sk[2 * layer + 3], hidden, hidden, 1, 1)
        wop, bop = init_conv(sk[2 * layer + 4], hidden, hidden, 1, 1)
        stages.append(dict(
            blocks=blocks,
            w_qc=wq[:hidden].astype(_BF16),    # conv-channel rows (MXU operand)
            w_qp=wq[hidden:],                  # positional rows, folded on host
            b_qkv=bq,
            w_proj=conv_to_mat(wp).astype(_BF16), b_proj=bp,
            w_oc=conv_to_mat(woc).astype(_BF16), b_oc=boc,
            w_oa=conv_to_mat(woa).astype(_BF16), b_oa=boa,
            w_op=conv_to_mat(wop).astype(_BF16), b_op=bop))
    p['stages'] = stages
    wf, bf = init_conv(keys[1 + stage], ch, hidden, 1, 1)
    p['fc_w'], p['fc_b'] = conv_to_mat(wf).astype(_BF16), bf
    return p


# ----------------------------- model forward -----------------------------

def pixel_snail_forward(x_nchw, params, *, hidden, head, qk_dim, v_dim,
                        ch, category, rng_key):
    assert ch == 1 and category == 1          # Bernoulli head (test config)
    B, C, H, W = x_nchw.shape
    S = H * W
    x = jnp.transpose(x_nchw, (0, 2, 3, 1)).astype(jnp.float32)   # NHWC

    # positional encoding: channel 0 varies with H, channel 1 with W.
    yc = -0.5 + jnp.arange(H, dtype=jnp.float32) / H
    xc = -0.5 + jnp.arange(W, dtype=jnp.float32) / W
    pos = jnp.stack([jnp.broadcast_to(yc[:, None], (H, W)),
                     jnp.broadcast_to(xc[None, :], (H, W))], axis=-1).reshape(S, 2)

    out = stem_conv(x, params['stem_w'], params['stem_b'])        # (B, H, W, hidden)
    for sp in params['stages']:
        res = out
        conv = out
        for bb in sp['blocks']:
            conv = basic_block(conv, bb['w1'], bb['b1'], bb['w2'], bb['b2'])
        # batch-invariant positional 1x1 conv, hoisted out of the kernel
        pos_bias = pos @ sp['w_qp'] + sp['b_qkv'][None, :]        # (S, 2qk+v)
        out = attn_output(conv, res, pos_bias, sp, head, qk_dim, v_dim)

    u = jax.random.uniform(rng_key, (B * S, ch), dtype=jnp.float32)
    logits, samp = fc_and_sample(out.reshape(B * S, hidden),
                                 params['fc_w'], params['fc_b'], u)

    l_nchw = jnp.transpose(logits.reshape(B, H, W, ch), (0, 3, 1, 2))     # (B,ch,H,W)
    l5 = l_nchw.reshape(B, ch, category, H, W)
    out_logits = jnp.squeeze(jnp.transpose(l5, (0, 2, 1, 3, 4)), axis=2)  # (B,cat,H,W)
    sample = jnp.transpose(samp.reshape(B, H, W, ch), (0, 3, 1, 2))       # (B,ch,H,W)
    # TODO(synk): the autoregressive PixelSnail.sample() pixel loop is not
    # implemented (forward pass only).
    return out_logits, sample


if __name__ == "__main__":
    B, CH, H, W = 2, 1, 8, 8
    hidden, layer, stage, head, qk_dim, v_dim, category = 32, 1, 2, 2, 16, 32, 1

    key = jax.random.PRNGKey(0)
    kx, kp, ks = jax.random.split(key, 3)
    x = jax.random.normal(kx, (B, CH, H, W), dtype=jnp.float32)
    params = init_params(kp, CH, hidden, layer, stage, head, qk_dim, v_dim)

    fwd = jax.jit(functools.partial(
        pixel_snail_forward, hidden=hidden, head=head, qk_dim=qk_dim,
        v_dim=v_dim, ch=CH, category=category))
    out_logits, sample = fwd(x, params, rng_key=ks)
    jax.block_until_ready((out_logits, sample))

    assert out_logits.shape == (B, category, H, W)
    assert sample.shape == (B, CH, H, W)
    assert bool(jnp.all(jnp.isfinite(out_logits)))
    assert bool(jnp.all((sample == 0.0) | (sample == 1.0)))
    print("KERNEL_OK")
</pallas_src>

<mosaic_0001>
module attributes {stable_mosaic.version = 11 : i64} {
  func.func @_attn_out_kernel(%arg0: i32, %arg1: memref<1x64x32xf32, #tpu.memory_space<vmem>>, %arg2: memref<1x64x32xf32, #tpu.memory_space<vmem>>, %arg3: memref<64x64xf32, #tpu.memory_space<vmem>>, %arg4: memref<32x64xbf16, #tpu.memory_space<vmem>>, %arg5: memref<32x32xbf16, #tpu.memory_space<vmem>>, %arg6: memref<1x32xf32, #tpu.memory_space<vmem>>, %arg7: memref<32x32xbf16, #tpu.memory_space<vmem>>, %arg8: memref<1x32xf32, #tpu.memory_space<vmem>>, %arg9: memref<32x32xbf16, #tpu.memory_space<vmem>>, %arg10: memref<1x32xf32, #tpu.memory_space<vmem>>, %arg11: memref<32x32xbf16, #tpu.memory_space<vmem>>, %arg12: memref<1x32xf32, #tpu.memory_space<vmem>>, %arg13: memref<1x64x32xf32, #tpu.memory_space<vmem>>) attributes {dimension_semantics = [#tpu.dimension_semantics<parallel>], iteration_bounds = array<i64: 2>, scalar_prefetch = 0 : i64, scratch_operands = 0 : i64, tpu.core_type = #tpu.core_type<tc>, window_params = [{transform_indices = @transform_0, window_bounds = array<i64: 1, 64, 32>}, {transform_indices = @transform_1, window_bounds = array<i64: 1, 64, 32>}, {pipeline_mode = #tpu.pipeline_mode<synchronous>, transform_indices = @transform_2, window_bounds = array<i64: 64, 64>}, {pipeline_mode = #tpu.pipeline_mode<synchronous>, transform_indices = @transform_3, window_bounds = array<i64: 32, 64>}, {pipeline_mode = #tpu.pipeline_mode<synchronous>, transform_indices = @transform_4, window_bounds = array<i64: 32, 32>}, {pipeline_mode = #tpu.pipeline_mode<synchronous>, transform_indices = @transform_5, window_bounds = array<i64: 1, 32>}, {pipeline_mode = #tpu.pipeline_mode<synchronous>, transform_indices = @transform_6, window_bounds = array<i64: 32, 32>}, {pipeline_mode = #tpu.pipeline_mode<synchronous>, transform_indices = @transform_7, window_bounds = array<i64: 1, 32>}, {pipeline_mode = #tpu.pipeline_mode<synchronous>, transform_indices = @transform_8, window_bounds = array<i64: 32, 32>}, {pipeline_mode = #tpu.pipeline_mode<synchronous>, transform_indices = @transform_9, window_bounds = array<i64: 1, 32>}, {pipeline_mode = #tpu.pipeline_mode<synchronous>, transform_indices = @transform_10, window_bounds = array<i64: 32, 32>}, {pipeline_mode = #tpu.pipeline_mode<synchronous>, transform_indices = @transform_11, window_bounds = array<i64: 1, 32>}, {transform_indices = @transform_12, window_bounds = array<i64: 1, 64, 32>}]} {
    %c0 = arith.constant 0 : index
    %c0_0 = arith.constant 0 : index
    %c0_1 = arith.constant 0 : index
    %0 = vector.load %arg1[%c0, %c0_0, %c0_1] : memref<1x64x32xf32, #tpu.memory_space<vmem>>, vector<1x64x32xf32>
    %1 = vector.shape_cast %0 : vector<1x64x32xf32> to vector<64x32xf32>
    %c0_2 = arith.constant 0 : index
    %c0_3 = arith.constant 0 : index
    %2 = vector.load %arg4[%c0_2, %c0_3] : memref<32x64xbf16, #tpu.memory_space<vmem>>, vector<32x64xbf16>
    %3 = arith.truncf %1 : vector<64x32xf32> to vector<64x32xbf16>
    %cst = arith.constant dense<0.000000e+00> : vector<64x64xf32>
    %4 = tpu.matmul %3, %2, %cst {dimension_numbers = #tpu.dot_dimension_numbers<[1], [0], [0], [1], [0, 0, 1, 1], [], []>} : vector<64x32xbf16>, vector<32x64xbf16>, vector<64x64xf32> -> vector<64x64xf32>
    %c0_4 = arith.constant 0 : index
    %c0_5 = arith.constant 0 : index
    %5 = vector.load %arg3[%c0_4, %c0_5] : memref<64x64xf32, #tpu.memory_space<vmem>>, vector<64x64xf32>
    %6 = arith.addf %4, %5 : vector<64x64xf32>
    %7 = tpu.iota {dimensions = array<i32: 0>} : vector<64x64xi32>
    %8 = tpu.iota {dimensions = array<i32: 1>} : vector<64x64xi32>
    %9 = arith.cmpi sle, %8, %7 : vector<64x64xi32>
    %cst_6 = arith.constant 0.000000e+00 : f32
    %cst_7 = arith.constant -1.000000e+30 : f32
    %10 = vector.broadcast %cst_6 : f32 to vector<64x64xf32>
    %11 = vector.broadcast %cst_7 : f32 to vector<64x64xf32>
    %12 = arith.select %9, %10, %11 : vector<64x64xi1>, vector<64x64xf32>
    %13 = vector.extract_strided_slice %6 {offsets = [0, 0], sizes = [64, 8], strides = [1, 1]} : vector<64x64xf32> to vector<64x8xf32>
    %14 = vector.extract_strided_slice %6 {offsets = [0, 16], sizes = [64, 8], strides = [1, 1]} : vector<64x64xf32> to vector<64x8xf32>
    %15 = vector.extract_strided_slice %6 {offsets = [0, 32], sizes = [64, 16], strides = [1, 1]} : vector<64x64xf32> to vector<64x16xf32>
    %16 = arith.truncf %13 : vector<64x8xf32> to vector<64x8xbf16>
    %17 = arith.truncf %14 : vector<64x8xf32> to vector<64x8xbf16>
    %cst_8 = arith.constant dense<0.000000e+00> : vector<64x64xf32>
    %18 = tpu.matmul %16, %17, %cst_8 {dimension_numbers = #tpu.dot_dimension_numbers<[1], [1], [0], [0], [0, 0, 1, 0], [], []>} : vector<64x8xbf16>, vector<64x8xbf16>, vector<64x64xf32> -> vector<64x64xf32>
    %19 = arith.addf %18, %12 : vector<64x64xf32>
    %cst_9 = arith.constant dense<0xFF800000> : vector<64xf32>
    %20 = vector.multi_reduction <maximumf>, %19, %cst_9 [1] : vector<64x64xf32> to vector<64xf32>
    %21 = vector.shape_cast %20 : vector<64xf32> to vector<64x1xf32>
    %22 = vector.broadcast %21 : vector<64x1xf32> to vector<64x64xf32>
    %23 = arith.subf %19, %22 : vector<64x64xf32>
    %24 = math.exp %23 : vector<64x64xf32>
    %cst_10 = arith.constant dense<0.000000e+00> : vector<64xf32>
    %25 = vector.multi_reduction <add>, %24, %cst_10 [1] : vector<64x64xf32> to vector<64xf32>
    %26 = vector.shape_cast %25 : vector<64xf32> to vector<64x1xf32>
    %27 = tpu.reciprocal %26 {approx = true} : vector<64x1xf32> -> vector<64x1xf32>
    %28 = vector.broadcast %27 : vector<64x1xf32> to vector<64x64xf32>
    %29 = arith.mulf %24, %28 : vector<64x64xf32>
    %30 = arith.truncf %29 : vector<64x64xf32> to vector<64x64xbf16>
    %31 = arith.truncf %15 : vector<64x16xf32> to vector<64x16xbf16>
    %cst_11 = arith.constant dense<0.000000e+00> : vector<64x16xf32>
    %32 = tpu.matmul %30, %31, %cst_11 {dimension_numbers = #tpu.dot_dimension_numbers<[1], [0], [0], [1], [0, 0, 1, 1], [], []>} : vector<64x64xbf16>, vector<64x16xbf16>, vector<64x16xf32> -> vector<64x16xf32>
    %33 = vector.extract_strided_slice %6 {offsets = [0, 8], sizes = [64, 8], strides = [1, 1]} : vector<64x64xf32> to vector<64x8xf32>
    %34 = vector.extract_strided_slice %6 {offsets = [0, 24], sizes = [64, 8], strides = [1, 1]} : vector<64x64xf32> to vector<64x8xf32>
    %35 = vector.extract_strided_slice %6 {offsets = [0, 48], sizes = [64, 16], strides = [1, 1]} : vector<64x64xf32> to vector<64x16xf32>
    %36 = arith.truncf %33 : vector<64x8xf32> to vector<64x8xbf16>
    %37 = arith.truncf %34 : vector<64x8xf32> to vector<64x8xbf16>
    %cst_12 = arith.constant dense<0.000000e+00> : vector<64x64xf32>
    %38 = tpu.matmul %36, %37, %cst_12 {dimension_numbers = #tpu.dot_dimension_numbers<[1], [1], [0], [0], [0, 0, 1, 0], [], []>} : vector<64x8xbf16>, vector<64x8xbf16>, vector<64x64xf32> -> vector<64x64xf32>
    %39 = arith.addf %38, %12 : vector<64x64xf32>
    %cst_13 = arith.constant dense<0xFF800000> : vector<64xf32>
    %40 = vector.multi_reduction <maximumf>, %39, %cst_13 [1] : vector<64x64xf32> to vector<64xf32>
    %41 = vector.shape_cast %40 : vector<64xf32> to vector<64x1xf32>
    %42 = vector.broadcast %41 : vector<64x1xf32> to vector<64x64xf32>
    %43 = arith.subf %39, %42 : vector<64x64xf32>
    %44 = math.exp %43 : vector<64x64xf32>
    %cst_14 = arith.constant dense<0.000000e+00> : vector<64xf32>
    %45 = vector.multi_reduction <add>, %44, %cst_14 [1] : vector<64x64xf32> to vector<64xf32>
    %46 = vector.shape_cast %45 : vector<64xf32> to vector<64x1xf32>
    %47 = tpu.reciprocal %46 {approx = true} : vector<64x1xf32> -> vector<64x1xf32>
    %48 = vector.broadcast %47 : vector<64x1xf32> to vector<64x64xf32>
    %49 = arith.mulf %44, %48 : vector<64x64xf32>
    %50 = arith.truncf %49 : vector<64x64xf32> to vector<64x64xbf16>
    %51 = arith.truncf %35 : vector<64x16xf32> to vector<64x16xbf16>
    %cst_15 = arith.constant dense<0.000000e+00> : vector<64x16xf32>
    %52 = tpu.matmul %50, %51, %cst_15 {dimension_numbers = #tpu.dot_dimension_numbers<[1], [0], [0], [1], [0, 0, 1, 1], [], []>} : vector<64x64xbf16>, vector<64x16xbf16>, vector<64x16xf32> -> vector<64x16xf32>
    %53 = tpu.concatenate %32, %52 in 1 : vector<64x16xf32>, vector<64x16xf32> -> vector<64x32xf32>
    %c0_16 = arith.constant 0 : index
    %c0_17 = arith.constant 0 : index
    %54 = vector.load %arg5[%c0_16, %c0_17] : memref<32x32xbf16, #tpu.memory_space<vmem>>, vector<32x32xbf16>
    %55 = arith.truncf %53 : vector<64x32xf32> to vector<64x32xbf16>
    %cst_18 = arith.constant dense<0.000000e+00> : vector<64x32xf32>
    %56 = tpu.matmul %55, %54, %cst_18 {dimension_numbers = #tpu.dot_dimension_numbers<[1], [0], [0], [1], [0, 0, 1, 1], [], []>} : vector<64x32xbf16>, vector<32x32xbf16>, vector<64x32xf32> -> vector<64x32xf32>
    %c0_19 = arith.constant 0 : index
    %c0_20 = arith.constant 0 : index
    %57 = vector.load %arg6[%c0_19, %c0_20] : memref<1x32xf32, #tpu.memory_space<vmem>>, vector<1x32xf32>
    %58 = vector.broadcast %57 : vector<1x32xf32> to vector<64x32xf32>
    %59 = arith.addf %56, %58 : vector<64x32xf32>
    %cst_21 = arith.constant 0.000000e+00 : f32
    %60 = vector.broadcast %cst_21 : f32 to vector<64x32xf32>
    %61 = arith.cmpf ogt, %1, %60 : vector<64x32xf32>
    %cst_22 = arith.constant 0.000000e+00 : f32
    %62 = vector.broadcast %cst_22 : f32 to vector<64x32xf32>
    %63 = arith.minimumf %1, %62 : vector<64x32xf32>
    %64 = math.exp %63 : vector<64x32xf32>
    %cst_23 = arith.constant 1.000000e+00 : f32
    %65 = vector.broadcast %cst_23 : f32 to vector<64x32xf32>
    %66 = arith.subf %64, %65 : vector<64x32xf32>
    %67 = arith.select %61, %1, %66 : vector<64x32xi1>, vector<64x32xf32>
    %c0_24 = arith.constant 0 : index
    %c0_25 = arith.constant 0 : index
    %68 = vector.load %arg7[%c0_24, %c0_25] : memref<32x32xbf16, #tpu.memory_space<vmem>>, vector<32x32xbf16>
    %69 = arith.truncf %67 : vector<64x32xf32> to vector<64x32xbf16>
    %cst_26 = arith.constant dense<0.000000e+00> : vector<64x32xf32>
    %70 = tpu.matmul %69, %68, %cst_26 {dimension_numbers = #tpu.dot_dimension_numbers<[1], [0], [0], [1], [0, 0, 1, 1], [], []>} : vector<64x32xbf16>, vector<32x32xbf16>, vector<64x32xf32> -> vector<64x32xf32>
    %c0_27 = arith.constant 0 : index
    %c0_28 = arith.constant 0 : index
    %71 = vector.load %arg8[%c0_27, %c0_28] : memref<1x32xf32, #tpu.memory_space<vmem>>, vector<1x32xf32>
    %72 = vector.broadcast %71 : vector<1x32xf32> to vector<64x32xf32>
    %73 = arith.addf %70, %72 : vector<64x32xf32>
    %cst_29 = arith.constant 0.000000e+00 : f32
    %74 = vector.broadcast %cst_29 : f32 to vector<64x32xf32>
    %75 = arith.cmpf ogt, %73, %74 : vector<64x32xf32>
    %cst_30 = arith.constant 0.000000e+00 : f32
    %76 = vector.broadcast %cst_30 : f32 to vector<64x32xf32>
    %77 = arith.minimumf %73, %76 : vector<64x32xf32>
    %78 = math.exp %77 : vector<64x32xf32>
    %cst_31 = arith.constant 1.000000e+00 : f32
    %79 = vector.broadcast %cst_31 : f32 to vector<64x32xf32>
    %80 = arith.subf %78, %79 : vector<64x32xf32>
    %81 = arith.select %75, %73, %80 : vector<64x32xi1>, vector<64x32xf32>
    %cst_32 = arith.constant 0.000000e+00 : f32
    %82 = vector.broadcast %cst_32 : f32 to vector<64x32xf32>
    %83 = arith.cmpf ogt, %59, %82 : vector<64x32xf32>
    %cst_33 = arith.constant 0.000000e+00 : f32
    %84 = vector.broadcast %cst_33 : f32 to vector<64x32xf32>
    %85 = arith.minimumf %59, %84 : vector<64x32xf32>
    %86 = math.exp %85 : vector<64x32xf32>
    %cst_34 = arith.constant 1.000000e+00 : f32
    %87 = vector.broadcast %cst_34 : f32 to vector<64x32xf32>
    %88 = arith.subf %86, %87 : vector<64x32xf32>
    %89 = arith.select %83, %59, %88 : vector<64x32xi1>, vector<64x32xf32>
    %c0_35 = arith.constant 0 : index
    %c0_36 = arith.constant 0 : index
    %90 = vector.load %arg9[%c0_35, %c0_36] : memref<32x32xbf16, #tpu.memory_space<vmem>>, vector<32x32xbf16>
    %91 = arith.truncf %89 : vector<64x32xf32> to vector<64x32xbf16>
    %cst_37 = arith.constant dense<0.000000e+00> : vector<64x32xf32>
    %92 = tpu.matmul %91, %90, %cst_37 {dimension_numbers = #tpu.dot_dimension_numbers<[1], [0], [0], [1], [0, 0, 1, 1], [], []>} : vector<64x32xbf16>, vector<32x32xbf16>, vector<64x32xf32> -> vector<64x32xf32>
    %c0_38 = arith.constant 0 : index
    %c0_39 = arith.constant 0 : index
    %93 = vector.load %arg10[%c0_38, %c0_39] : memref<1x32xf32, #tpu.memory_space<vmem>>, vector<1x32xf32>
    %94 = vector.broadcast %93 : vector<1x32xf32> to vector<64x32xf32>
    %95 = arith.addf %92, %94 : vector<64x32xf32>
    %cst_40 = arith.constant 0.000000e+00 : f32
    %96 = vector.broadcast %cst_40 : f32 to vector<64x32xf32>
    %97 = arith.cmpf ogt, %95, %96 : vector<64x32xf32>
    %cst_41 = arith.constant 0.000000e+00 : f32
    %98 = vector.broadcast %cst_41 : f32 to vector<64x32xf32>
    %99 = arith.minimumf %95, %98 : vector<64x32xf32>
    %100 = math.exp %99 : vector<64x32xf32>
    %cst_42 = arith.constant 1.000000e+00 : f32
    %101 = vector.broadcast %cst_42 : f32 to vector<64x32xf32>
    %102 = arith.subf %100, %101 : vector<64x32xf32>
    %103 = arith.select %97, %95, %102 : vector<64x32xi1>, vector<64x32xf32>
    %104 = arith.addf %81, %103 : vector<64x32xf32>
    %cst_43 = arith.constant 0.000000e+00 : f32
    %105 = vector.broadcast %cst_43 : f32 to vector<64x32xf32>
    %106 = arith.cmpf ogt, %104, %105 : vector<64x32xf32>
    %cst_44 = arith.constant 0.000000e+00 : f32
    %107 = vector.broadcast %cst_44 : f32 to vector<64x32xf32>
    %108 = arith.minimumf %104, %107 : vector<64x32xf32>
    %109 = math.exp %108 : vector<64x32xf32>
    %cst_45 = arith.constant 1.000000e+00 : f32
    %110 = vector.broadcast %cst_45 : f32 to vector<64x32xf32>
    %111 = arith.subf %109, %110 : vector<64x32xf32>
    %112 = arith.select %106, %104, %111 : vector<64x32xi1>, vector<64x32xf32>
    %c0_46 = arith.constant 0 : index
    %c0_47 = arith.constant 0 : index
    %113 = vector.load %arg11[%c0_46, %c0_47] : memref<32x32xbf16, #tpu.memory_space<vmem>>, vector<32x32xbf16>
    %114 = arith.truncf %112 : vector<64x32xf32> to vector<64x32xbf16>
    %cst_48 = arith.constant dense<0.000000e+00> : vector<64x32xf32>
    %115 = tpu.matmul %114, %113, %cst_48 {dimension_numbers = #tpu.dot_dimension_numbers<[1], [0], [0], [1], [0, 0, 1, 1], [], []>} : vector<64x32xbf16>, vector<32x32xbf16>, vector<64x32xf32> -> vector<64x32xf32>
    %c0_49 = arith.constant 0 : index
    %c0_50 = arith.constant 0 : index
    %116 = vector.load %arg12[%c0_49, %c0_50] : memref<1x32xf32, #tpu.memory_space<vmem>>, vector<1x32xf32>
    %117 = vector.broadcast %116 : vector<1x32xf32> to vector<64x32xf32>
    %118 = arith.addf %115, %117 : vector<64x32xf32>
    %cst_51 = arith.constant 0.000000e+00 : f32
    %119 = vector.broadcast %cst_51 : f32 to vector<64x32xf32>
    %120 = arith.cmpf ogt, %118, %119 : vector<64x32xf32>
    %cst_52 = arith.constant 0.000000e+00 : f32
    %121 = vector.broadcast %cst_52 : f32 to vector<64x32xf32>
    %122 = arith.minimumf %118, %121 : vector<64x32xf32>
    %123 = math.exp %122 : vector<64x32xf32>
    %cst_53 = arith.constant 1.000000e+00 : f32
    %124 = vector.broadcast %cst_53 : f32 to vector<64x32xf32>
    %125 = arith.subf %123, %124 : vector<64x32xf32>
    %126 = arith.select %120, %118, %125 : vector<64x32xi1>, vector<64x32xf32>
    %c0_54 = arith.constant 0 : index
    %c0_55 = arith.constant 0 : index
    %c0_56 = arith.constant 0 : index
    %127 = vector.load %arg2[%c0_54, %c0_55, %c0_56] : memref<1x64x32xf32, #tpu.memory_space<vmem>>, vector<1x64x32xf32>
    %128 = vector.shape_cast %127 : vector<1x64x32xf32> to vector<64x32xf32>
    %cst_57 = arith.constant 0.000000e+00 : f32
    %129 = vector.broadcast %cst_57 : f32 to vector<64x32xf32>
    %130 = arith.cmpf ogt, %128, %129 : vector<64x32xf32>
    %cst_58 = arith.constant 0.000000e+00 : f32
    %131 = vector.broadcast %cst_58 : f32 to vector<64x32xf32>
    %132 = arith.minimumf %128, %131 : vector<64x32xf32>
    %133 = math.exp %132 : vector<64x32xf32>
    %cst_59 = arith.constant 1.000000e+00 : f32
    %134 = vector.broadcast %cst_59 : f32 to vector<64x32xf32>
    %135 = arith.subf %133, %134 : vector<64x32xf32>
    %136 = arith.select %130, %128, %135 : vector<64x32xi1>, vector<64x32xf32>
    %137 = arith.addf %126, %136 : vector<64x32xf32>
    %c0_60 = arith.constant 0 : index
    %c0_61 = arith.constant 0 : index
    %c0_62 = arith.constant 0 : index
    %138 = vector.load %arg13[%c0_60, %c0_61, %c0_62] : memref<1x64x32xf32, #tpu.memory_space<vmem>>, vector<1x64x32xf32>
    %139 = vector.shape_cast %138 : vector<1x64x32xf32> to vector<64x32xf32>
    %140 = vector.shape_cast %137 : vector<64x32xf32> to vector<1x64x32xf32>
    tpu.vector_store %arg13[%c0_60, %c0_61, %c0_62], %140 {strides = array<i32>} : memref<1x64x32xf32, #tpu.memory_space<vmem>>, vector<1x64x32xf32>,
    return
  }
  func.func @transform_0(%arg0: i32) -> (i32, i32, i32) {
    %c0_i32 = arith.constant 0 : i32
    %c0_i32_0 = arith.constant 0 : i32
    %c0_i32_1 = arith.constant 0 : i32
    return %arg0, %c0_i32, %c0_i32_0 : i32, i32, i32
  }
  func.func @transform_1(%arg0: i32) -> (i32, i32, i32) {
    %c0_i32 = arith.constant 0 : i32
    %c0_i32_0 = arith.constant 0 : i32
    %c0_i32_1 = arith.constant 0 : i32
    return %arg0, %c0_i32, %c0_i32_0 : i32, i32, i32
  }
  func.func @transform_2(%arg0: i32) -> (i32, i32) {
    %c0_i32 = arith.constant 0 : i32
    %c0_i32_0 = arith.constant 0 : i32
    %c0_i32_1 = arith.constant 0 : i32
    return %c0_i32, %c0_i32_0 : i32, i32
  }
  func.func @transform_3(%arg0: i32) -> (i32, i32) {
    %c0_i32 = arith.constant 0 : i32
    %c0_i32_0 = arith.constant 0 : i32
    %c0_i32_1 = arith.constant 0 : i32
    return %c0_i32, %c0_i32_0 : i32, i32
  }
  func.func @transform_4(%arg0: i32) -> (i32, i32) {
    %c0_i32 = arith.constant 0 : i32
    %c0_i32_0 = arith.constant 0 : i32
    %c0_i32_1 = arith.constant 0 : i32
    return %c0_i32, %c0_i32_0 : i32, i32
  }
  func.func @transform_5(%arg0: i32) -> (i32, i32) {
    %c0_i32 = arith.constant 0 : i32
    %c0_i32_0 = arith.constant 0 : i32
    %c0_i32_1 = arith.constant 0 : i32
    return %c0_i32, %c0_i32_0 : i32, i32
  }
  func.func @transform_6(%arg0: i32) -> (i32, i32) {
    %c0_i32 = arith.constant 0 : i32
    %c0_i32_0 = arith.constant 0 : i32
    %c0_i32_1 = arith.constant 0 : i32
    return %c0_i32, %c0_i32_0 : i32, i32
  }
  func.func @transform_7(%arg0: i32) -> (i32, i32) {
    %c0_i32 = arith.constant 0 : i32
    %c0_i32_0 = arith.constant 0 : i32
    %c0_i32_1 = arith.constant 0 : i32
    return %c0_i32, %c0_i32_0 : i32, i32
  }
  func.func @transform_8(%arg0: i32) -> (i32, i32) {
    %c0_i32 = arith.constant 0 : i32
    %c0_i32_0 = arith.constant 0 : i32
    %c0_i32_1 = arith.constant 0 : i32
    return %c0_i32, %c0_i32_0 : i32, i32
  }
  func.func @transform_9(%arg0: i32) -> (i32, i32) {
    %c0_i32 = arith.constant 0 : i32
    %c0_i32_0 = arith.constant 0 : i32
    %c0_i32_1 = arith.constant 0 : i32
    return %c0_i32, %c0_i32_0 : i32, i32
  }
  func.func @transform_10(%arg0: i32) -> (i32, i32) {
    %c0_i32 = arith.constant 0 : i32
    %c0_i32_0 = arith.constant 0 : i32
    %c0_i32_1 = arith.constant 0 : i32
    return %c0_i32, %c0_i32_0 : i32, i32
  }
  func.func @transform_11(%arg0: i32) -> (i32, i32) {
    %c0_i32 = arith.constant 0 : i32
    %c0_i32_0 = arith.constant 0 : i32
    %c0_i32_1 = arith.constant 0 : i32
    return %c0_i32, %c0_i32_0 : i32, i32
  }
  func.func @transform_12(%arg0: i32) -> (i32, i32, i32) {
    %c0_i32 = arith.constant 0 : i32
    %c0_i32_0 = arith.constant 0 : i32
    %c0_i32_1 = arith.constant 0 : i32
    return %arg0, %c0_i32, %c0_i32_0 : i32, i32, i32
  }
}

module attributes {stable_mosaic.version = 11 : i64} {
  func.func @_basic_block_kernel(%arg0: i32, %arg1: memref<1x8x8x32xf32, #tpu.memory_space<vmem>>, %arg2: memref<128x32xbf16, #tpu.memory_space<vmem>>, %arg3: memref<1x32xf32, #tpu.memory_space<vmem>>, %arg4: memref<128x64xbf16, #tpu.memory_space<vmem>>, %arg5: memref<1x64xf32, #tpu.memory_space<vmem>>, %arg6: memref<1x8x8x32xf32, #tpu.memory_space<vmem>>, %arg7: memref<9x9x32xf32, #tpu.memory_space<vmem>>) attributes {dimension_semantics = [#tpu.dimension_semantics<parallel>], iteration_bounds = array<i64: 2>, scalar_prefetch = 0 : i64, scratch_operands = 1 : i64, tpu.core_type = #tpu.core_type<tc>, window_params = [{transform_indices = @transform_0, window_bounds = array<i64: 1, 8, 8, 32>}, {pipeline_mode = #tpu.pipeline_mode<synchronous>, transform_indices = @transform_1, window_bounds = array<i64: 128, 32>}, {pipeline_mode = #tpu.pipeline_mode<synchronous>, transform_indices = @transform_2, window_bounds = array<i64: 1, 32>}, {pipeline_mode = #tpu.pipeline_mode<synchronous>, transform_indices = @transform_3, window_bounds = array<i64: 128, 64>}, {pipeline_mode = #tpu.pipeline_mode<synchronous>, transform_indices = @transform_4, window_bounds = array<i64: 1, 64>}, {transform_indices = @transform_5, window_bounds = array<i64: 1, 8, 8, 32>}]} {
    %cst = arith.constant 0.000000e+00 : f32
    %0 = vector.broadcast %cst : f32 to vector<9x9x32xf32>
    %c0 = arith.constant 0 : index
    %c0_0 = arith.constant 0 : index
    %c0_1 = arith.constant 0 : index
    %1 = vector.load %arg7[%c0, %c0_0, %c0_1] : memref<9x9x32xf32, #tpu.memory_space<vmem>>, vector<9x9x32xf32>
    tpu.vector_store %arg7[%c0, %c0_0, %c0_1], %0 {strides = array<i32>} : memref<9x9x32xf32, #tpu.memory_space<vmem>>, vector<9x9x32xf32>,
    %c0_2 = arith.constant 0 : index
    %c0_3 = arith.constant 0 : index
    %c0_4 = arith.constant 0 : index
    %c0_5 = arith.constant 0 : index
    %2 = vector.load %arg1[%c0_2, %c0_3, %c0_4, %c0_5] : memref<1x8x8x32xf32, #tpu.memory_space<vmem>>, vector<1x8x8x32xf32>
    %3 = vector.shape_cast %2 : vector<1x8x8x32xf32> to vector<8x8x32xf32>
    %cst_6 = arith.constant 0.000000e+00 : f32
    %4 = vector.broadcast %cst_6 : f32 to vector<8x8x32xf32>
    %5 = arith.cmpf ogt, %3, %4 : vector<8x8x32xf32>
    %cst_7 = arith.constant 0.000000e+00 : f32
    %6 = vector.broadcast %cst_7 : f32 to vector<8x8x32xf32>
    %7 = arith.minimumf %3, %6 : vector<8x8x32xf32>
    %8 = math.exp %7 : vector<8x8x32xf32>
    %cst_8 = arith.constant 1.000000e+00 : f32
    %9 = vector.broadcast %cst_8 : f32 to vector<8x8x32xf32>
    %10 = arith.subf %8, %9 : vector<8x8x32xf32>
    %11 = arith.select %5, %3, %10 : vector<8x8x32xi1>, vector<8x8x32xf32>
    %c1 = arith.constant 1 : index
    %c1_9 = arith.constant 1 : index
    %c0_10 = arith.constant 0 : index
    %12 = vector.load %arg7[%c1, %c1_9, %c0_10] : memref<9x9x32xf32, #tpu.memory_space<vmem>>, vector<8x8x32xf32>
    tpu.vector_store %arg7[%c1, %c1_9, %c0_10], %11 {strides = array<i32>} : memref<9x9x32xf32, #tpu.memory_space<vmem>>, vector<8x8x32xf32>,
    %c0_11 = arith.constant 0 : index
    %c0_12 = arith.constant 0 : index
    %c0_13 = arith.constant 0 : index
    %13 = vector.load %arg7[%c0_11, %c0_12, %c0_13] : memref<9x9x32xf32, #tpu.memory_space<vmem>>, vector<9x9x32xf32>
    %14 = vector.extract_strided_slice %13 {offsets = [0, 0, 0], sizes = [8, 8, 32], strides = [1, 1, 1]} : vector<9x9x32xf32> to vector<8x8x32xf32>
    %15 = vector.shape_cast %14 : vector<8x8x32xf32> to vector<64x32xf32>
    %16 = vector.extract_strided_slice %13 {offsets = [0, 1, 0], sizes = [8, 8, 32], strides = [1, 1, 1]} : vector<9x9x32xf32> to vector<8x8x32xf32>
    %17 = vector.shape_cast %16 : vector<8x8x32xf32> to vector<64x32xf32>
    %18 = vector.extract_strided_slice %13 {offsets = [1, 0, 0], sizes = [8, 8, 32], strides = [1, 1, 1]} : vector<9x9x32xf32> to vector<8x8x32xf32>
    %19 = vector.shape_cast %18 : vector<8x8x32xf32> to vector<64x32xf32>
    %20 = vector.extract_strided_slice %13 {offsets = [1, 1, 0], sizes = [8, 8, 32], strides = [1, 1, 1]} : vector<9x9x32xf32> to vector<8x8x32xf32>
    %21 = vector.shape_cast %20 : vector<8x8x32xf32> to vector<64x32xf32>
    %22 = tpu.concatenate %15, %17, %19, %21 in 1 : vector<64x32xf32>, vector<64x32xf32>, vector<64x32xf32>, vector<64x32xf32> -> vector<64x128xf32>
    %c0_14 = arith.constant 0 : index
    %c0_15 = arith.constant 0 : index
    %23 = vector.load %arg2[%c0_14, %c0_15] : memref<128x32xbf16, #tpu.memory_space<vmem>>, vector<128x32xbf16>
    %24 = arith.truncf %22 : vector<64x128xf32> to vector<64x128xbf16>
    %cst_16 = arith.constant dense<0.000000e+00> : vector<64x32xf32>
    %25 = tpu.matmul %24, %23, %cst_16 {dimension_numbers = #tpu.dot_dimension_numbers<[1], [0], [0], [1], [0, 0, 1, 1], [], []>} : vector<64x128xbf16>, vector<128x32xbf16>, vector<64x32xf32> -> vector<64x32xf32>
    %c0_17 = arith.constant 0 : index
    %c0_18 = arith.constant 0 : index
    %26 = vector.load %arg3[%c0_17, %c0_18] : memref<1x32xf32, #tpu.memory_space<vmem>>, vector<1x32xf32>
    %27 = vector.broadcast %26 : vector<1x32xf32> to vector<64x32xf32>
    %28 = arith.addf %25, %27 : vector<64x32xf32>
    %cst_19 = arith.constant 0.000000e+00 : f32
    %29 = vector.broadcast %cst_19 : f32 to vector<64x32xf32>
    %30 = arith.cmpf ogt, %28, %29 : vector<64x32xf32>
    %cst_20 = arith.constant 0.000000e+00 : f32
    %31 = vector.broadcast %cst_20 : f32 to vector<64x32xf32>
    %32 = arith.minimumf %28, %31 : vector<64x32xf32>
    %33 = math.exp %32 : vector<64x32xf32>
    %cst_21 = arith.constant 1.000000e+00 : f32
    %34 = vector.broadcast %cst_21 : f32 to vector<64x32xf32>
    %35 = arith.subf %33, %34 : vector<64x32xf32>
    %36 = arith.select %30, %28, %35 : vector<64x32xi1>, vector<64x32xf32>
    %37 = vector.shape_cast %36 : vector<64x32xf32> to vector<8x8x32xf32>
    %c1_22 = arith.constant 1 : index
    %c1_23 = arith.constant 1 : index
    %c0_24 = arith.constant 0 : index
    %38 = vector.load %arg7[%c1_22, %c1_23, %c0_24] : memref<9x9x32xf32, #tpu.memory_space<vmem>>, vector<8x8x32xf32>
    tpu.vector_store %arg7[%c1_22, %c1_23, %c0_24], %37 {strides = array<i32>} : memref<9x9x32xf32, #tpu.memory_space<vmem>>, vector<8x8x32xf32>,
    %c0_25 = arith.constant 0 : index
    %c0_26 = arith.constant 0 : index
    %c0_27 = arith.constant 0 : index
    %39 = vector.load %arg7[%c0_25, %c0_26, %c0_27] : memref<9x9x32xf32, #tpu.memory_space<vmem>>, vector<9x9x32xf32>
    %40 = vector.extract_strided_slice %39 {offsets = [0, 0, 0], sizes = [8, 8, 32], strides = [1, 1, 1]} : vector<9x9x32xf32> to vector<8x8x32xf32>
    %41 = vector.shape_cast %40 : vector<8x8x32xf32> to vector<64x32xf32>
    %42 = vector.extract_strided_slice %39 {offsets = [0, 1, 0], sizes = [8, 8, 32], strides = [1, 1, 1]} : vector<9x9x32xf32> to vector<8x8x32xf32>
    %43 = vector.shape_cast %42 : vector<8x8x32xf32> to vector<64x32xf32>
    %44 = vector.extract_strided_slice %39 {offsets = [1, 0, 0], sizes = [8, 8, 32], strides = [1, 1, 1]} : vector<9x9x32xf32> to vector<8x8x32xf32>
    %45 = vector.shape_cast %44 : vector<8x8x32xf32> to vector<64x32xf32>
    %46 = vector.extract_strided_slice %39 {offsets = [1, 1, 0], sizes = [8, 8, 32], strides = [1, 1, 1]} : vector<9x9x32xf32> to vector<8x8x32xf32>
    %47 = vector.shape_cast %46 : vector<8x8x32xf32> to vector<64x32xf32>
    %48 = tpu.concatenate %41, %43, %45, %47 in 1 : vector<64x32xf32>, vector<64x32xf32>, vector<64x32xf32>, vector<64x32xf32> -> vector<64x128xf32>
    %c0_28 = arith.constant 0 : index
    %c0_29 = arith.constant 0 : index
    %49 = vector.load %arg4[%c0_28, %c0_29] : memref<128x64xbf16, #tpu.memory_space<vmem>>, vector<128x64xbf16>
    %50 = arith.truncf %48 : vector<64x128xf32> to vector<64x128xbf16>
    %cst_30 = arith.constant dense<0.000000e+00> : vector<64x64xf32>
    %51 = tpu.matmul %50, %49, %cst_30 {dimension_numbers = #tpu.dot_dimension_numbers<[1], [0], [0], [1], [0, 0, 1, 1], [], []>} : vector<64x128xbf16>, vector<128x64xbf16>, vector<64x64xf32> -> vector<64x64xf32>
    %c0_31 = arith.constant 0 : index
    %c0_32 = arith.constant 0 : index
    %52 = vector.load %arg5[%c0_31, %c0_32] : memref<1x64xf32, #tpu.memory_space<vmem>>, vector<1x64xf32>
    %53 = vector.broadcast %52 : vector<1x64xf32> to vector<64x64xf32>
    %54 = arith.addf %51, %53 : vector<64x64xf32>
    %55 = vector.extract_strided_slice %54 {offsets = [0, 0], sizes = [64, 32], strides = [1, 1]} : vector<64x64xf32> to vector<64x32xf32>
    %56 = vector.extract_strided_slice %54 {offsets = [0, 32], sizes = [64, 32], strides = [1, 1]} : vector<64x64xf32> to vector<64x32xf32>
    %cst_33 = arith.constant 0.000000e+00 : f32
    %57 = vector.broadcast %cst_33 : f32 to vector<64x32xf32>
    %58 = arith.subf %57, %56 : vector<64x32xf32>
    %59 = math.exp %58 : vector<64x32xf32>
    %cst_34 = arith.constant 1.000000e+00 : f32
    %60 = vector.broadcast %cst_34 : f32 to vector<64x32xf32>
    %61 = arith.addf %60, %59 : vector<64x32xf32>
    %cst_35 = arith.constant 1.000000e+00 : f32
    %62 = vector.broadcast %cst_35 : f32 to vector<64x32xf32>
    %63 = arith.divf %62, %61 : vector<64x32xf32>
    %64 = arith.mulf %55, %63 : vector<64x32xf32>
    %65 = vector.shape_cast %11 : vector<8x8x32xf32> to vector<64x32xf32>
    %66 = arith.addf %65, %64 : vector<64x32xf32>
    %67 = vector.shape_cast %66 : vector<64x32xf32> to vector<8x8x32xf32>
    %c0_36 = arith.constant 0 : index
    %c0_37 = arith.constant 0 : index
    %c0_38 = arith.constant 0 : index
    %c0_39 = arith.constant 0 : index
    %68 = vector.load %arg6[%c0_36, %c0_37, %c0_38, %c0_39] : memref<1x8x8x32xf32, #tpu.memory_space<vmem>>, vector<1x8x8x32xf32>
    %69 = vector.shape_cast %68 : vector<1x8x8x32xf32> to vector<8x8x32xf32>
    %70 = vector.shape_cast %67 : vector<8x8x32xf32> to vector<1x8x8x32xf32>
    tpu.vector_store %arg6[%c0_36, %c0_37, %c0_38, %c0_39], %70 {strides = array<i32>} : memref<1x8x8x32xf32, #tpu.memory_space<vmem>>, vector<1x8x8x32xf32>,
    return
  }
  func.func @transform_0(%arg0: i32) -> (i32, i32, i32, i32) {
    %c0_i32 = arith.constant 0 : i32
    %c0_i32_0 = arith.constant 0 : i32
    %c0_i32_1 = arith.constant 0 : i32
    %c0_i32_2 = arith.constant 0 : i32
    return %arg0, %c0_i32, %c0_i32_0, %c0_i32_1 : i32, i32, i32, i32
  }
  func.func @transform_1(%arg0: i32) -> (i32, i32) {
    %c0_i32 = arith.constant 0 : i32
    %c0_i32_0 = arith.constant 0 : i32
    %c0_i32_1 = arith.constant 0 : i32
    return %c0_i32, %c0_i32_0 : i32, i32
  }
  func.func @transform_2(%arg0: i32) -> (i32, i32) {
    %c0_i32 = arith.constant 0 : i32
    %c0_i32_0 = arith.constant 0 : i32
    %c0_i32_1 = arith.constant 0 : i32
    return %c0_i32, %c0_i32_0 : i32, i32
  }
  func.func @transform_3(%arg0: i32) -> (i32, i32) {
    %c0_i32 = arith.constant 0 : i32
    %c0_i32_0 = arith.constant 0 : i32
    %c0_i32_1 = arith.constant 0 : i32
    return %c0_i32, %c0_i32_0 : i32, i32
  }
  func.func @transform_4(%arg0: i32) -> (i32, i32) {
    %c0_i32 = arith.constant 0 : i32
    %c0_i32_0 = arith.constant 0 : i32
    %c0_i32_1 = arith.constant 0 : i32
    return %c0_i32, %c0_i32_0 : i32, i32
  }
  func.func @transform_5(%arg0: i32) -> (i32, i32, i32, i32) {
    %c0_i32 = arith.constant 0 : i32
    %c0_i32_0 = arith.constant 0 : i32
    %c0_i32_1 = arith.constant 0 : i32
    %c0_i32_2 = arith.constant 0 : i32
    return %arg0, %c0_i32, %c0_i32_0, %c0_i32_1 : i32, i32, i32, i32
  }
}

module attributes {stable_mosaic.version = 11 : i64} {
  func.func @_stem_kernel(%arg0: i32, %arg1: memref<1x8x8x1xf32, #tpu.memory_space<vmem>>, %arg2: memref<9x1x32xbf16, #tpu.memory_space<vmem>>, %arg3: memref<1x32xf32, #tpu.memory_space<vmem>>, %arg4: memref<1x8x8x32xf32, #tpu.memory_space<vmem>>, %arg5: memref<10x10x1xf32, #tpu.memory_space<vmem>>) attributes {dimension_semantics = [#tpu.dimension_semantics<parallel>], iteration_bounds = array<i64: 2>, scalar_prefetch = 0 : i64, scratch_operands = 1 : i64, tpu.core_type = #tpu.core_type<tc>, window_params = [{transform_indices = @transform_0, window_bounds = array<i64: 1, 8, 8, 1>}, {pipeline_mode = #tpu.pipeline_mode<synchronous>, transform_indices = @transform_1, window_bounds = array<i64: 9, 1, 32>}, {pipeline_mode = #tpu.pipeline_mode<synchronous>, transform_indices = @transform_2, window_bounds = array<i64: 1, 32>}, {transform_indices = @transform_3, window_bounds = array<i64: 1, 8, 8, 32>}]} {
    %cst = arith.constant 0.000000e+00 : f32
    %0 = vector.broadcast %cst : f32 to vector<10x10x1xf32>
    %c0 = arith.constant 0 : index
    %c0_0 = arith.constant 0 : index
    %c0_1 = arith.constant 0 : index
    %1 = vector.load %arg5[%c0, %c0_0, %c0_1] : memref<10x10x1xf32, #tpu.memory_space<vmem>>, vector<10x10x1xf32>
    tpu.vector_store %arg5[%c0, %c0_0, %c0_1], %0 {strides = array<i32>} : memref<10x10x1xf32, #tpu.memory_space<vmem>>, vector<10x10x1xf32>,
    %c0_2 = arith.constant 0 : index
    %c0_3 = arith.constant 0 : index
    %c0_4 = arith.constant 0 : index
    %c0_5 = arith.constant 0 : index
    %2 = vector.load %arg1[%c0_2, %c0_3, %c0_4, %c0_5] : memref<1x8x8x1xf32, #tpu.memory_space<vmem>>, vector<1x8x8x1xf32>
    %3 = vector.shape_cast %2 : vector<1x8x8x1xf32> to vector<8x8x1xf32>
    %c1 = arith.constant 1 : index
    %c1_6 = arith.constant 1 : index
    %c0_7 = arith.constant 0 : index
    %4 = vector.load %arg5[%c1, %c1_6, %c0_7] : memref<10x10x1xf32, #tpu.memory_space<vmem>>, vector<8x8x1xf32>
    tpu.vector_store %arg5[%c1, %c1_6, %c0_7], %3 {strides = array<i32>} : memref<10x10x1xf32, #tpu.memory_space<vmem>>, vector<8x8x1xf32>,
    %c0_8 = arith.constant 0 : index
    %c0_9 = arith.constant 0 : index
    %c0_10 = arith.constant 0 : index
    %5 = vector.load %arg5[%c0_8, %c0_9, %c0_10] : memref<10x10x1xf32, #tpu.memory_space<vmem>>, vector<10x10x1xf32>
    %6 = vector.extract_strided_slice %5 {offsets = [0, 0, 0], sizes = [8, 8, 1], strides = [1, 1, 1]} : vector<10x10x1xf32> to vector<8x8x1xf32>
    %7 = vector.shape_cast %6 : vector<8x8x1xf32> to vector<64x1xf32>
    %8 = arith.truncf %7 : vector<64x1xf32> to vector<64x1xbf16>
    %c0_11 = arith.constant 0 : index
    %c0_12 = arith.constant 0 : index
    %c0_13 = arith.constant 0 : index
    %9 = vector.load %arg2[%c0_11, %c0_12, %c0_13] : memref<9x1x32xbf16, #tpu.memory_space<vmem>>, vector<1x1x32xbf16>
    %10 = vector.shape_cast %9 : vector<1x1x32xbf16> to vector<1x32xbf16>
    %cst_14 = arith.constant dense<0.000000e+00> : vector<64x32xf32>
    %11 = tpu.matmul %8, %10, %cst_14 {dimension_numbers = #tpu.dot_dimension_numbers<[1], [0], [0], [1], [0, 0, 1, 1], [], []>} : vector<64x1xbf16>, vector<1x32xbf16>, vector<64x32xf32> -> vector<64x32xf32>
    %12 = vector.extract_strided_slice %5 {offsets = [0, 1, 0], sizes = [8, 8, 1], strides = [1, 1, 1]} : vector<10x10x1xf32> to vector<8x8x1xf32>
    %13 = vector.shape_cast %12 : vector<8x8x1xf32> to vector<64x1xf32>
    %14 = arith.truncf %13 : vector<64x1xf32> to vector<64x1xbf16>
    %c1_15 = arith.constant 1 : index
    %c0_16 = arith.constant 0 : index
    %c0_17 = arith.constant 0 : index
    %15 = vector.load %arg2[%c1_15, %c0_16, %c0_17] : memref<9x1x32xbf16, #tpu.memory_space<vmem>>, vector<1x1x32xbf16>
    %16 = vector.shape_cast %15 : vector<1x1x32xbf16> to vector<1x32xbf16>
    %cst_18 = arith.constant dense<0.000000e+00> : vector<64x32xf32>
    %17 = tpu.matmul %14, %16, %cst_18 {dimension_numbers = #tpu.dot_dimension_numbers<[1], [0], [0], [1], [0, 0, 1, 1], [], []>} : vector<64x1xbf16>, vector<1x32xbf16>, vector<64x32xf32> -> vector<64x32xf32>
    %18 = arith.addf %11, %17 : vector<64x32xf32>
    %19 = vector.extract_strided_slice %5 {offsets = [0, 2, 0], sizes = [8, 8, 1], strides = [1, 1, 1]} : vector<10x10x1xf32> to vector<8x8x1xf32>
    %20 = vector.shape_cast %19 : vector<8x8x1xf32> to vector<64x1xf32>
    %21 = arith.truncf %20 : vector<64x1xf32> to vector<64x1xbf16>
    %c2 = arith.constant 2 : index
    %c0_19 = arith.constant 0 : index
    %c0_20 = arith.constant 0 : index
    %22 = vector.load %arg2[%c2, %c0_19, %c0_20] : memref<9x1x32xbf16, #tpu.memory_space<vmem>>, vector<1x1x32xbf16>
    %23 = vector.shape_cast %22 : vector<1x1x32xbf16> to vector<1x32xbf16>
    %cst_21 = arith.constant dense<0.000000e+00> : vector<64x32xf32>
    %24 = tpu.matmul %21, %23, %cst_21 {dimension_numbers = #tpu.dot_dimension_numbers<[1], [0], [0], [1], [0, 0, 1, 1], [], []>} : vector<64x1xbf16>, vector<1x32xbf16>, vector<64x32xf32> -> vector<64x32xf32>
    %25 = arith.addf %18, %24 : vector<64x32xf32>
    %26 = vector.extract_strided_slice %5 {offsets = [1, 0, 0], sizes = [8, 8, 1], strides = [1, 1, 1]} : vector<10x10x1xf32> to vector<8x8x1xf32>
    %27 = vector.shape_cast %26 : vector<8x8x1xf32> to vector<64x1xf32>
    %28 = arith.truncf %27 : vector<64x1xf32> to vector<64x1xbf16>
    %c3 = arith.constant 3 : index
    %c0_22 = arith.constant 0 : index
    %c0_23 = arith.constant 0 : index
    %29 = vector.load %arg2[%c3, %c0_22, %c0_23] : memref<9x1x32xbf16, #tpu.memory_space<vmem>>, vector<1x1x32xbf16>
    %30 = vector.shape_cast %29 : vector<1x1x32xbf16> to vector<1x32xbf16>
    %cst_24 = arith.constant dense<0.000000e+00> : vector<64x32xf32>
    %31 = tpu.matmul %28, %30, %cst_24 {dimension_numbers = #tpu.dot_dimension_numbers<[1], [0], [0], [1], [0, 0, 1, 1], [], []>} : vector<64x1xbf16>, vector<1x32xbf16>, vector<64x32xf32> -> vector<64x32xf32>
    %32 = arith.addf %25, %31 : vector<64x32xf32>
    %33 = vector.extract_strided_slice %5 {offsets = [1, 1, 0], sizes = [8, 8, 1], strides = [1, 1, 1]} : vector<10x10x1xf32> to vector<8x8x1xf32>
    %34 = vector.shape_cast %33 : vector<8x8x1xf32> to vector<64x1xf32>
    %35 = arith.truncf %34 : vector<64x1xf32> to vector<64x1xbf16>
    %c4 = arith.constant 4 : index
    %c0_25 = arith.constant 0 : index
    %c0_26 = arith.constant 0 : index
    %36 = vector.load %arg2[%c4, %c0_25, %c0_26] : memref<9x1x32xbf16, #tpu.memory_space<vmem>>, vector<1x1x32xbf16>
    %37 = vector.shape_cast %36 : vector<1x1x32xbf16> to vector<1x32xbf16>
    %cst_27 = arith.constant dense<0.000000e+00> : vector<64x32xf32>
    %38 = tpu.matmul %35, %37, %cst_27 {dimension_numbers = #tpu.dot_dimension_numbers<[1], [0], [0], [1], [0, 0, 1, 1], [], []>} : vector<64x1xbf16>, vector<1x32xbf16>, vector<64x32xf32> -> vector<64x32xf32>
    %39 = arith.addf %32, %38 : vector<64x32xf32>
    %40 = vector.extract_strided_slice %5 {offsets = [1, 2, 0], sizes = [8, 8, 1], strides = [1, 1, 1]} : vector<10x10x1xf32> to vector<8x8x1xf32>
    %41 = vector.shape_cast %40 : vector<8x8x1xf32> to vector<64x1xf32>
    %42 = arith.truncf %41 : vector<64x1xf32> to vector<64x1xbf16>
    %c5 = arith.constant 5 : index
    %c0_28 = arith.constant 0 : index
    %c0_29 = arith.constant 0 : index
    %43 = vector.load %arg2[%c5, %c0_28, %c0_29] : memref<9x1x32xbf16, #tpu.memory_space<vmem>>, vector<1x1x32xbf16>
    %44 = vector.shape_cast %43 : vector<1x1x32xbf16> to vector<1x32xbf16>
    %cst_30 = arith.constant dense<0.000000e+00> : vector<64x32xf32>
    %45 = tpu.matmul %42, %44, %cst_30 {dimension_numbers = #tpu.dot_dimension_numbers<[1], [0], [0], [1], [0, 0, 1, 1], [], []>} : vector<64x1xbf16>, vector<1x32xbf16>, vector<64x32xf32> -> vector<64x32xf32>
    %46 = arith.addf %39, %45 : vector<64x32xf32>
    %47 = vector.extract_strided_slice %5 {offsets = [2, 0, 0], sizes = [8, 8, 1], strides = [1, 1, 1]} : vector<10x10x1xf32> to vector<8x8x1xf32>
    %48 = vector.shape_cast %47 : vector<8x8x1xf32> to vector<64x1xf32>
    %49 = arith.truncf %48 : vector<64x1xf32> to vector<64x1xbf16>
    %c6 = arith.constant 6 : index
    %c0_31 = arith.constant 0 : index
    %c0_32 = arith.constant 0 : index
    %50 = vector.load %arg2[%c6, %c0_31, %c0_32] : memref<9x1x32xbf16, #tpu.memory_space<vmem>>, vector<1x1x32xbf16>
    %51 = vector.shape_cast %50 : vector<1x1x32xbf16> to vector<1x32xbf16>
    %cst_33 = arith.constant dense<0.000000e+00> : vector<64x32xf32>
    %52 = tpu.matmul %49, %51, %cst_33 {dimension_numbers = #tpu.dot_dimension_numbers<[1], [0], [0], [1], [0, 0, 1, 1], [], []>} : vector<64x1xbf16>, vector<1x32xbf16>, vector<64x32xf32> -> vector<64x32xf32>
    %53 = arith.addf %46, %52 : vector<64x32xf32>
    %54 = vector.extract_strided_slice %5 {offsets = [2, 1, 0], sizes = [8, 8, 1], strides = [1, 1, 1]} : vector<10x10x1xf32> to vector<8x8x1xf32>
    %55 = vector.shape_cast %54 : vector<8x8x1xf32> to vector<64x1xf32>
    %56 = arith.truncf %55 : vector<64x1xf32> to vector<64x1xbf16>
    %c7 = arith.constant 7 : index
    %c0_34 = arith.constant 0 : index
    %c0_35 = arith.constant 0 : index
    %57 = vector.load %arg2[%c7, %c0_34, %c0_35] : memref<9x1x32xbf16, #tpu.memory_space<vmem>>, vector<1x1x32xbf16>
    %58 = vector.shape_cast %57 : vector<1x1x32xbf16> to vector<1x32xbf16>
    %cst_36 = arith.constant dense<0.000000e+00> : vector<64x32xf32>
    %59 = tpu.matmul %56, %58, %cst_36 {dimension_numbers = #tpu.dot_dimension_numbers<[1], [0], [0], [1], [0, 0, 1, 1], [], []>} : vector<64x1xbf16>, vector<1x32xbf16>, vector<64x32xf32> -> vector<64x32xf32>
    %60 = arith.addf %53, %59 : vector<64x32xf32>
    %61 = vector.extract_strided_slice %5 {offsets = [2, 2, 0], sizes = [8, 8, 1], strides = [1, 1, 1]} : vector<10x10x1xf32> to vector<8x8x1xf32>
    %62 = vector.shape_cast %61 : vector<8x8x1xf32> to vector<64x1xf32>
    %63 = arith.truncf %62 : vector<64x1xf32> to vector<64x1xbf16>
    %c8 = arith.constant 8 : index
    %c0_37 = arith.constant 0 : index
    %c0_38 = arith.constant 0 : index
    %64 = vector.load %arg2[%c8, %c0_37, %c0_38] : memref<9x1x32xbf16, #tpu.memory_space<vmem>>, vector<1x1x32xbf16>
    %65 = vector.shape_cast %64 : vector<1x1x32xbf16> to vector<1x32xbf16>
    %cst_39 = arith.constant dense<0.000000e+00> : vector<64x32xf32>
    %66 = tpu.matmul %63, %65, %cst_39 {dimension_numbers = #tpu.dot_dimension_numbers<[1], [0], [0], [1], [0, 0, 1, 1], [], []>} : vector<64x1xbf16>, vector<1x32xbf16>, vector<64x32xf32> -> vector<64x32xf32>
    %67 = arith.addf %60, %66 : vector<64x32xf32>
    %c0_40 = arith.constant 0 : index
    %c0_41 = arith.constant 0 : index
    %68 = vector.load %arg3[%c0_40, %c0_41] : memref<1x32xf32, #tpu.memory_space<vmem>>, vector<1x32xf32>
    %69 = vector.broadcast %68 : vector<1x32xf32> to vector<64x32xf32>
    %70 = arith.addf %67, %69 : vector<64x32xf32>
    %71 = vector.shape_cast %70 : vector<64x32xf32> to vector<8x8x32xf32>
    %c0_42 = arith.constant 0 : index
    %c0_43 = arith.constant 0 : index
    %c0_44 = arith.constant 0 : index
    %c0_45 = arith.constant 0 : index
    %72 = vector.load %arg4[%c0_42, %c0_43, %c0_44, %c0_45] : memref<1x8x8x32xf32, #tpu.memory_space<vmem>>, vector<1x8x8x32xf32>
    %73 = vector.shape_cast %72 : vector<1x8x8x32xf32> to vector<8x8x32xf32>
    %74 = vector.shape_cast %71 : vector<8x8x32xf32> to vector<1x8x8x32xf32>
    tpu.vector_store %arg4[%c0_42, %c0_43, %c0_44, %c0_45], %74 {strides = array<i32>} : memref<1x8x8x32xf32, #tpu.memory_space<vmem>>, vector<1x8x8x32xf32>,
    return
  }
  func.func @transform_0(%arg0: i32) -> (i32, i32, i32, i32) {
    %c0_i32 = arith.constant 0 : i32
    %c0_i32_0 = arith.constant 0 : i32
    %c0_i32_1 = arith.constant 0 : i32
    %c0_i32_2 = arith.constant 0 : i32
    return %arg0, %c0_i32, %c0_i32_0, %c0_i32_1 : i32, i32, i32, i32
  }
  func.func @transform_1(%arg0: i32) -> (i32, i32, i32) {
    %c0_i32 = arith.constant 0 : i32
    %c0_i32_0 = arith.constant 0 : i32
    %c0_i32_1 = arith.constant 0 : i32
    %c0_i32_2 = arith.constant 0 : i32
    return %c0_i32, %c0_i32_0, %c0_i32_1 : i32, i32, i32
  }
  func.func @transform_2(%arg0: i32) -> (i32, i32) {
    %c0_i32 = arith.constant 0 : i32
    %c0_i32_0 = arith.constant 0 : i32
    %c0_i32_1 = arith.constant 0 : i32
    return %c0_i32, %c0_i32_0 : i32, i32
  }
  func.func @transform_3(%arg0: i32) -> (i32, i32, i32, i32) {
    %c0_i32 = arith.constant 0 : i32
    %c0_i32_0 = arith.constant 0 : i32
    %c0_i32_1 = arith.constant 0 : i32
    %c0_i32_2 = arith.constant 0 : i32
    return %arg0, %c0_i32, %c0_i32_0, %c0_i32_1 : i32, i32, i32, i32
  }
}

module attributes {stable_mosaic.version = 11 : i64} {
  func.func @_fc_sample_kernel(%arg0: i32, %arg1: memref<128x32xf32, #tpu.memory_space<vmem>>, %arg2: memref<32x1xbf16, #tpu.memory_space<vmem>>, %arg3: memref<1x1xf32, #tpu.memory_space<vmem>>, %arg4: memref<128x1xf32, #tpu.memory_space<vmem>>, %arg5: memref<128x1xf32, #tpu.memory_space<vmem>>, %arg6: memref<128x1xf32, #tpu.memory_space<vmem>>) attributes {dimension_semantics = [#tpu.dimension_semantics<parallel>], iteration_bounds = array<i64: 1>, scalar_prefetch = 0 : i64, scratch_operands = 0 : i64, tpu.core_type = #tpu.core_type<tc>, window_params = [{transform_indices = @transform_0, window_bounds = array<i64: 128, 32>}, {pipeline_mode = #tpu.pipeline_mode<synchronous>, transform_indices = @transform_1, window_bounds = array<i64: 32, 1>}, {pipeline_mode = #tpu.pipeline_mode<synchronous>, transform_indices = @transform_2, window_bounds = array<i64: 1, 1>}, {transform_indices = @transform_3, window_bounds = array<i64: 128, 1>}, {transform_indices = @transform_4, window_bounds = array<i64: 128, 1>}, {transform_indices = @transform_5, window_bounds = array<i64: 128, 1>}]} {
    %c0 = arith.constant 0 : index
    %c0_0 = arith.constant 0 : index
    %0 = vector.load %arg1[%c0, %c0_0] : memref<128x32xf32, #tpu.memory_space<vmem>>, vector<128x32xf32>
    %cst = arith.constant 0.000000e+00 : f32
    %1 = vector.broadcast %cst : f32 to vector<128x32xf32>
    %2 = arith.cmpf ogt, %0, %1 : vector<128x32xf32>
    %cst_1 = arith.constant 0.000000e+00 : f32
    %3 = vector.broadcast %cst_1 : f32 to vector<128x32xf32>
    %4 = arith.minimumf %0, %3 : vector<128x32xf32>
    %5 = math.exp %4 : vector<128x32xf32>
    %cst_2 = arith.constant 1.000000e+00 : f32
    %6 = vector.broadcast %cst_2 : f32 to vector<128x32xf32>
    %7 = arith.subf %5, %6 : vector<128x32xf32>
    %8 = arith.select %2, %0, %7 : vector<128x32xi1>, vector<128x32xf32>
    %c0_3 = arith.constant 0 : index
    %c0_4 = arith.constant 0 : index
    %9 = vector.load %arg2[%c0_3, %c0_4] : memref<32x1xbf16, #tpu.memory_space<vmem>>, vector<32x1xbf16>
    %10 = arith.truncf %8 : vector<128x32xf32> to vector<128x32xbf16>
    %cst_5 = arith.constant dense<0.000000e+00> : vector<128x1xf32>
    %11 = tpu.matmul %10, %9, %cst_5 {dimension_numbers = #tpu.dot_dimension_numbers<[1], [0], [0], [1], [0, 0, 1, 1], [], []>} : vector<128x32xbf16>, vector<32x1xbf16>, vector<128x1xf32> -> vector<128x1xf32>
    %c0_6 = arith.constant 0 : index
    %c0_7 = arith.constant 0 : index
    %12 = vector.load %arg3[%c0_6, %c0_7] : memref<1x1xf32, #tpu.memory_space<vmem>>, vector<1x1xf32>
    %13 = vector.broadcast %12 : vector<1x1xf32> to vector<128x1xf32>
    %14 = arith.addf %11, %13 : vector<128x1xf32>
    %c0_8 = arith.constant 0 : index
    %c0_9 = arith.constant 0 : index
    %15 = vector.load %arg5[%c0_8, %c0_9] : memref<128x1xf32, #tpu.memory_space<vmem>>, vector<128x1xf32>
    tpu.vector_store %arg5[%c0_8, %c0_9], %14 {strides = array<i32>} : memref<128x1xf32, #tpu.memory_space<vmem>>, vector<128x1xf32>,
    %c0_10 = arith.constant 0 : index
    %c0_11 = arith.constant 0 : index
    %16 = vector.load %arg4[%c0_10, %c0_11] : memref<128x1xf32, #tpu.memory_space<vmem>>, vector<128x1xf32>
    %cst_12 = arith.constant 0.000000e+00 : f32
    %17 = vector.broadcast %cst_12 : f32 to vector<128x1xf32>
    %18 = arith.subf %17, %14 : vector<128x1xf32>
    %19 = math.exp %18 : vector<128x1xf32>
    %cst_13 = arith.constant 1.000000e+00 : f32
    %20 = vector.broadcast %cst_13 : f32 to vector<128x1xf32>
    %21 = arith.addf %20, %19 : vector<128x1xf32>
    %cst_14 = arith.constant 1.000000e+00 : f32
    %22 = vector.broadcast %cst_14 : f32 to vector<128x1xf32>
    %23 = arith.divf %22, %21 : vector<128x1xf32>
    %24 = arith.cmpf olt, %16, %23 : vector<128x1xf32>
    %25 = arith.extui %24 : vector<128x1xi1> to vector<128x1xi32>
    %26 = arith.sitofp %25 : vector<128x1xi32> to vector<128x1xf32>
    %c0_15 = arith.constant 0 : index
    %c0_16 = arith.constant 0 : index
    %27 = vector.load %arg6[%c0_15, %c0_16] : memref<128x1xf32, #tpu.memory_space<vmem>>, vector<128x1xf32>
    tpu.vector_store %arg6[%c0_15, %c0_16], %26 {strides = array<i32>} : memref<128x1xf32, #tpu.memory_space<vmem>>, vector<128x1xf32>,
    return
  }
  func.func @transform_0(%arg0: i32) -> (i32, i32) {
    %c0_i32 = arith.constant 0 : i32
    %c0_i32_0 = arith.constant 0 : i32
    return %arg0, %c0_i32 : i32, i32
  }
  func.func @transform_1(%arg0: i32) -> (i32, i32) {
    %c0_i32 = arith.constant 0 : i32
    %c0_i32_0 = arith.constant 0 : i32
    %c0_i32_1 = arith.constant 0 : i32
    return %c0_i32, %c0_i32_0 : i32, i32
  }
  func.func @transform_2(%arg0: i32) -> (i32, i32) {
    %c0_i32 = arith.constant 0 : i32
    %c0_i32_0 = arith.constant 0 : i32
    %c0_i32_1 = arith.constant 0 : i32
    return %c0_i32, %c0_i32_0 : i32, i32
  }
  func.func @transform_3(%arg0: i32) -> (i32, i32) {
    %c0_i32 = arith.constant 0 : i32
    %c0_i32_0 = arith.constant 0 : i32
    return %arg0, %c0_i32 : i32, i32
  }
  func.func @transform_4(%arg0: i32) -> (i32, i32) {
    %c0_i32 = arith.constant 0 : i32
    %c0_i32_0 = arith.constant 0 : i32
    return %arg0, %c0_i32 : i32, i32
  }
  func.func @transform_5(%arg0: i32) -> (i32, i32) {
    %c0_i32 = arith.constant 0 : i32
    %c0_i32_0 = arith.constant 0 : i32
    return %arg0, %c0_i32 : i32, i32
  }
}

</mosaic_0001>

<llo_original>
// kernel: pixel_snail_forward.6
$region0: #{pixel_snail_forward.6}
  #allocation0 [shape = 'u32[]', space=smem, size = 0x4, offset = 0x4, fixed_abs, tag = 'smem constant byte address 0x4 - core index']
  #allocation1 [shape = 'u32[72,128]{1,0:T(1,128)}', space=vmem, size = 0x9000, scoped, tag = 'internal scratch']
  #allocation2 [shape = 'f32[10,10,1]{2,1,0:T(8,128)}', space=vmem, size = 0x14000, scoped, tag = 'scratch operand']
  %s0 = inlined_call_operand.vmem [shape: f32[2,8,8,1], index: 0, kind: input, shape index: {}]
  %s1 = inlined_call_operand.vmem [shape: bf16[9,1,32], index: 1, kind: input, shape index: {}]
  %s2 = inlined_call_operand.vmem [shape: f32[1,32], index: 2, kind: input, shape index: {}]
  %s3 = inlined_call_operand.vmem [shape: f32[2,8,8,32], index: 3, kind: output, shape index: {}]
  %s4 = sld [smem:[#allocation0]]
  $region45: #{pixel_snail_forward.6} parent=0
    _
  %s6 = ssub.s32 1, %s4
  %s7 = scalar_select 0, %s6, %s4
  loop: start=0, step=1, limit=4
  $region2: #{pixel_snail_forward.6} parent=0 // loop_pre_header
    _
  $region3: #{pixel_snail_forward.6} parent=0 // loop_header
    %s9 = sphi 0, %s13
    %p10 = scmp.ge.s32.totalorder %s9, 4
    %s19 = sphi 0, %s21
    %s22 = sphi 0, %s19
    %s23 = sphi 0, %s22
    %s39 = sphi 0, %s23
    %s43 = sphi 0, %s43
    %s45 = sphi 0, %s43
    %s46 = sphi 0, %s45
    %s60 = sphi 0, %s46
    %s64 = sphi 0, %s64
    %s66 = sphi 0, %s64
    %s67 = sphi 0, %s66
    %s81 = sphi 0, %s67
    %s87 = sphi 0, %s89
    %s90 = sphi 0, %s87
    %s91 = sphi 0, %s90
    %s107 = sphi 0, %s91
  $region4: #{pixel_snail_forward.6} parent=0 // loop_header_branch
    %12 = sbr.rel (%p10) target = $region8
  $region5: #{pixel_snail_forward.6} parent=0 // loop_body
    %s14 = ssub.s32 %s9, 1
    %s15 = ssub.s32 %s9, 2
    %s16 = sadd.s32 %s9, 1
    %s17 = ssub.s32 %s9, %s16
    %p18 = scmp.eq.s32.totalorder %s17, 0
    %s20 = sadd.s32 %s19, 1
    %s21 = scalar_select %p18, %s19, %s20
    %p24 = pneg %p18
    %p25 = scmp.eq.s32.totalorder %s9, 1
    %p26 = por %p24, %p25
    %p27 = scmp.ne.s32.totalorder %s19, %s22
    %p28 = scmp.eq.s32.totalorder %s9, 0
    %p29 = por %p27, %p28
    %p30 = scmp.ne.s32.totalorder %s19, %s22
    %p31 = scmp.eq.s32.totalorder %s14, 1
    %p32 = por %p30, %p31
    %p33 = scmp.ne.s32.totalorder %s22, %s23
    %p34 = scmp.eq.s32.totalorder %s14, 0
    %p35 = por %p33, %p34
    %p36 = scmp.ne.s32.totalorder %s22, %s23
    %p37 = scmp.eq.s32.totalorder %s15, 1
    %p38 = por %p36, %p37
    %p40 = scmp.ne.s32.totalorder %s23, %s39
    %p41 = scmp.eq.s32.totalorder %s15, 0
    %p42 = por %p40, %p41
    %s44 = sadd.s32 %s43, 1
    %p47 = scmp.eq.s32.totalorder %s9, 1
    %p48 = scmp.ne.s32.totalorder %s43, %s45
    %p49 = scmp.eq.s32.totalorder %s9, 0
    %p50 = por %p48, %p49
    %p51 = scmp.ne.s32.totalorder %s43, %s45
    %p52 = scmp.eq.s32.totalorder %s14, 1
    %p53 = por %p51, %p52
    %p54 = scmp.ne.s32.totalorder %s45, %s46
    %p55 = scmp.eq.s32.totalorder %s14, 0
    %p56 = por %p54, %p55
    %p57 = scmp.ne.s32.totalorder %s45, %s46
    %p58 = scmp.eq.s32.totalorder %s15, 1
    %p59 = por %p57, %p58
    %p61 = scmp.ne.s32.totalorder %s46, %s60
    %p62 = scmp.eq.s32.totalorder %s15, 0
    %p63 = por %p61, %p62
    %s65 = sadd.s32 %s64, 1
    %p68 = scmp.eq.s32.totalorder %s9, 1
    %p69 = scmp.ne.s32.totalorder %s64, %s66
    %p70 = scmp.eq.s32.totalorder %s9, 0
    %p71 = por %p69, %p70
    %p72 = scmp.ne.s32.totalorder %s64, %s66
    %p73 = scmp.eq.s32.totalorder %s14, 1
    %p74 = por %p72, %p73
    %p75 = scmp.ne.s32.totalorder %s66, %s67
    %p76 = scmp.eq.s32.totalorder %s14, 0
    %p77 = por %p75, %p76
    %p78 = scmp.ne.s32.totalorder %s66, %s67
    %p79 = scmp.eq.s32.totalorder %s15, 1
    %p80 = por %p78, %p79
    %p82 = scmp.ne.s32.totalorder %s67, %s81
    %p83 = scmp.eq.s32.totalorder %s15, 0
    %p84 = por %p82, %p83
    %s85 = ssub.s32 %s9, %s16
    %p86 = scmp.eq.s32.totalorder %s85, 0
    %s88 = sadd.s32 %s87, 1
    %s89 = scalar_select %p86, %s87, %s88
    %p92 = pneg %p86
    %p93 = scmp.eq.s32.totalorder %s9, 1
    %p94 = por %p92, %p93
    %p95 = scmp.ne.s32.totalorder %s87, %s90
    %p96 = scmp.eq.s32.totalorder %s9, 0
    %p97 = por %p95, %p96
    %p98 = scmp.ne.s32.totalorder %s87, %s90
    %p99 = scmp.eq.s32.totalorder %s14, 1
    %p100 = por %p98, %p99
    %p101 = scmp.ne.s32.totalorder %s90, %s91
    %p102 = scmp.eq.s32.totalorder %s14, 0
    %p103 = por %p101, %p102
    %p104 = scmp.ne.s32.totalorder %s90, %s91
    %p105 = scmp.eq.s32.totalorder %s15, 1
    %p106 = por %p104, %p105
    %p108 = scmp.ne.s32.totalorder %s91, %s107
    %p109 = scmp.eq.s32.totalorder %s15, 0
    %p110 = por %p108, %p109
    %p111 = scmp.le.s32.totalorder 1, %s9
    %p112 = scmp.lt.s32.totalorder %s9, 3
    %p113 = pnand %p111, %p112
    %p114 = pneg %p113
    // Predicated region
    $region9: #{pixel_snail_forward.6} parent=5 // pred_check
      _
    $region10: #{pixel_snail_forward.6} parent=5 // pred_check_branch
      %116 = sbr.rel (%p113) target = $region12
    $region11: #{pixel_snail_forward.6} parent=5 // pred_region
      %s117 = ssub.s32 %s9, 1
      // Predicated region
      $region13: #{pixel_snail_forward.6} parent=11 // pred_check
        %p118 = pneg %p56
      $region14: #{pixel_snail_forward.6} parent=11 // pred_check_branch
        %120 = sbr.rel (%p118) target = $region16
      $region15: #{pixel_snail_forward.6} parent=11 // pred_region
        _
      $region16: #{pixel_snail_forward.6} parent=11 // pred_fallthru
        _
      // Predicated region
      $region17: #{pixel_snail_forward.6} parent=11 // pred_check
        %p121 = pneg %p77
      $region18: #{pixel_snail_forward.6} parent=11 // pred_check_branch
        %123 = sbr.rel (%p121) target = $region20
      $region19: #{pixel_snail_forward.6} parent=11 // pred_region
        _
      $region20: #{pixel_snail_forward.6} parent=11 // pred_fallthru
        _
    $region12: #{pixel_snail_forward.6} parent=5 // pred_fallthru
      _
    %p124 = scmp.lt.s32.totalorder %s9, 2
    // Predicated region
    $region21: #{pixel_snail_forward.6} parent=5 // pred_check
      %p125 = pneg %p124
    $region22: #{pixel_snail_forward.6} parent=5 // pred_check_branch
      %127 = sbr.rel (%p125) target = $region24
    $region23: #{pixel_snail_forward.6} parent=5 // pred_region
      // Predicated region
      $region25: #{pixel_snail_forward.6} parent=23 // pred_check
        %p128 = pneg %p29
      $region26: #{pixel_snail_forward.6} parent=23 // pred_check_branch
        %130 = sbr.rel (%p128) target = $region28
      $region27: #{pixel_snail_forward.6} parent=23 // pred_region
        %p131 = scmp.lt.s32.totalorder %s9, 1
        %s132 = scalar_select %p131, %s9, 1
        %s133 = smul.addr %s132, 8
        %s134 = smul.addr %s133, 8
        %s135 = scalar_lea.vmem %s0, %s134
      $region28: #{pixel_snail_forward.6} parent=23 // pred_fallthru
        _
    $region24: #{pixel_snail_forward.6} parent=5 // pred_fallthru
      _
    %p136 = scmp.le.s32.totalorder 1, %s9
    %p137 = scmp.lt.s32.totalorder %s9, 3
    %p138 = pnand %p136, %p137
    %p139 = pneg %p138
    // Predicated region
    $region29: #{pixel_snail_forward.6} parent=5 // pred_check
      _
    $region30: #{pixel_snail_forward.6} parent=5 // pred_check_branch
      %141 = sbr.rel (%p138) target = $region32
    $region31: #{pixel_snail_forward.6} parent=5 // pred_region
      %s142 = ssub.s32 %s9, 1
      %p143 = scmp.lt.s32.totalorder %s14, 1
      %s144 = scalar_select %p143, %s14, 1
      %s145 = smul.addr %s144, 8
      %s146 = smul.addr %s145, 8
      %s147 = scalar_lea.vmem %s0, %s146
      %p148 = pneg %p35
      %p149 = pneg %p32
      %p150 = pneg %p56
      %p151 = pneg %p53
      %p152 = pneg %p77
      %p153 = pneg %p74
      %p154 = pneg %p103
      %p155 = pneg %p100
      %p156 = scmp.lt.s32.totalorder %s14, 1
      %s157 = scalar_select %p156, %s14, 1
      %s158 = smul.addr %s157, 8
      %s159 = smul.addr %s158, 8
      %s160 = scalar_lea.vmem %s3, %s159
      %p161 = scmp.lt.s32.totalorder %s14, 1
      %s162 = scalar_select %p161, %s14, 1
      %s163 = smul.addr %s162, 8
      %s164 = smul.addr %s163, 8
      %s165 = scalar_lea.vmem %s0, %s164
      %p166 = scmp.lt.s32.totalorder %s14, 1
      %s167 = scalar_select %p166, %s14, 1
      %s168 = smul.addr %s167, 8
      %s169 = smul.addr %s168, 8
      %s170 = scalar_lea.vmem %s3, %s169
      %vm172 = vcmask 7168
      %173 = vst.msk [vmem:[#allocation2] sm:$0xff] %vm172, 0.0
      %vm174 = vcmask 1024
      %175 = vst.msk [vmem:[#allocation2 + $0x8] sm:$0x3] %vm174, 0.0
      %176 = vst.msk [vmem:[#allocation2 + $0x10] sm:$0xff] %vm172, 0.0
      %177 = vst.msk [vmem:[#allocation2 + $0x18] sm:$0x3] %vm174, 0.0
      %178 = vst.msk [vmem:[#allocation2 + $0x20] sm:$0xff] %vm172, 0.0
      %179 = vst.msk [vmem:[#allocation2 + $0x28] sm:$0x3] %vm174, 0.0
      %180 = vst.msk [vmem:[#allocation2 + $0x30] sm:$0xff] %vm172, 0.0
      %181 = vst.msk [vmem:[#allocation2 + $0x38] sm:$0x3] %vm174, 0.0
      %182 = vst.msk [vmem:[#allocation2 + $0x40] sm:$0xff] %vm172, 0.0
      %183 = vst.msk [vmem:[#allocation2 + $0x48] sm:$0x3] %vm174, 0.0
      %184 = vst.msk [vmem:[#allocation2 + $0x50] sm:$0xff] %vm172, 0.0
      %185 = vst.msk [vmem:[#allocation2 + $0x58] sm:$0x3] %vm174, 0.0
      %186 = vst.msk [vmem:[#allocation2 + $0x60] sm:$0xff] %vm172, 0.0
      %187 = vst.msk [vmem:[#allocation2 + $0x68] sm:$0x3] %vm174, 0.0
      %188 = vst.msk [vmem:[#allocation2 + $0x70] sm:$0xff] %vm172, 0.0
      %189 = vst.msk [vmem:[#allocation2 + $0x78] sm:$0x3] %vm174, 0.0
      %190 = vst.msk [vmem:[#allocation2 + $0x80] sm:$0xff] %vm172, 0.0
      %191 = vst.msk [vmem:[#allocation2 + $0x88] sm:$0x3] %vm174, 0.0
      %192 = vst.msk [vmem:[#allocation2 + $0x90] sm:$0xff] %vm172, 0.0
      %193 = vst.msk [vmem:[#allocation2 + $0x98] sm:$0x3] %vm174, 0.0
      %v194 = vld [vmem:[%s165] sm:$0xff]
      %v195 = vld [vmem:[%s165 + $0x8] sm:$0xff]
      %v196 = vld [vmem:[%s165 + $0x10] sm:$0xff]
      %v197 = vld [vmem:[%s165 + $0x18] sm:$0xff]
      %v198 = vld [vmem:[%s165 + $0x20] sm:$0xff]
      %v199 = vld [vmem:[%s165 + $0x28] sm:$0xff]
      %v200 = vld [vmem:[%s165 + $0x30] sm:$0xff]
      %v201 = vld [vmem:[%s165 + $0x38] sm:$0xff]
      %s202 = scalar_lea.vmem [#allocation2], 16
      %203 = vst.msk [vmem:[%s202 + $0x1] sm:$0xff] %vm172, %v194
      %204 = vst.msk [vmem:[%s202 + $0x11] sm:$0xff] %vm172, %v195
      %205 = vst.msk [vmem:[%s202 + $0x21] sm:$0xff] %vm172, %v196
      %206 = vst.msk [vmem:[%s202 + $0x31] sm:$0xff] %vm172, %v197
      %207 = vst.msk [vmem:[%s202 + $0x41] sm:$0xff] %vm172, %v198
      %208 = vst.msk [vmem:[%s202 + $0x51] sm:$0xff] %vm172, %v199
      %209 = vst.msk [vmem:[%s202 + $0x61] sm:$0xff] %vm172, %v200
      %210 = vst.msk [vmem:[%s202 + $0x71] sm:$0xff] %vm172, %v201
      %v211 = vld [vmem:[#allocation2] sm:$0xff]
      %v212 = vld [vmem:[#allocation2 + $0x8] sm:$0x3]
      %v213 = vld [vmem:[#allocation2 + $0x10] sm:$0xff]
      %v214 = vld [vmem:[#allocation2 + $0x18] sm:$0x3]
      %v215 = vld [vmem:[#allocation2 + $0x20] sm:$0xff]
      %v216 = vld [vmem:[#allocation2 + $0x28] sm:$0x3]
      %v217 = vld [vmem:[#allocation2 + $0x30] sm:$0xff]
      %v218 = vld [vmem:[#allocation2 + $0x38] sm:$0x3]
      %v219 = vld [vmem:[#allocation2 + $0x40] sm:$0xff]
      %v220 = vld [vmem:[#allocation2 + $0x48] sm:$0x3]
      %v221 = vld [vmem:[#allocation2 + $0x50] sm:$0xff]
      %v222 = vld [vmem:[#allocation2 + $0x58] sm:$0x3]
      %v223 = vld [vmem:[#allocation2 + $0x60] sm:$0xff]
      %v224 = vld [vmem:[#allocation2 + $0x68] sm:$0x3]
      %v225 = vld [vmem:[#allocation2 + $0x70] sm:$0xff]
      %v226 = vld [vmem:[#allocation2 + $0x78] sm:$0x3]
      %v227 = vld [vmem:[#allocation2 + $0x80] sm:$0xff]
      %v228 = vld [vmem:[#allocation2 + $0x88] sm:$0x3]
      %v229 = vld [vmem:[#allocation2 + $0x90] sm:$0xff]
      %v230 = vld [vmem:[#allocation2 + $0x98] sm:$0x3]
      %v231 = vpack.c.bf16 %v213, %v211
      %v232 = vpack.c.bf16 %v217, %v215
      %v233 = vpack.c.bf16 %v221, %v219
      %v234 = vpack.c.bf16 %v225, %v223
      %v235 = vld [vmem:[%s1] sm:$0x1]
      %vm252 = vcmask 1046528
      %v253 = vrot.slane %v211, 1
      %v254 = vrot.slane %v212, 1
      %v255 = vsel %vm252, %v253, %v254
      %v256 = vrot.slane %v213, 1
      %v257 = vrot.slane %v214, 1
      %v258 = vsel %vm252, %v256, %v257
      %v259 = vrot.slane %v215, 1
      %v260 = vrot.slane %v216, 1
      %v261 = vsel %vm252, %v259, %v260
      %v262 = vrot.slane %v217, 1
      %v263 = vrot.slane %v218, 1
      %v264 = vsel %vm252, %v262, %v263
      %v265 = vrot.slane %v219, 1
      %v266 = vrot.slane %v220, 1
      %v267 = vsel %vm252, %v265, %v266
      %v268 = vrot.slane %v221, 1
      %v269 = vrot.slane %v222, 1
      %v270 = vsel %vm252, %v268, %v269
      %v271 = vrot.slane %v223, 1
      %v272 = vrot.slane %v224, 1
      %v273 = vsel %vm252, %v271, %v272
      %v274 = vrot.slane %v225, 1
      %v275 = vrot.slane %v226, 1
      %v276 = vsel %vm252, %v274, %v275
      %v285 = vpack.c.bf16 %v258, %v255
      %v286 = vpack.c.bf16 %v264, %v261
      %v287 = vpack.c.bf16 %v270, %v267
      %v288 = vpack.c.bf16 %v276, %v273
      %s289 = scalar_lea.vmem %s1, 1
      %v290 = vld [vmem:[%s289] sm:$0x1]
      %v292 = vsel %vm172, %v285, 0
      %v295 = vsel %vm172, %v286, 0
      %v298 = vsel %vm172, %v287, 0
      %v301 = vsel %vm172, %v288, 0
      %vm303 = vcmask 1040384
      %v304 = vsel 0, 4294967295, 65535
      %v305 = vsel %vm303, %v304, 0
      %v307 = vand.u32 %v290, %v305
      %309 = vmatpush.bf16.msra.mxu0 0
      %310 = vmatpush.bf16.msra.mxu0 0
      %311 = vmatpush.bf16.msra.mxu0 0
      %312 = vmatpush.bf16.msra.mxu0 0
      %313 = vmatpush.bf16.msra.mxu0 0
      %314 = vmatpush.bf16.msra.mxu0 0
      %315 = vmatpush.bf16.msra.mxu0 0
      %316 = vmatpush.bf16.msra.mxu0 %v307
      %317 = vmatmul.bf16.gmra.mxu0 %v292
      %v318 = vpop.f32.mrf.mxu0
      %v319 = vadd.f32 0.0, %v318
      %v320 = vpop.f32.mrf.mxu0
      %v321 = vadd.f32 0.0, %v320
      %322 = vmatmul.bf16.gmra.mxu0 %v295
      %v323 = vpop.f32.mrf.mxu0
      %v324 = vadd.f32 0.0, %v323
      %v325 = vpop.f32.mrf.mxu0
      %v326 = vadd.f32 0.0, %v325
      %327 = vmatmul.bf16.gmra.mxu0 %v298
      %v328 = vpop.f32.mrf.mxu0
      %v329 = vadd.f32 0.0, %v328
      %v330 = vpop.f32.mrf.mxu0
      %v331 = vadd.f32 0.0, %v330
      %332 = vmatmul.bf16.gmra.mxu0 %v301
      %v333 = vpop.f32.mrf.mxu0
      %v334 = vadd.f32 0.0, %v333
      %v335 = vpop.f32.mrf.mxu0
      %v336 = vadd.f32 0.0, %v335
      %337 = vdwg.mxu0
      %v339 = vsel %vm172, %v231, 0
      %v342 = vsel %vm172, %v232, 0
      %v345 = vsel %vm172, %v233, 0
      %v348 = vsel %vm172, %v234, 0
      %v351 = vand.u32 %v235, %v305
      %353 = vmatpush.bf16.msra.mxu0 0
      %354 = vmatpush.bf16.msra.mxu0 0
      %355 = vmatpush.bf16.msra.mxu0 0
      %356 = vmatpush.bf16.msra.mxu0 0
      %357 = vmatpush.bf16.msra.mxu0 0
      %358 = vmatpush.bf16.msra.mxu0 0
      %359 = vmatpush.bf16.msra.mxu0 0
      %360 = vmatpush.bf16.msra.mxu0 %v351
      %361 = vmatmul.bf16.gmra.mxu0 %v339
      %v362 = vpop.f32.mrf.mxu0
      %v363 = vadd.f32 %v319, %v362
      %v364 = vpop.f32.mrf.mxu0
      %v365 = vadd.f32 %v321, %v364
      %366 = vmatmul.bf16.gmra.mxu0 %v342
      %v367 = vpop.f32.mrf.mxu0
      %v368 = vadd.f32 %v324, %v367
      %v369 = vpop.f32.mrf.mxu0
      %v370 = vadd.f32 %v326, %v369
      %371 = vmatmul.bf16.gmra.mxu0 %v345
      %v372 = vpop.f32.mrf.mxu0
      %v373 = vadd.f32 %v329, %v372
      %v374 = vpop.f32.mrf.mxu0
      %v375 = vadd.f32 %v331, %v374
      %376 = vmatmul.bf16.gmra.mxu0 %v348
      %v377 = vpop.f32.mrf.mxu0
      %v378 = vadd.f32 %v334, %v377
      %v379 = vpop.f32.mrf.mxu0
      %v380 = vadd.f32 %v336, %v379
      %381 = vdwg.mxu0
      %vm382 = vcmask 1045504
      %v383 = vrot.slane %v211, 2
      %v384 = vrot.slane %v212, 2
      %v385 = vsel %vm382, %v383, %v384
      %v386 = vrot.slane %v213, 2
      %v387 = vrot.slane %v214, 2
      %v388 = vsel %vm382, %v386, %v387
      %v389 = vrot.slane %v215, 2
      %v390 = vrot.slane %v216, 2
      %v391 = vsel %vm382, %v389, %v390
      %v392 = vrot.slane %v217, 2
      %v393 = vrot.slane %v218, 2
      %v394 = vsel %vm382, %v392, %v393
      %v395 = vrot.slane %v219, 2
      %v396 = vrot.slane %v220, 2
      %v397 = vsel %vm382, %v395, %v396
      %v398 = vrot.slane %v221, 2
      %v399 = vrot.slane %v222, 2
      %v400 = vsel %vm382, %v398, %v399
      %v401 = vrot.slane %v223, 2
      %v402 = vrot.slane %v224, 2
      %v403 = vsel %vm382, %v401, %v402
      %v404 = vrot.slane %v225, 2
      %v405 = vrot.slane %v226, 2
      %v406 = vsel %vm382, %v404, %v405
      %v415 = vpack.c.bf16 %v388, %v385
      %v416 = vpack.c.bf16 %v394, %v391
      %v417 = vpack.c.bf16 %v400, %v397
      %v418 = vpack.c.bf16 %v406, %v403
      %s419 = scalar_lea.vmem %s1, 2
      %v420 = vld [vmem:[%s419] sm:$0x1]
      %v422 = vsel %vm172, %v415, 0
      %v425 = vsel %vm172, %v416, 0
      %v428 = vsel %vm172, %v417, 0
      %v431 = vsel %vm172, %v418, 0
      %v434 = vand.u32 %v420, %v305
      %436 = vmatpush.bf16.msra.mxu0 0
      %437 = vmatpush.bf16.msra.mxu0 0
      %438 = vmatpush.bf16.msra.mxu0 0
      %439 = vmatpush.bf16.msra.mxu0 0
      %440 = vmatpush.bf16.msra.mxu0 0
      %441 = vmatpush.bf16.msra.mxu0 0
      %442 = vmatpush.bf16.msra.mxu0 0
      %443 = vmatpush.bf16.msra.mxu0 %v434
      %444 = vmatmul.bf16.gmra.mxu0 %v422
      %v445 = vpop.f32.mrf.mxu0
      %v446 = vadd.f32 0.0, %v445
      %v447 = vpop.f32.mrf.mxu0
      %v448 = vadd.f32 0.0, %v447
      %449 = vmatmul.bf16.gmra.mxu0 %v425
      %v450 = vpop.f32.mrf.mxu0
      %v451 = vadd.f32 0.0, %v450
      %v452 = vpop.f32.mrf.mxu0
      %v453 = vadd.f32 0.0, %v452
      %454 = vmatmul.bf16.gmra.mxu0 %v428
      %v455 = vpop.f32.mrf.mxu0
      %v456 = vadd.f32 0.0, %v455
      %v457 = vpop.f32.mrf.mxu0
      %v458 = vadd.f32 0.0, %v457
      %459 = vmatmul.bf16.gmra.mxu0 %v431
      %v460 = vpop.f32.mrf.mxu0
      %v461 = vadd.f32 0.0, %v460
      %v462 = vpop.f32.mrf.mxu0
      %v463 = vadd.f32 0.0, %v462
      %464 = vdwg.mxu0
      %v465 = vadd.f32 %v363, %v446
      %v466 = vadd.f32 %v365, %v448
      %v467 = vadd.f32 %v368, %v451
      %v468 = vadd.f32 %v370, %v453
      %v469 = vadd.f32 %v373, %v456
      %v470 = vadd.f32 %v375, %v458
      %v471 = vadd.f32 %v378, %v461
      %v472 = vadd.f32 %v380, %v463
      %v473 = vpack.c.bf16 %v215, %v213
      %v474 = vpack.c.bf16 %v219, %v217
      %v475 = vpack.c.bf16 %v223, %v221
      %v476 = vpack.c.bf16 %v227, %v225
      %s477 = scalar_lea.vmem %s1, 3
      %v478 = vld [vmem:[%s477] sm:$0x1]
      %v480 = vsel %vm172, %v473, 0
      %v483 = vsel %vm172, %v474, 0
      %v486 = vsel %vm172, %v475, 0
      %v489 = vsel %vm172, %v476, 0
      %v492 = vand.u32 %v478, %v305
      %494 = vmatpush.bf16.msra.mxu0 0
      %495 = vmatpush.bf16.msra.mxu0 0
      %496 = vmatpush.bf16.msra.mxu0 0
      %497 = vmatpush.bf16.msra.mxu0 0
      %498 = vmatpush.bf16.msra.mxu0 0
      %499 = vmatpush.bf16.msra.mxu0 0
      %500 = vmatpush.bf16.msra.mxu0 0
      %501 = vmatpush.bf16.msra.mxu0 %v492
      %502 = vmatmul.bf16.gmra.mxu0 %v480
      %v503 = vpop.f32.mrf.mxu0
      %v504 = vadd.f32 0.0, %v503
      %v505 = vpop.f32.mrf.mxu0
      %v506 = vadd.f32 0.0, %v505
      %507 = vmatmul.bf16.gmra.mxu0 %v483
      %v508 = vpop.f32.mrf.mxu0
      %v509 = vadd.f32 0.0, %v508
      %v510 = vpop.f32.mrf.mxu0
      %v511 = vadd.f32 0.0, %v510
      %512 = vmatmul.bf16.gmra.mxu0 %v486
      %v513 = vpop.f32.mrf.mxu0
      %v514 = vadd.f32 0.0, %v513
      %v515 = vpop.f32.mrf.mxu0
      %v516 = vadd.f32 0.0, %v515
      %517 = vmatmul.bf16.gmra.mxu0 %v489
      %v518 = vpop.f32.mrf.mxu0
      %v519 = vadd.f32 0.0, %v518
      %v520 = vpop.f32.mrf.mxu0
      %v521 = vadd.f32 0.0, %v520
      %522 = vdwg.mxu0
      %v523 = vadd.f32 %v465, %v504
      %v524 = vadd.f32 %v466, %v506
      %v525 = vadd.f32 %v467, %v509
      %v526 = vadd.f32 %v468, %v511
      %v527 = vadd.f32 %v469, %v514
      %v528 = vadd.f32 %v470, %v516
      %v529 = vadd.f32 %v471, %v519
      %v530 = vadd.f32 %v472, %v521
      %v533 = vrot.slane %v227, 1
      %v534 = vrot.slane %v228, 1
      %v535 = vsel %vm252, %v533, %v534
      %v537 = vpack.c.bf16 %v261, %v258
      %v538 = vpack.c.bf16 %v267, %v264
      %v539 = vpack.c.bf16 %v273, %v270
      %v540 = vpack.c.bf16 %v535, %v276
      %s541 = scalar_lea.vmem %s1, 4
      %v542 = vld [vmem:[%s541] sm:$0x1]
      %v544 = vsel %vm172, %v537, 0
      %v547 = vsel %vm172, %v538, 0
      %v550 = vsel %vm172, %v539, 0
      %v553 = vsel %vm172, %v540, 0
      %v556 = vand.u32 %v542, %v305
      %558 = vmatpush.bf16.msra.mxu0 0
      %559 = vmatpush.bf16.msra.mxu0 0
      %560 = vmatpush.bf16.msra.mxu0 0
      %561 = vmatpush.bf16.msra.mxu0 0
      %562 = vmatpush.bf16.msra.mxu0 0
      %563 = vmatpush.bf16.msra.mxu0 0
      %564 = vmatpush.bf16.msra.mxu0 0
      %565 = vmatpush.bf16.msra.mxu0 %v556
      %566 = vmatmul.bf16.gmra.mxu0 %v544
      %v567 = vpop.f32.mrf.mxu0
      %v568 = vadd.f32 0.0, %v567
      %v569 = vpop.f32.mrf.mxu0
      %v570 = vadd.f32 0.0, %v569
      %571 = vmatmul.bf16.gmra.mxu0 %v547
      %v572 = vpop.f32.mrf.mxu0
      %v573 = vadd.f32 0.0, %v572
      %v574 = vpop.f32.mrf.mxu0
      %v575 = vadd.f32 0.0, %v574
      %576 = vmatmul.bf16.gmra.mxu0 %v550
      %v577 = vpop.f32.mrf.mxu0
      %v578 = vadd.f32 0.0, %v577
      %v579 = vpop.f32.mrf.mxu0
      %v580 = vadd.f32 0.0, %v579
      %581 = vmatmul.bf16.gmra.mxu0 %v553
      %v582 = vpop.f32.mrf.mxu0
      %v583 = vadd.f32 0.0, %v582
      %v584 = vpop.f32.mrf.mxu0
      %v585 = vadd.f32 0.0, %v584
      %586 = vdwg.mxu0
      %v587 = vadd.f32 %v523, %v568
      %v588 = vadd.f32 %v524, %v570
      %v589 = vadd.f32 %v525, %v573
      %v590 = vadd.f32 %v526, %v575
      %v591 = vadd.f32 %v527, %v578
      %v592 = vadd.f32 %v528, %v580
      %v593 = vadd.f32 %v529, %v583
      %v594 = vadd.f32 %v530, %v585
      %v595 = vrot.slane %v227, 2
      %v596 = vrot.slane %v228, 2
      %v597 = vsel %vm382, %v595, %v596
      %v599 = vpack.c.bf16 %v391, %v388
      %v600 = vpack.c.bf16 %v397, %v394
      %v601 = vpack.c.bf16 %v403, %v400
      %v602 = vpack.c.bf16 %v597, %v406
      %s603 = scalar_lea.vmem %s1, 5
      %v604 = vld [vmem:[%s603] sm:$0x1]
      %v606 = vsel %vm172, %v599, 0
      %v609 = vsel %vm172, %v600, 0
      %v612 = vsel %vm172, %v601, 0
      %v615 = vsel %vm172, %v602, 0
      %v618 = vand.u32 %v604, %v305
      %620 = vmatpush.bf16.msra.mxu0 0
      %621 = vmatpush.bf16.msra.mxu0 0
      %622 = vmatpush.bf16.msra.mxu0 0
      %623 = vmatpush.bf16.msra.mxu0 0
      %624 = vmatpush.bf16.msra.mxu0 0
      %625 = vmatpush.bf16.msra.mxu0 0
      %626 = vmatpush.bf16.msra.mxu0 0
      %627 = vmatpush.bf16.msra.mxu0 %v618
      %628 = vmatmul.bf16.gmra.mxu0 %v606
      %v629 = vpop.f32.mrf.mxu0
      %v630 = vadd.f32 0.0, %v629
      %v631 = vpop.f32.mrf.mxu0
      %v632 = vadd.f32 0.0, %v631
      %633 = vmatmul.bf16.gmra.mxu0 %v609
      %v634 = vpop.f32.mrf.mxu0
      %v635 = vadd.f32 0.0, %v634
      %v636 = vpop.f32.mrf.mxu0
      %v637 = vadd.f32 0.0, %v636
      %638 = vmatmul.bf16.gmra.mxu0 %v612
      %v639 = vpop.f32.mrf.mxu0
      %v640 = vadd.f32 0.0, %v639
      %v641 = vpop.f32.mrf.mxu0
      %v642 = vadd.f32 0.0, %v641
      %643 = vmatmul.bf16.gmra.mxu0 %v615
      %v644 = vpop.f32.mrf.mxu0
      %v645 = vadd.f32 0.0, %v644
      %v646 = vpop.f32.mrf.mxu0
      %v647 = vadd.f32 0.0, %v646
      %648 = vdwg.mxu0
      %v649 = vadd.f32 %v587, %v630
      %v650 = vadd.f32 %v588, %v632
      %v651 = vadd.f32 %v589, %v635
      %v652 = vadd.f32 %v590, %v637
      %v653 = vadd.f32 %v591, %v640
      %v654 = vadd.f32 %v592, %v642
      %v655 = vadd.f32 %v593, %v645
      %v656 = vadd.f32 %v594, %v647
      %v657 = vpack.c.bf16 %v229, %v227
      %s658 = scalar_lea.vmem %s1, 6
      %v659 = vld [vmem:[%s658] sm:$0x1]
      %v661 = vsel %vm172, %v657, 0
      %v664 = vand.u32 %v659, %v305
      %666 = vmatpush.bf16.msra.mxu0 0
      %667 = vmatpush.bf16.msra.mxu0 0
      %668 = vmatpush.bf16.msra.mxu0 0
      %669 = vmatpush.bf16.msra.mxu0 0
      %670 = vmatpush.bf16.msra.mxu0 0
      %671 = vmatpush.bf16.msra.mxu0 0
      %672 = vmatpush.bf16.msra.mxu0 0
      %673 = vmatpush.bf16.msra.mxu0 %v664
      %674 = vmatmul.bf16.gmra.mxu0 %v342
      %v675 = vpop.f32.mrf.mxu0
      %v676 = vadd.f32 0.0, %v675
      %v677 = vpop.f32.mrf.mxu0
      %v678 = vadd.f32 0.0, %v677
      %679 = vmatmul.bf16.gmra.mxu0 %v345
      %v680 = vpop.f32.mrf.mxu0
      %v681 = vadd.f32 0.0, %v680
      %v682 = vpop.f32.mrf.mxu0
      %v683 = vadd.f32 0.0, %v682
      %684 = vmatmul.bf16.gmra.mxu0 %v348
      %v685 = vpop.f32.mrf.mxu0
      %v686 = vadd.f32 0.0, %v685
      %v687 = vpop.f32.mrf.mxu0
      %v688 = vadd.f32 0.0, %v687
      %689 = vmatmul.bf16.gmra.mxu0 %v661
      %v690 = vpop.f32.mrf.mxu0
      %v691 = vadd.f32 0.0, %v690
      %v692 = vpop.f32.mrf.mxu0
      %v693 = vadd.f32 0.0, %v692
      %694 = vdwg.mxu0
      %v695 = vadd.f32 %v649, %v676
      %v696 = vadd.f32 %v650, %v678
      %v697 = vadd.f32 %v651, %v681
      %v698 = vadd.f32 %v652, %v683
      %v699 = vadd.f32 %v653, %v686
      %v700 = vadd.f32 %v654, %v688
      %v701 = vadd.f32 %v655, %v691
      %v702 = vadd.f32 %v656, %v693
      %v705 = vrot.slane %v229, 1
      %v706 = vrot.slane %v230, 1
      %v707 = vsel %vm252, %v705, %v706
      %v709 = vpack.c.bf16 %v707, %v535
      %s710 = scalar_lea.vmem %s1, 7
      %v711 = vld [vmem:[%s710] sm:$0x1]
      %v713 = vsel %vm172, %v709, 0
      %v716 = vand.u32 %v711, %v305
      %718 = vmatpush.bf16.msra.mxu0 0
      %719 = vmatpush.bf16.msra.mxu0 0
      %720 = vmatpush.bf16.msra.mxu0 0
      %721 = vmatpush.bf16.msra.mxu0 0
      %722 = vmatpush.bf16.msra.mxu0 0
      %723 = vmatpush.bf16.msra.mxu0 0
      %724 = vmatpush.bf16.msra.mxu0 0
      %725 = vmatpush.bf16.msra.mxu0 %v716
      %726 = vmatmul.bf16.gmra.mxu0 %v295
      %v727 = vpop.f32.mrf.mxu0
      %v728 = vadd.f32 0.0, %v727
      %v729 = vpop.f32.mrf.mxu0
      %v730 = vadd.f32 0.0, %v729
      %731 = vmatmul.bf16.gmra.mxu0 %v298
      %v732 = vpop.f32.mrf.mxu0
      %v733 = vadd.f32 0.0, %v732
      %v734 = vpop.f32.mrf.mxu0
      %v735 = vadd.f32 0.0, %v734
      %736 = vmatmul.bf16.gmra.mxu0 %v301
      %v737 = vpop.f32.mrf.mxu0
      %v738 = vadd.f32 0.0, %v737
      %v739 = vpop.f32.mrf.mxu0
      %v740 = vadd.f32 0.0, %v739
      %741 = vmatmul.bf16.gmra.mxu0 %v713
      %v742 = vpop.f32.mrf.mxu0
      %v743 = vadd.f32 0.0, %v742
      %v744 = vpop.f32.mrf.mxu0
      %v745 = vadd.f32 0.0, %v744
      %746 = vdwg.mxu0
      %v747 = vadd.f32 %v695, %v728
      %v748 = vadd.f32 %v696, %v730
      %v749 = vadd.f32 %v697, %v733
      %v750 = vadd.f32 %v698, %v735
      %v751 = vadd.f32 %v699, %v738
      %v752 = vadd.f32 %v700, %v740
      %v753 = vadd.f32 %v701, %v743
      %v754 = vadd.f32 %v702, %v745
      %v755 = vrot.slane %v229, 2
      %v756 = vrot.slane %v230, 2
      %v757 = vsel %vm382, %v755, %v756
      %v759 = vpack.c.bf16 %v757, %v597
      %s760 = scalar_lea.vmem %s1, 8
      %v761 = vld [vmem:[%s760] sm:$0x1]
      %v763 = vsel %vm172, %v759, 0
      %v766 = vand.u32 %v761, %v305
      %768 = vmatpush.bf16.msra.mxu0 0
      %769 = vmatpush.bf16.msra.mxu0 0
      %770 = vmatpush.bf16.msra.mxu0 0
      %771 = vmatpush.bf16.msra.mxu0 0
      %772 = vmatpush.bf16.msra.mxu0 0
      %773 = vmatpush.bf16.msra.mxu0 0
      %774 = vmatpush.bf16.msra.mxu0 0
      %775 = vmatpush.bf16.msra.mxu0 %v766
      %776 = vmatmul.bf16.gmra.mxu0 %v425
      %v777 = vpop.f32.mrf.mxu0
      %v778 = vadd.f32 0.0, %v777
      %v779 = vpop.f32.mrf.mxu0
      %v780 = vadd.f32 0.0, %v779
      %781 = vmatmul.bf16.gmra.mxu0 %v428
      %v782 = vpop.f32.mrf.mxu0
      %v783 = vadd.f32 0.0, %v782
      %v784 = vpop.f32.mrf.mxu0
      %v785 = vadd.f32 0.0, %v784
      %786 = vmatmul.bf16.gmra.mxu0 %v431
      %v787 = vpop.f32.mrf.mxu0
      %v788 = vadd.f32 0.0, %v787
      %v789 = vpop.f32.mrf.mxu0
      %v790 = vadd.f32 0.0, %v789
      %791 = vmatmul.bf16.gmra.mxu0 %v763
      %v792 = vpop.f32.mrf.mxu0
      %v793 = vadd.f32 0.0, %v792
      %v794 = vpop.f32.mrf.mxu0
      %v795 = vadd.f32 0.0, %v794
      %796 = vdwg.mxu0
      %v797 = vadd.f32 %v747, %v778
      %v798 = vadd.f32 %v748, %v780
      %v799 = vadd.f32 %v749, %v783
      %v800 = vadd.f32 %v750, %v785
      %v801 = vadd.f32 %v751, %v788
      %v802 = vadd.f32 %v752, %v790
      %v803 = vadd.f32 %v753, %v793
      %v804 = vadd.f32 %v754, %v795
      %v805 = vld [vmem:[%s2] sm:$0x1]
      %v807 = vperm.slane %v805, 0
      %v809 = vadd.f32 %v797, %v807
      %v810 = vadd.f32 %v798, %v807
      %v811 = vadd.f32 %v799, %v807
      %v812 = vadd.f32 %v800, %v807
      %v813 = vadd.f32 %v801, %v807
      %v814 = vadd.f32 %v802, %v807
      %v815 = vadd.f32 %v803, %v807
      %v816 = vadd.f32 %v804, %v807
      %vm817 = vcmask 261120
      %818 = vst.msk [vmem:[%s170] sm:$0xff] %vm817, %v809
      %819 = vst.msk [vmem:[%s170 + $0x8] sm:$0xff] %vm817, %v810
      %820 = vst.msk [vmem:[%s170 + $0x10] sm:$0xff] %vm817, %v811
      %821 = vst.msk [vmem:[%s170 + $0x18] sm:$0xff] %vm817, %v812
      %822 = vst.msk [vmem:[%s170 + $0x20] sm:$0xff] %vm817, %v813
      %823 = vst.msk [vmem:[%s170 + $0x28] sm:$0xff] %vm817, %v814
      %824 = vst.msk [vmem:[%s170 + $0x30] sm:$0xff] %vm817, %v815
      %825 = vst.msk [vmem:[%s170 + $0x38] sm:$0xff] %vm817, %v816
      %p826 = scmp.lt.s32.totalorder %s14, 1
      %s827 = scalar_select %p826, %s14, 1
      %s828 = smul.addr %s827, 8
      %s829 = smul.addr %s828, 8
      %s830 = scalar_lea.vmem %s3, %s829
      // Predicated region
      $region33: #{pixel_snail_forward.6} parent=31 // pred_check
        %p831 = pneg %p100
      $region34: #{pixel_snail_forward.6} parent=31 // pred_check_branch
        %833 = sbr.rel (%p831) target = $region36
      $region35: #{pixel_snail_forward.6} parent=31 // pred_region
        _
      $region36: #{pixel_snail_forward.6} parent=31 // pred_fallthru
        _
    $region32: #{pixel_snail_forward.6} parent=5 // pred_fallthru
      _
    %p834 = scmp.le.s32.totalorder 2, %s9
    // Predicated region
    $region37: #{pixel_snail_forward.6} parent=5 // pred_check
      %p835 = pneg %p834
    $region38: #{pixel_snail_forward.6} parent=5 // pred_check_branch
      %837 = sbr.rel (%p835) target = $region40
    $region39: #{pixel_snail_forward.6} parent=5 // pred_region
      %s838 = ssub.s32 %s9, 2
      // Predicated region
      $region41: #{pixel_snail_forward.6} parent=39 // pred_check
        %p839 = pneg %p106
      $region42: #{pixel_snail_forward.6} parent=39 // pred_check_branch
        %841 = sbr.rel (%p839) target = $region44
      $region43: #{pixel_snail_forward.6} parent=39 // pred_region
        %p842 = scmp.lt.s32.totalorder %s15, 1
        %s843 = scalar_select %p842, %s15, 1
        %s844 = smul.addr %s843, 8
        %s845 = smul.addr %s844, 8
        %s846 = scalar_lea.vmem %s3, %s845
      $region44: #{pixel_snail_forward.6} parent=39 // pred_fallthru
        _
    $region40: #{pixel_snail_forward.6} parent=5 // pred_fallthru
      _
  $region6: #{pixel_snail_forward.6} parent=0 // loop_footer
    %s13 = sadd.s32 1, %s9
  $region7: #{pixel_snail_forward.6} parent=0 // loop_footer_branch
    %8 = sbr.rel target = $region3
  $region8: #{pixel_snail_forward.6} parent=0 // loop_exit
    _

// kernel: pixel_snail_forward.8
$region0: #{pixel_snail_forward.8}
  #allocation0 [shape = 'u32[]', space=smem, size = 0x4, offset = 0x4, fixed_abs, tag = 'smem constant byte address 0x4 - core index']
  #allocation1 [shape = 'u32[72,128]{1,0:T(1,128)}', space=vmem, size = 0x9000, scoped, tag = 'internal scratch']
  %s0 = inlined_call_operand.vmem [shape: f32[2,64,32], index: 0, kind: input, shape index: {}]
  %s1 = inlined_call_operand.vmem [shape: f32[2,64,32], index: 1, kind: input, shape index: {}]
  %s2 = inlined_call_operand.vmem [shape: f32[64,64], index: 2, kind: input, shape index: {}]
  %s3 = inlined_call_operand.vmem [shape: bf16[32,64], index: 3, kind: input, shape index: {}]
  %s4 = inlined_call_operand.vmem [shape: bf16[32,32], index: 4, kind: input, shape index: {}]
  %s5 = inlined_call_operand.vmem [shape: f32[1,32], index: 5, kind: input, shape index: {}]
  %s6 = inlined_call_operand.vmem [shape: bf16[32,32], index: 6, kind: input, shape index: {}]
  %s7 = inlined_call_operand.vmem [shape: f32[1,32], index: 7, kind: input, shape index: {}]
  %s8 = inlined_call_operand.vmem [shape: bf16[32,32], index: 8, kind: input, shape index: {}]
  %s9 = inlined_call_operand.vmem [shape: f32[1,32], index: 9, kind: input, shape index: {}]
  %s10 = inlined_call_operand.vmem [shape: bf16[32,32], index: 10, kind: input, shape index: {}]
  %s11 = inlined_call_operand.vmem [shape: f32[1,32], index: 11, kind: input, shape index: {}]
  %s12 = inlined_call_operand.vmem [shape: f32[2,64,32], index: 12, kind: output, shape index: {}]
  %s13 = sld [smem:[#allocation0]]
  $region81: #{pixel_snail_forward.8} parent=0
    _
  %s15 = ssub.s32 1, %s13
  %s16 = scalar_select 0, %s15, %s13
  loop: start=0, step=1, limit=4
  $region2: #{pixel_snail_forward.8} parent=0 // loop_pre_header
    _
  $region3: #{pixel_snail_forward.8} parent=0 // loop_header
    %s18 = sphi 0, %s22
    %p19 = scmp.ge.s32.totalorder %s18, 4
    %s28 = sphi 0, %s30
    %s31 = sphi 0, %s28
    %s32 = sphi 0, %s31
    %s48 = sphi 0, %s32
    %s54 = sphi 0, %s56
    %s57 = sphi 0, %s54
    %s58 = sphi 0, %s57
    %s74 = sphi 0, %s58
    %s78 = sphi 0, %s78
    %s80 = sphi 0, %s78
    %s81 = sphi 0, %s80
    %s95 = sphi 0, %s81
    %s99 = sphi 0, %s99
    %s101 = sphi 0, %s99
    %s102 = sphi 0, %s101
    %s116 = sphi 0, %s102
    %s120 = sphi 0, %s120
    %s122 = sphi 0, %s120
    %s123 = sphi 0, %s122
    %s137 = sphi 0, %s123
    %s141 = sphi 0, %s141
    %s143 = sphi 0, %s141
    %s144 = sphi 0, %s143
    %s158 = sphi 0, %s144
    %s162 = sphi 0, %s162
    %s164 = sphi 0, %s162
    %s165 = sphi 0, %s164
    %s179 = sphi 0, %s165
    %s183 = sphi 0, %s183
    %s185 = sphi 0, %s183
    %s186 = sphi 0, %s185
    %s200 = sphi 0, %s186
    %s204 = sphi 0, %s204
    %s206 = sphi 0, %s204
    %s207 = sphi 0, %s206
    %s221 = sphi 0, %s207
    %s225 = sphi 0, %s225
    %s227 = sphi 0, %s225
    %s228 = sphi 0, %s227
    %s242 = sphi 0, %s228
    %s246 = sphi 0, %s246
    %s248 = sphi 0, %s246
    %s249 = sphi 0, %s248
    %s263 = sphi 0, %s249
    %s267 = sphi 0, %s267
    %s269 = sphi 0, %s267
    %s270 = sphi 0, %s269
    %s284 = sphi 0, %s270
    %s290 = sphi 0, %s292
    %s293 = sphi 0, %s290
    %s294 = sphi 0, %s293
    %s310 = sphi 0, %s294
  $region4: #{pixel_snail_forward.8} parent=0 // loop_header_branch
    %21 = sbr.rel (%p19) target = $region8
  $region5: #{pixel_snail_forward.8} parent=0 // loop_body
    %s23 = ssub.s32 %s18, 1
    %s24 = ssub.s32 %s18, 2
    %s25 = sadd.s32 %s18, 1
    %s26 = ssub.s32 %s18, %s25
    %p27 = scmp.eq.s32.totalorder %s26, 0
    %s29 = sadd.s32 %s28, 1
    %s30 = scalar_select %p27, %s28, %s29
    %p33 = pneg %p27
    %p34 = scmp.eq.s32.totalorder %s18, 1
    %p35 = por %p33, %p34
    %p36 = scmp.ne.s32.totalorder %s28, %s31
    %p37 = scmp.eq.s32.totalorder %s18, 0
    %p38 = por %p36, %p37
    %p39 = scmp.ne.s32.totalorder %s28, %s31
    %p40 = scmp.eq.s32.totalorder %s23, 1
    %p41 = por %p39, %p40
    %p42 = scmp.ne.s32.totalorder %s31, %s32
    %p43 = scmp.eq.s32.totalorder %s23, 0
    %p44 = por %p42, %p43
    %p45 = scmp.ne.s32.totalorder %s31, %s32
    %p46 = scmp.eq.s32.totalorder %s24, 1
    %p47 = por %p45, %p46
    %p49 = scmp.ne.s32.totalorder %s32, %s48
    %p50 = scmp.eq.s32.totalorder %s24, 0
    %p51 = por %p49, %p50
    %s52 = ssub.s32 %s18, %s25
    %p53 = scmp.eq.s32.totalorder %s52, 0
    %s55 = sadd.s32 %s54, 1
    %s56 = scalar_select %p53, %s54, %s55
    %p59 = pneg %p53
    %p60 = scmp.eq.s32.totalorder %s18, 1
    %p61 = por %p59, %p60
    %p62 = scmp.ne.s32.totalorder %s54, %s57
    %p63 = scmp.eq.s32.totalorder %s18, 0
    %p64 = por %p62, %p63
    %p65 = scmp.ne.s32.totalorder %s54, %s57
    %p66 = scmp.eq.s32.totalorder %s23, 1
    %p67 = por %p65, %p66
    %p68 = scmp.ne.s32.totalorder %s57, %s58
    %p69 = scmp.eq.s32.totalorder %s23, 0
    %p70 = por %p68, %p69
    %p71 = scmp.ne.s32.totalorder %s57, %s58
    %p72 = scmp.eq.s32.totalorder %s24, 1
    %p73 = por %p71, %p72
    %p75 = scmp.ne.s32.totalorder %s58, %s74
    %p76 = scmp.eq.s32.totalorder %s24, 0
    %p77 = por %p75, %p76
    %s79 = sadd.s32 %s78, 1
    %p82 = scmp.eq.s32.totalorder %s18, 1
    %p83 = scmp.ne.s32.totalorder %s78, %s80
    %p84 = scmp.eq.s32.totalorder %s18, 0
    %p85 = por %p83, %p84
    %p86 = scmp.ne.s32.totalorder %s78, %s80
    %p87 = scmp.eq.s32.totalorder %s23, 1
    %p88 = por %p86, %p87
    %p89 = scmp.ne.s32.totalorder %s80, %s81
    %p90 = scmp.eq.s32.totalorder %s23, 0
    %p91 = por %p89, %p90
    %p92 = scmp.ne.s32.totalorder %s80, %s81
    %p93 = scmp.eq.s32.totalorder %s24, 1
    %p94 = por %p92, %p93
    %p96 = scmp.ne.s32.totalorder %s81, %s95
    %p97 = scmp.eq.s32.totalorder %s24, 0
    %p98 = por %p96, %p97
    %s100 = sadd.s32 %s99, 1
    %p103 = scmp.eq.s32.totalorder %s18, 1
    %p104 = scmp.ne.s32.totalorder %s99, %s101
    %p105 = scmp.eq.s32.totalorder %s18, 0
    %p106 = por %p104, %p105
    %p107 = scmp.ne.s32.totalorder %s99, %s101
    %p108 = scmp.eq.s32.totalorder %s23, 1
    %p109 = por %p107, %p108
    %p110 = scmp.ne.s32.totalorder %s101, %s102
    %p111 = scmp.eq.s32.totalorder %s23, 0
    %p112 = por %p110, %p111
    %p113 = scmp.ne.s32.totalorder %s101, %s102
    %p114 = scmp.eq.s32.totalorder %s24, 1
    %p115 = por %p113, %p114
    %p117 = scmp.ne.s32.totalorder %s102, %s116
    %p118 = scmp.eq.s32.totalorder %s24, 0
    %p119 = por %p117, %p118
    %s121 = sadd.s32 %s120, 1
    %p124 = scmp.eq.s32.totalorder %s18, 1
    %p125 = scmp.ne.s32.totalorder %s120, %s122
    %p126 = scmp.eq.s32.totalorder %s18, 0
    %p127 = por %p125, %p126
    %p128 = scmp.ne.s32.totalorder %s120, %s122
    %p129 = scmp.eq.s32.totalorder %s23, 1
    %p130 = por %p128, %p129
    %p131 = scmp.ne.s32.totalorder %s122, %s123
    %p132 = scmp.eq.s32.totalorder %s23, 0
    %p133 = por %p131, %p132
    %p134 = scmp.ne.s32.totalorder %s122, %s123
    %p135 = scmp.eq.s32.totalorder %s24, 1
    %p136 = por %p134, %p135
    %p138 = scmp.ne.s32.totalorder %s123, %s137
    %p139 = scmp.eq.s32.totalorder %s24, 0
    %p140 = por %p138, %p139
    %s142 = sadd.s32 %s141, 1
    %p145 = scmp.eq.s32.totalorder %s18, 1
    %p146 = scmp.ne.s32.totalorder %s141, %s143
    %p147 = scmp.eq.s32.totalorder %s18, 0
    %p148 = por %p146, %p147
    %p149 = scmp.ne.s32.totalorder %s141, %s143
    %p150 = scmp.eq.s32.totalorder %s23, 1
    %p151 = por %p149, %p150
    %p152 = scmp.ne.s32.totalorder %s143, %s144
    %p153 = scmp.eq.s32.totalorder %s23, 0
    %p154 = por %p152, %p153
    %p155 = scmp.ne.s32.totalorder %s143, %s144
    %p156 = scmp.eq.s32.totalorder %s24, 1
    %p157 = por %p155, %p156
    %p159 = scmp.ne.s32.totalorder %s144, %s158
    %p160 = scmp.eq.s32.totalorder %s24, 0
    %p161 = por %p159, %p160
    %s163 = sadd.s32 %s162, 1
    %p166 = scmp.eq.s32.totalorder %s18, 1
    %p167 = scmp.ne.s32.totalorder %s162, %s164
    %p168 = scmp.eq.s32.totalorder %s18, 0
    %p169 = por %p167, %p168
    %p170 = scmp.ne.s32.totalorder %s162, %s164
    %p171 = scmp.eq.s32.totalorder %s23, 1
    %p172 = por %p170, %p171
    %p173 = scmp.ne.s32.totalorder %s164, %s165
    %p174 = scmp.eq.s32.totalorder %s23, 0
    %p175 = por %p173, %p174
    %p176 = scmp.ne.s32.totalorder %s164, %s165
    %p177 = scmp.eq.s32.totalorder %s24, 1
    %p178 = por %p176, %p177
    %p180 = scmp.ne.s32.totalorder %s165, %s179
    %p181 = scmp.eq.s32.totalorder %s24, 0
    %p182 = por %p180, %p181
    %s184 = sadd.s32 %s183, 1
    %p187 = scmp.eq.s32.totalorder %s18, 1
    %p188 = scmp.ne.s32.totalorder %s183, %s185
    %p189 = scmp.eq.s32.totalorder %s18, 0
    %p190 = por %p188, %p189
    %p191 = scmp.ne.s32.totalorder %s183, %s185
    %p192 = scmp.eq.s32.totalorder %s23, 1
    %p193 = por %p191, %p192
    %p194 = scmp.ne.s32.totalorder %s185, %s186
    %p195 = scmp.eq.s32.totalorder %s23, 0
    %p196 = por %p194, %p195
    %p197 = scmp.ne.s32.totalorder %s185, %s186
    %p198 = scmp.eq.s32.totalorder %s24, 1
    %p199 = por %p197, %p198
    %p201 = scmp.ne.s32.totalorder %s186, %s200
    %p202 = scmp.eq.s32.totalorder %s24, 0
    %p203 = por %p201, %p202
    %s205 = sadd.s32 %s204, 1
    %p208 = scmp.eq.s32.totalorder %s18, 1
    %p209 = scmp.ne.s32.totalorder %s204, %s206
    %p210 = scmp.eq.s32.totalorder %s18, 0
    %p211 = por %p209, %p210
    %p212 = scmp.ne.s32.totalorder %s204, %s206
    %p213 = scmp.eq.s32.totalorder %s23, 1
    %p214 = por %p212, %p213
    %p215 = scmp.ne.s32.totalorder %s206, %s207
    %p216 = scmp.eq.s32.totalorder %s23, 0
    %p217 = por %p215, %p216
    %p218 = scmp.ne.s32.totalorder %s206, %s207
    %p219 = scmp.eq.s32.totalorder %s24, 1
    %p220 = por %p218, %p219
    %p222 = scmp.ne.s32.totalorder %s207, %s221
    %p223 = scmp.eq.s32.totalorder %s24, 0
    %p224 = por %p222, %p223
    %s226 = sadd.s32 %s225, 1
    %p229 = scmp.eq.s32.totalorder %s18, 1
    %p230 = scmp.ne.s32.totalorder %s225, %s227
    %p231 = scmp.eq.s32.totalorder %s18, 0
    %p232 = por %p230, %p231
    %p233 = scmp.ne.s32.totalorder %s225, %s227
    %p234 = scmp.eq.s32.totalorder %s23, 1
    %p235 = por %p233, %p234
    %p236 = scmp.ne.s32.totalorder %s227, %s228
    %p237 = scmp.eq.s32.totalorder %s23, 0
    %p238 = por %p236, %p237
    %p239 = scmp.ne.s32.totalorder %s227, %s228
    %p240 = scmp.eq.s32.totalorder %s24, 1
    %p241 = por %p239, %p240
    %p243 = scmp.ne.s32.totalorder %s228, %s242
    %p244 = scmp.eq.s32.totalorder %s24, 0
    %p245 = por %p243, %p244
    %s247 = sadd.s32 %s246, 1
    %p250 = scmp.eq.s32.totalorder %s18, 1
    %p251 = scmp.ne.s32.totalorder %s246, %s248
    %p252 = scmp.eq.s32.totalorder %s18, 0
    %p253 = por %p251, %p252
    %p254 = scmp.ne.s32.totalorder %s246, %s248
    %p255 = scmp.eq.s32.totalorder %s23, 1
    %p256 = por %p254, %p255
    %p257 = scmp.ne.s32.totalorder %s248, %s249
    %p258 = scmp.eq.s32.totalorder %s23, 0
    %p259 = por %p257, %p258
    %p260 = scmp.ne.s32.totalorder %s248, %s249
    %p261 = scmp.eq.s32.totalorder %s24, 1
    %p262 = por %p260, %p261
    %p264 = scmp.ne.s32.totalorder %s249, %s263
    %p265 = scmp.eq.s32.totalorder %s24, 0
    %p266 = por %p264, %p265
    %s268 = sadd.s32 %s267, 1
    %p271 = scmp.eq.s32.totalorder %s18, 1
    %p272 = scmp.ne.s32.totalorder %s267, %s269
    %p273 = scmp.eq.s32.totalorder %s18, 0
    %p274 = por %p272, %p273
    %p275 = scmp.ne.s32.totalorder %s267, %s269
    %p276 = scmp.eq.s32.totalorder %s23, 1
    %p277 = por %p275, %p276
    %p278 = scmp.ne.s32.totalorder %s269, %s270
    %p279 = scmp.eq.s32.totalorder %s23, 0
    %p280 = por %p278, %p279
    %p281 = scmp.ne.s32.totalorder %s269, %s270
    %p282 = scmp.eq.s32.totalorder %s24, 1
    %p283 = por %p281, %p282
    %p285 = scmp.ne.s32.totalorder %s270, %s284
    %p286 = scmp.eq.s32.totalorder %s24, 0
    %p287 = por %p285, %p286
    %s288 = ssub.s32 %s18, %s25
    %p289 = scmp.eq.s32.totalorder %s288, 0
    %s291 = sadd.s32 %s290, 1
    %s292 = scalar_select %p289, %s290, %s291
    %p295 = pneg %p289
    %p296 = scmp.eq.s32.totalorder %s18, 1
    %p297 = por %p295, %p296
    %p298 = scmp.ne.s32.totalorder %s290, %s293
    %p299 = scmp.eq.s32.totalorder %s18, 0
    %p300 = por %p298, %p299
    %p301 = scmp.ne.s32.totalorder %s290, %s293
    %p302 = scmp.eq.s32.totalorder %s23, 1
    %p303 = por %p301, %p302
    %p304 = scmp.ne.s32.totalorder %s293, %s294
    %p305 = scmp.eq.s32.totalorder %s23, 0
    %p306 = por %p304, %p305
    %p307 = scmp.ne.s32.totalorder %s293, %s294
    %p308 = scmp.eq.s32.totalorder %s24, 1
    %p309 = por %p307, %p308
    %p311 = scmp.ne.s32.totalorder %s294, %s310
    %p312 = scmp.eq.s32.totalorder %s24, 0
    %p313 = por %p311, %p312
    %p314 = scmp.le.s32.totalorder 1, %s18
    %p315 = scmp.lt.s32.totalorder %s18, 3
    %p316 = pnand %p314, %p315
    %p317 = pneg %p316
    // Predicated region
    $region9: #{pixel_snail_forward.8} parent=5 // pred_check
      _
    $region10: #{pixel_snail_forward.8} parent=5 // pred_check_branch
      %319 = sbr.rel (%p316) target = $region12
    $region11: #{pixel_snail_forward.8} parent=5 // pred_region
      %s320 = ssub.s32 %s18, 1
      // Predicated region
      $region13: #{pixel_snail_forward.8} parent=11 // pred_check
        %p321 = pneg %p91
      $region14: #{pixel_snail_forward.8} parent=11 // pred_check_branch
        %323 = sbr.rel (%p321) target = $region16
      $region15: #{pixel_snail_forward.8} parent=11 // pred_region
        _
      $region16: #{pixel_snail_forward.8} parent=11 // pred_fallthru
        _
      // Predicated region
      $region17: #{pixel_snail_forward.8} parent=11 // pred_check
        %p324 = pneg %p112
      $region18: #{pixel_snail_forward.8} parent=11 // pred_check_branch
        %326 = sbr.rel (%p324) target = $region20
      $region19: #{pixel_snail_forward.8} parent=11 // pred_region
        _
      $region20: #{pixel_snail_forward.8} parent=11 // pred_fallthru
        _
      // Predicated region
      $region21: #{pixel_snail_forward.8} parent=11 // pred_check
        %p327 = pneg %p133
      $region22: #{pixel_snail_forward.8} parent=11 // pred_check_branch
        %329 = sbr.rel (%p327) target = $region24
      $region23: #{pixel_snail_forward.8} parent=11 // pred_region
        _
      $region24: #{pixel_snail_forward.8} parent=11 // pred_fallthru
        _
      // Predicated region
      $region25: #{pixel_snail_forward.8} parent=11 // pred_check
        %p330 = pneg %p154
      $region26: #{pixel_snail_forward.8} parent=11 // pred_check_branch
        %332 = sbr.rel (%p330) target = $region28
      $region27: #{pixel_snail_forward.8} parent=11 // pred_region
        _
      $region28: #{pixel_snail_forward.8} parent=11 // pred_fallthru
        _
      // Predicated region
      $region29: #{pixel_snail_forward.8} parent=11 // pred_check
        %p333 = pneg %p175
      $region30: #{pixel_snail_forward.8} parent=11 // pred_check_branch
        %335 = sbr.rel (%p333) target = $region32
      $region31: #{pixel_snail_forward.8} parent=11 // pred_region
        _
      $region32: #{pixel_snail_forward.8} parent=11 // pred_fallthru
        _
      // Predicated region
      $region33: #{pixel_snail_forward.8} parent=11 // pred_check
        %p336 = pneg %p196
      $region34: #{pixel_snail_forward.8} parent=11 // pred_check_branch
        %338 = sbr.rel (%p336) target = $region36
      $region35: #{pixel_snail_forward.8} parent=11 // pred_region
        _
      $region36: #{pixel_snail_forward.8} parent=11 // pred_fallthru
        _
      // Predicated region
      $region37: #{pixel_snail_forward.8} parent=11 // pred_check
        %p339 = pneg %p217
      $region38: #{pixel_snail_forward.8} parent=11 // pred_check_branch
        %341 = sbr.rel (%p339) target = $region40
      $region39: #{pixel_snail_forward.8} parent=11 // pred_region
        _
      $region40: #{pixel_snail_forward.8} parent=11 // pred_fallthru
        _
      // Predicated region
      $region41: #{pixel_snail_forward.8} parent=11 // pred_check
        %p342 = pneg %p238
      $region42: #{pixel_snail_forward.8} parent=11 // pred_check_branch
        %344 = sbr.rel (%p342) target = $region44
      $region43: #{pixel_snail_forward.8} parent=11 // pred_region
        _
      $region44: #{pixel_snail_forward.8} parent=11 // pred_fallthru
        _
      // Predicated region
      $region45: #{pixel_snail_forward.8} parent=11 // pred_check
        %p345 = pneg %p259
      $region46: #{pixel_snail_forward.8} parent=11 // pred_check_branch
        %347 = sbr.rel (%p345) target = $region48
      $region47: #{pixel_snail_forward.8} parent=11 // pred_region
        _
      $region48: #{pixel_snail_forward.8} parent=11 // pred_fallthru
        _
      // Predicated region
      $region49: #{pixel_snail_forward.8} parent=11 // pred_check
        %p348 = pneg %p280
      $region50: #{pixel_snail_forward.8} parent=11 // pred_check_branch
        %350 = sbr.rel (%p348) target = $region52
      $region51: #{pixel_snail_forward.8} parent=11 // pred_region
        _
      $region52: #{pixel_snail_forward.8} parent=11 // pred_fallthru
        _
    $region12: #{pixel_snail_forward.8} parent=5 // pred_fallthru
      _
    %p351 = scmp.lt.s32.totalorder %s18, 2
    // Predicated region
    $region53: #{pixel_snail_forward.8} parent=5 // pred_check
      %p352 = pneg %p351
    $region54: #{pixel_snail_forward.8} parent=5 // pred_check_branch
      %354 = sbr.rel (%p352) target = $region56
    $region55: #{pixel_snail_forward.8} parent=5 // pred_region
      // Predicated region
      $region57: #{pixel_snail_forward.8} parent=55 // pred_check
        %p355 = pneg %p38
      $region58: #{pixel_snail_forward.8} parent=55 // pred_check_branch
        %357 = sbr.rel (%p355) target = $region60
      $region59: #{pixel_snail_forward.8} parent=55 // pred_region
        %p358 = scmp.lt.s32.totalorder %s18, 1
        %s359 = scalar_select %p358, %s18, 1
        %s360 = smul.addr %s359, 8
        %s361 = smul.addr %s360, 8
        %s362 = scalar_lea.vmem %s0, %s361
      $region60: #{pixel_snail_forward.8} parent=55 // pred_fallthru
        _
      // Predicated region
      $region61: #{pixel_snail_forward.8} parent=55 // pred_check
        %p363 = pneg %p64
      $region62: #{pixel_snail_forward.8} parent=55 // pred_check_branch
        %365 = sbr.rel (%p363) target = $region64
      $region63: #{pixel_snail_forward.8} parent=55 // pred_region
        %p366 = scmp.lt.s32.totalorder %s18, 1
        %s367 = scalar_select %p366, %s18, 1
        %s368 = smul.addr %s367, 8
        %s369 = smul.addr %s368, 8
        %s370 = scalar_lea.vmem %s1, %s369
      $region64: #{pixel_snail_forward.8} parent=55 // pred_fallthru
        _
    $region56: #{pixel_snail_forward.8} parent=5 // pred_fallthru
      _
    %p371 = scmp.le.s32.totalorder 1, %s18
    %p372 = scmp.lt.s32.totalorder %s18, 3
    %p373 = pnand %p371, %p372
    %p374 = pneg %p373
    // Predicated region
    $region65: #{pixel_snail_forward.8} parent=5 // pred_check
      _
    $region66: #{pixel_snail_forward.8} parent=5 // pred_check_branch
      %376 = sbr.rel (%p373) target = $region68
    $region67: #{pixel_snail_forward.8} parent=5 // pred_region
      %s377 = ssub.s32 %s18, 1
      %p378 = scmp.lt.s32.totalorder %s23, 1
      %s379 = scalar_select %p378, %s23, 1
      %s380 = smul.addr %s379, 8
      %s381 = smul.addr %s380, 8
      %s382 = scalar_lea.vmem %s0, %s381
      %p383 = pneg %p44
      %p384 = pneg %p41
      %p385 = scmp.lt.s32.totalorder %s23, 1
      %s386 = scalar_select %p385, %s23, 1
      %s387 = smul.addr %s386, 8
      %s388 = smul.addr %s387, 8
      %s389 = scalar_lea.vmem %s1, %s388
      %p390 = pneg %p70
      %p391 = pneg %p67
      %p392 = pneg %p91
      %p393 = pneg %p88
      %p394 = pneg %p112
      %p395 = pneg %p109
      %p396 = pneg %p133
      %p397 = pneg %p130
      %p398 = pneg %p154
      %p399 = pneg %p151
      %p400 = pneg %p175
      %p401 = pneg %p172
      %p402 = pneg %p196
      %p403 = pneg %p193
      %p404 = pneg %p217
      %p405 = pneg %p214
      %p406 = pneg %p238
      %p407 = pneg %p235
      %p408 = pneg %p259
      %p409 = pneg %p256
      %p410 = pneg %p280
      %p411 = pneg %p277
      %p412 = pneg %p306
      %p413 = pneg %p303
      %p414 = scmp.lt.s32.totalorder %s23, 1
      %s415 = scalar_select %p414, %s23, 1
      %s416 = smul.addr %s415, 8
      %s417 = smul.addr %s416, 8
      %s418 = scalar_lea.vmem %s12, %s417
      %p419 = scmp.lt.s32.totalorder %s23, 1
      %s420 = scalar_select %p419, %s23, 1
      %s421 = smul.addr %s420, 8
      %s422 = smul.addr %s421, 8
      %s423 = scalar_lea.vmem %s0, %s422
      %p424 = scmp.lt.s32.totalorder %s23, 1
      %s425 = scalar_select %p424, %s23, 1
      %s426 = smul.addr %s425, 8
      %s427 = smul.addr %s426, 8
      %s428 = scalar_lea.vmem %s1, %s427
      %p429 = scmp.lt.s32.totalorder %s23, 1
      %s430 = scalar_select %p429, %s23, 1
      %s431 = smul.addr %s430, 8
      %s432 = smul.addr %s431, 8
      %s433 = scalar_lea.vmem %s12, %s432
      %v435 = vld [vmem:[%s423] sm:$0xff]
      %v436 = vld [vmem:[%s423 + $0x8] sm:$0xff]
      %v437 = vld [vmem:[%s423 + $0x10] sm:$0xff]
      %v438 = vld [vmem:[%s423 + $0x18] sm:$0xff]
      %v439 = vld [vmem:[%s423 + $0x20] sm:$0xff]
      %v440 = vld [vmem:[%s423 + $0x28] sm:$0xff]
      %v441 = vld [vmem:[%s423 + $0x30] sm:$0xff]
      %v442 = vld [vmem:[%s423 + $0x38] sm:$0xff]
      %v443 = vld [vmem:[%s3] sm:$0xf]
      %v444 = vld [vmem:[%s3 + $0x4] sm:$0xf]
      %v445 = vld [vmem:[%s3 + $0x8] sm:$0xf]
      %v446 = vld [vmem:[%s3 + $0xc] sm:$0xf]
      %v447 = vpack.c.bf16 %v436, %v435
      %v448 = vpack.c.bf16 %v438, %v437
      %v449 = vpack.c.bf16 %v440, %v439
      %v450 = vpack.c.bf16 %v442, %v441
      %v451 = vld [vmem:[%s2] sm:$0xff]
      %v452 = vld [vmem:[%s2 + $0x8] sm:$0xff]
      %v453 = vld [vmem:[%s2 + $0x10] sm:$0xff]
      %v454 = vld [vmem:[%s2 + $0x18] sm:$0xff]
      %v455 = vld [vmem:[%s2 + $0x20] sm:$0xff]
      %v456 = vld [vmem:[%s2 + $0x28] sm:$0xff]
      %v457 = vld [vmem:[%s2 + $0x30] sm:$0xff]
      %v458 = vld [vmem:[%s2 + $0x38] sm:$0xff]
      %v463 = vunpack.c.l.b16 %v443
      %v464 = vunpack.c.l.b16 %v444
      %v465 = vunpack.c.l.b16 %v445
      %v466 = vunpack.c.l.b16 %v446
      %v467 = vpack.c.b16 %v464, %v463
      %v468 = vpack.c.b16 %v466, %v465
      %vm471 = vcmask 261120
      %v473 = vsel %vm471, %v447, 0
      %v476 = vsel %vm471, %v448, 0
      %v479 = vsel %vm471, %v449, 0
      %v482 = vsel %vm471, %v450, 0
      %484 = vmatpush.bf16.msra.mxu0 0
      %485 = vmatpush.bf16.msra.mxu0 0
      %486 = vmatpush.bf16.msra.mxu0 0
      %487 = vmatpush.bf16.msra.mxu0 0
      %488 = vmatpush.bf16.msra.mxu0 0
      %489 = vmatpush.bf16.msra.mxu0 0
      %490 = vmatpush.bf16.msra.mxu0 %v468
      %491 = vmatpush.bf16.msra.mxu0 %v467
      %492 = vmatmul.bf16.gmra.mxu0 %v473
      %v493 = vpop.f32.mrf.mxu0
      %v494 = vadd.f32 %v451, %v493
      %v495 = vpop.f32.mrf.mxu0
      %v496 = vadd.f32 %v452, %v495
      %497 = vmatmul.bf16.gmra.mxu0 %v476
      %v498 = vpop.f32.mrf.mxu0
      %v499 = vadd.f32 %v453, %v498
      %v500 = vpop.f32.mrf.mxu0
      %v501 = vadd.f32 %v454, %v500
      %502 = vmatmul.bf16.gmra.mxu0 %v479
      %v503 = vpop.f32.mrf.mxu0
      %v504 = vadd.f32 %v455, %v503
      %v505 = vpop.f32.mrf.mxu0
      %v506 = vadd.f32 %v456, %v505
      %507 = vmatmul.bf16.gmra.mxu0 %v482
      %v508 = vpop.f32.mrf.mxu0
      %v509 = vadd.f32 %v457, %v508
      %v510 = vpop.f32.mrf.mxu0
      %v511 = vadd.f32 %v458, %v510
      %512 = vdwg.mxu0
      %v513 = vlaneseq
      %v514 = vshrl.u32 %v513, 7
      %v515 = vadd.s32 %v514, 8
      %v516 = vadd.s32 %v514, 16
      %v517 = vadd.s32 %v514, 24
      %v518 = vadd.s32 %v514, 32
      %v519 = vadd.s32 %v514, 40
      %v520 = vadd.s32 %v514, 48
      %v521 = vadd.s32 %v514, 56
      %v522 = vlaneseq
      %v523 = vand.u32 %v522, 127
      %vm524 = vcmp.le.s32.totalorder %v523, %v514
      %vm525 = vcmp.le.s32.totalorder %v523, %v515
      %vm526 = vcmp.le.s32.totalorder %v523, %v516
      %vm527 = vcmp.le.s32.totalorder %v523, %v517
      %vm528 = vcmp.le.s32.totalorder %v523, %v518
      %vm529 = vcmp.le.s32.totalorder %v523, %v519
      %vm530 = vcmp.le.s32.totalorder %v523, %v520
      %vm531 = vcmp.le.s32.totalorder %v523, %v521
      %v532 = vsel %vm524, 0.0, -1e+30
      %v533 = vsel %vm525, 0.0, -1e+30
      %v534 = vsel %vm526, 0.0, -1e+30
      %v535 = vsel %vm527, 0.0, -1e+30
      %v536 = vsel %vm528, 0.0, -1e+30
      %v537 = vsel %vm529, 0.0, -1e+30
      %v538 = vsel %vm530, 0.0, -1e+30
      %v539 = vsel %vm531, 0.0, -1e+30
      %v540 = vpack.c.bf16 %v496, %v494
      %v541 = vpack.c.bf16 %v501, %v499
      %v542 = vpack.c.bf16 %v506, %v504
      %v543 = vpack.c.bf16 %v511, %v509
      %548 = vrot.lane.b32.xlu0 %v540, 112
      %v549 = vpop.permute.xlu0 %548
      %550 = vrot.lane.b32.xlu0 %v541, 112
      %v551 = vpop.permute.xlu0 %550
      %552 = vrot.lane.b32.xlu0 %v542, 112
      %v553 = vpop.permute.xlu0 %552
      %554 = vrot.lane.b32.xlu0 %v543, 112
      %v555 = vpop.permute.xlu0 %554
      %vm556 = vcmask 64512
      %v558 = vsel %vm556, %v540, 0
      %v561 = vsel %vm556, %v541, 0
      %v564 = vsel %vm556, %v542, 0
      %v567 = vsel %vm556, %v543, 0
      %v570 = vsel %vm556, %v549, 0
      %v573 = vsel %vm556, %v551, 0
      %v576 = vsel %vm556, %v553, 0
      %v579 = vsel %vm556, %v555, 0
      %581 = vmatpush.bf16.xpose.msra.mxu0 0
      %582 = vmatpush.bf16.xpose.msra.mxu0 0
      %583 = vmatpush.bf16.xpose.msra.mxu0 0
      %584 = vmatpush.bf16.xpose.msra.mxu0 0
      %585 = vmatpush.bf16.xpose.msra.mxu0 %v579
      %586 = vmatpush.bf16.xpose.msra.mxu0 %v576
      %587 = vmatpush.bf16.xpose.msra.mxu0 %v573
      %588 = vmatpush.bf16.xpose.msra.mxu0 %v570
      %589 = vmatmul.bf16.gmra.mxu0 %v558
      %v590 = vpop.f32.mrf.mxu0
      %v591 = vadd.f32 %v532, %v590
      %v592 = vpop.f32.mrf.mxu0
      %v593 = vadd.f32 %v533, %v592
      %594 = vmatmul.bf16.gmra.mxu0 %v561
      %v595 = vpop.f32.mrf.mxu0
      %v596 = vadd.f32 %v534, %v595
      %v597 = vpop.f32.mrf.mxu0
      %v598 = vadd.f32 %v535, %v597
      %599 = vmatmul.bf16.gmra.mxu0 %v564
      %v600 = vpop.f32.mrf.mxu0
      %v601 = vadd.f32 %v536, %v600
      %v602 = vpop.f32.mrf.mxu0
      %v603 = vadd.f32 %v537, %v602
      %604 = vmatmul.bf16.gmra.mxu0 %v567
      %v605 = vpop.f32.mrf.mxu0
      %v606 = vadd.f32 %v538, %v605
      %v607 = vpop.f32.mrf.mxu0
      %v608 = vadd.f32 %v539, %v607
      %609 = vdwg.mxu0
      %vm610 = vcmask 523264
      %v611 = vsel %vm610, %v591, -inf
      %612 = vmax.xlane.f32.xlu0 %v611
      %v613 = vpop.xlane.xlu0 %612
      %v614 = vsel %vm610, %v593, -inf
      %615 = vmax.xlane.f32.xlu0 %v614
      %v616 = vpop.xlane.xlu0 %615
      %v617 = vsel %vm610, %v596, -inf
      %618 = vmax.xlane.f32.xlu0 %v617
      %v619 = vpop.xlane.xlu0 %618
      %v620 = vsel %vm610, %v598, -inf
      %621 = vmax.xlane.f32.xlu0 %v620
      %v622 = vpop.xlane.xlu0 %621
      %v623 = vsel %vm610, %v601, -inf
      %624 = vmax.xlane.f32.xlu0 %v623
      %v625 = vpop.xlane.xlu0 %624
      %v626 = vsel %vm610, %v603, -inf
      %627 = vmax.xlane.f32.xlu0 %v626
      %v628 = vpop.xlane.xlu0 %627
      %v629 = vsel %vm610, %v606, -inf
      %630 = vmax.xlane.f32.xlu0 %v629
      %v631 = vpop.xlane.xlu0 %630
      %v632 = vsel %vm610, %v608, -inf
      %633 = vmax.xlane.f32.xlu0 %v632
      %v634 = vpop.xlane.xlu0 %633
      %v635 = vsub.f32 %v591, %v613
      %v636 = vsub.f32 %v593, %v616
      %v637 = vsub.f32 %v596, %v619
      %v638 = vsub.f32 %v598, %v622
      %v639 = vsub.f32 %v601, %v625
      %v640 = vsub.f32 %v603, %v628
      %v641 = vsub.f32 %v606, %v631
      %v642 = vsub.f32 %v608, %v634
      %v643 = vmul.f32 %v635, 1.442695
      %v644 = vpow.pop %v643
      %v645 = vmul.f32 %v636, 1.442695
      %v646 = vpow.pop %v645
      %v647 = vmul.f32 %v637, 1.442695
      %v648 = vpow.pop %v647
      %v649 = vmul.f32 %v638, 1.442695
      %v650 = vpow.pop %v649
      %v651 = vmul.f32 %v639, 1.442695
      %v652 = vpow.pop %v651
      %v653 = vmul.f32 %v640, 1.442695
      %v654 = vpow.pop %v653
      %v655 = vmul.f32 %v641, 1.442695
      %v656 = vpow.pop %v655
      %v657 = vmul.f32 %v642, 1.442695
      %v658 = vpow.pop %v657
      %v659 = vsel %vm610, %v644, 0.0
      %660 = vadd.xlane.f32.xlu0 %v659
      %v661 = vpop.xlane.xlu0 %660
      %v662 = vsel %vm610, %v646, 0.0
      %663 = vadd.xlane.f32.xlu0 %v662
      %v664 = vpop.xlane.xlu0 %663
      %v665 = vsel %vm610, %v648, 0.0
      %666 = vadd.xlane.f32.xlu0 %v665
      %v667 = vpop.xlane.xlu0 %666
      %v668 = vsel %vm610, %v650, 0.0
      %669 = vadd.xlane.f32.xlu0 %v668
      %v670 = vpop.xlane.xlu0 %669
      %v671 = vsel %vm610, %v652, 0.0
      %672 = vadd.xlane.f32.xlu0 %v671
      %v673 = vpop.xlane.xlu0 %672
      %v674 = vsel %vm610, %v654, 0.0
      %675 = vadd.xlane.f32.xlu0 %v674
      %v676 = vpop.xlane.xlu0 %675
      %v677 = vsel %vm610, %v656, 0.0
      %678 = vadd.xlane.f32.xlu0 %v677
      %v679 = vpop.xlane.xlu0 %678
      %v680 = vsel %vm610, %v658, 0.0
      %681 = vadd.xlane.f32.xlu0 %v680
      %v682 = vpop.xlane.xlu0 %681
      %v683 = vrcp.pop %v661
      %v684 = vrcp.pop %v664
      %v685 = vrcp.pop %v667
      %v686 = vrcp.pop %v670
      %v687 = vrcp.pop %v673
      %v688 = vrcp.pop %v676
      %v689 = vrcp.pop %v679
      %v690 = vrcp.pop %v682
      %v691 = vmul.f32 %v644, %v683
      %v692 = vmul.f32 %v646, %v684
      %v693 = vmul.f32 %v648, %v685
      %v694 = vmul.f32 %v650, %v686
      %v695 = vmul.f32 %v652, %v687
      %v696 = vmul.f32 %v654, %v688
      %v697 = vmul.f32 %v656, %v689
      %v698 = vmul.f32 %v658, %v690
      %v699 = vpack.c.bf16 %v692, %v691
      %v700 = vpack.c.bf16 %v694, %v693
      %v701 = vpack.c.bf16 %v696, %v695
      %v702 = vpack.c.bf16 %v698, %v697
      %703 = vrot.lane.b32.xlu0 %v540, 96
      %v704 = vpop.permute.xlu0 %703
      %705 = vrot.lane.b32.xlu0 %v541, 96
      %v706 = vpop.permute.xlu0 %705
      %707 = vrot.lane.b32.xlu0 %v542, 96
      %v708 = vpop.permute.xlu0 %707
      %709 = vrot.lane.b32.xlu0 %v543, 96
      %v710 = vpop.permute.xlu0 %709
      %v716 = vsel %vm610, %v699, 0
      %v719 = vsel %vm610, %v700, 0
      %v722 = vsel %vm610, %v701, 0
      %v725 = vsel %vm610, %v702, 0
      %727 = vmatpush.bf16.msra.mxu0 0
      %728 = vmatpush.bf16.msra.mxu0 0
      %729 = vmatpush.bf16.msra.mxu0 0
      %730 = vmatpush.bf16.msra.mxu0 0
      %731 = vmatpush.bf16.msra.mxu0 %v710
      %732 = vmatpush.bf16.msra.mxu0 %v708
      %733 = vmatpush.bf16.msra.mxu0 %v706
      %734 = vmatpush.bf16.msra.mxu0 %v704
      %735 = vmatmul.bf16.gmra.mxu0 %v716
      %v736 = vpop.f32.mrf.mxu0
      %v737 = vadd.f32 0.0, %v736
      %v738 = vpop.f32.mrf.mxu0
      %v739 = vadd.f32 0.0, %v738
      %740 = vmatmul.bf16.gmra.mxu0 %v719
      %v741 = vpop.f32.mrf.mxu0
      %v742 = vadd.f32 0.0, %v741
      %v743 = vpop.f32.mrf.mxu0
      %v744 = vadd.f32 0.0, %v743
      %745 = vmatmul.bf16.gmra.mxu0 %v722
      %v746 = vpop.f32.mrf.mxu0
      %v747 = vadd.f32 0.0, %v746
      %v748 = vpop.f32.mrf.mxu0
      %v749 = vadd.f32 0.0, %v748
      %750 = vmatmul.bf16.gmra.mxu0 %v725
      %v751 = vpop.f32.mrf.mxu0
      %v752 = vadd.f32 0.0, %v751
      %v753 = vpop.f32.mrf.mxu0
      %v754 = vadd.f32 0.0, %v753
      %755 = vdwg.mxu0
      %756 = vrot.lane.b32.xlu0 %v540, 120
      %v757 = vpop.permute.xlu0 %756
      %758 = vrot.lane.b32.xlu0 %v541, 120
      %v759 = vpop.permute.xlu0 %758
      %760 = vrot.lane.b32.xlu0 %v542, 120
      %v761 = vpop.permute.xlu0 %760
      %762 = vrot.lane.b32.xlu0 %v543, 120
      %v763 = vpop.permute.xlu0 %762
      %764 = vrot.lane.b32.xlu0 %v540, 104
      %v765 = vpop.permute.xlu0 %764
      %766 = vrot.lane.b32.xlu0 %v541, 104
      %v767 = vpop.permute.xlu0 %766
      %768 = vrot.lane.b32.xlu0 %v542, 104
      %v769 = vpop.permute.xlu0 %768
      %770 = vrot.lane.b32.xlu0 %v543, 104
      %v771 = vpop.permute.xlu0 %770
      %v773 = vsel %vm556, %v757, 0
      %v776 = vsel %vm556, %v759, 0
      %v779 = vsel %vm556, %v761, 0
      %v782 = vsel %vm556, %v763, 0
      %v785 = vsel %vm556, %v765, 0
      %v788 = vsel %vm556, %v767, 0
      %v791 = vsel %vm556, %v769, 0
      %v794 = vsel %vm556, %v771, 0
      %796 = vmatpush.bf16.xpose.msra.mxu0 0
      %797 = vmatpush.bf16.xpose.msra.mxu0 0
      %798 = vmatpush.bf16.xpose.msra.mxu0 0
      %799 = vmatpush.bf16.xpose.msra.mxu0 0
      %800 = vmatpush.bf16.xpose.msra.mxu0 %v794
      %801 = vmatpush.bf16.xpose.msra.mxu0 %v791
      %802 = vmatpush.bf16.xpose.msra.mxu0 %v788
      %803 = vmatpush.bf16.xpose.msra.mxu0 %v785
      %804 = vmatmul.bf16.gmra.mxu0 %v773
      %v805 = vpop.f32.mrf.mxu0
      %v806 = vadd.f32 %v532, %v805
      %v807 = vpop.f32.mrf.mxu0
      %v808 = vadd.f32 %v533, %v807
      %809 = vmatmul.bf16.gmra.mxu0 %v776
      %v810 = vpop.f32.mrf.mxu0
      %v811 = vadd.f32 %v534, %v810
      %v812 = vpop.f32.mrf.mxu0
      %v813 = vadd.f32 %v535, %v812
      %814 = vmatmul.bf16.gmra.mxu0 %v779
      %v815 = vpop.f32.mrf.mxu0
      %v816 = vadd.f32 %v536, %v815
      %v817 = vpop.f32.mrf.mxu0
      %v818 = vadd.f32 %v537, %v817
      %819 = vmatmul.bf16.gmra.mxu0 %v782
      %v820 = vpop.f32.mrf.mxu0
      %v821 = vadd.f32 %v538, %v820
      %v822 = vpop.f32.mrf.mxu0
      %v823 = vadd.f32 %v539, %v822
      %824 = vdwg.mxu0
      %v825 = vsel %vm610, %v806, -inf
      %826 = vmax.xlane.f32.xlu0 %v825
      %v827 = vpop.xlane.xlu0 %826
      %v828 = vsel %vm610, %v808, -inf
      %829 = vmax.xlane.f32.xlu0 %v828
      %v830 = vpop.xlane.xlu0 %829
      %v831 = vsel %vm610, %v811, -inf
      %832 = vmax.xlane.f32.xlu0 %v831
      %v833 = vpop.xlane.xlu0 %832
      %v834 = vsel %vm610, %v813, -inf
      %835 = vmax.xlane.f32.xlu0 %v834
      %v836 = vpop.xlane.xlu0 %835
      %v837 = vsel %vm610, %v816, -inf
      %838 = vmax.xlane.f32.xlu0 %v837
      %v839 = vpop.xlane.xlu0 %838
      %v840 = vsel %vm610, %v818, -inf
      %841 = vmax.xlane.f32.xlu0 %v840
      %v842 = vpop.xlane.xlu0 %841
      %v843 = vsel %vm610, %v821, -inf
      %844 = vmax.xlane.f32.xlu0 %v843
      %v845 = vpop.xlane.xlu0 %844
      %v846 = vsel %vm610, %v823, -inf
      %847 = vmax.xlane.f32.xlu0 %v846
      %v848 = vpop.xlane.xlu0 %847
      %v849 = vsub.f32 %v806, %v827
      %v850 = vsub.f32 %v808, %v830
      %v851 = vsub.f32 %v811, %v833
      %v852 = vsub.f32 %v813, %v836
      %v853 = vsub.f32 %v816, %v839
      %v854 = vsub.f32 %v818, %v842
      %v855 = vsub.f32 %v821, %v845
      %v856 = vsub.f32 %v823, %v848
      %v857 = vmul.f32 %v849, 1.442695
      %v858 = vpow.pop %v857
      %v859 = vmul.f32 %v850, 1.442695
      %v860 = vpow.pop %v859
      %v861 = vmul.f32 %v851, 1.442695
      %v862 = vpow.pop %v861
      %v863 = vmul.f32 %v852, 1.442695
      %v864 = vpow.pop %v863
      %v865 = vmul.f32 %v853, 1.442695
      %v866 = vpow.pop %v865
      %v867 = vmul.f32 %v854, 1.442695
      %v868 = vpow.pop %v867
      %v869 = vmul.f32 %v855, 1.442695
      %v870 = vpow.pop %v869
      %v871 = vmul.f32 %v856, 1.442695
      %v872 = vpow.pop %v871
      %v873 = vsel %vm610, %v858, 0.0
      %874 = vadd.xlane.f32.xlu0 %v873
      %v875 = vpop.xlane.xlu0 %874
      %v876 = vsel %vm610, %v860, 0.0
      %877 = vadd.xlane.f32.xlu0 %v876
      %v878 = vpop.xlane.xlu0 %877
      %v879 = vsel %vm610, %v862, 0.0
      %880 = vadd.xlane.f32.xlu0 %v879
      %v881 = vpop.xlane.xlu0 %880
      %v882 = vsel %vm610, %v864, 0.0
      %883 = vadd.xlane.f32.xlu0 %v882
      %v884 = vpop.xlane.xlu0 %883
      %v885 = vsel %vm610, %v866, 0.0
      %886 = vadd.xlane.f32.xlu0 %v885
      %v887 = vpop.xlane.xlu0 %886
      %v888 = vsel %vm610, %v868, 0.0
      %889 = vadd.xlane.f32.xlu0 %v888
      %v890 = vpop.xlane.xlu0 %889
      %v891 = vsel %vm610, %v870, 0.0
      %892 = vadd.xlane.f32.xlu0 %v891
      %v893 = vpop.xlane.xlu0 %892
      %v894 = vsel %vm610, %v872, 0.0
      %895 = vadd.xlane.f32.xlu0 %v894
      %v896 = vpop.xlane.xlu0 %895
      %v897 = vrcp.pop %v875
      %v898 = vrcp.pop %v878
      %v899 = vrcp.pop %v881
      %v900 = vrcp.pop %v884
      %v901 = vrcp.pop %v887
      %v902 = vrcp.pop %v890
      %v903 = vrcp.pop %v893
      %v904 = vrcp.pop %v896
      %v905 = vmul.f32 %v858, %v897
      %v906 = vmul.f32 %v860, %v898
      %v907 = vmul.f32 %v862, %v899
      %v908 = vmul.f32 %v864, %v900
      %v909 = vmul.f32 %v866, %v901
      %v910 = vmul.f32 %v868, %v902
      %v911 = vmul.f32 %v870, %v903
      %v912 = vmul.f32 %v872, %v904
      %v913 = vpack.c.bf16 %v906, %v905
      %v914 = vpack.c.bf16 %v908, %v907
      %v915 = vpack.c.bf16 %v910, %v909
      %v916 = vpack.c.bf16 %v912, %v911
      %917 = vrot.lane.b32.xlu0 %v540, 80
      %v918 = vpop.permute.xlu0 %917
      %919 = vrot.lane.b32.xlu0 %v541, 80
      %v920 = vpop.permute.xlu0 %919
      %921 = vrot.lane.b32.xlu0 %v542, 80
      %v922 = vpop.permute.xlu0 %921
      %923 = vrot.lane.b32.xlu0 %v543, 80
      %v924 = vpop.permute.xlu0 %923
      %v930 = vsel %vm610, %v913, 0
      %v933 = vsel %vm610, %v914, 0
      %v936 = vsel %vm610, %v915, 0
      %v939 = vsel %vm610, %v916, 0
      %941 = vmatpush.bf16.msra.mxu0 0
      %942 = vmatpush.bf16.msra.mxu0 0
      %943 = vmatpush.bf16.msra.mxu0 0
      %944 = vmatpush.bf16.msra.mxu0 0
      %945 = vmatpush.bf16.msra.mxu0 %v924
      %946 = vmatpush.bf16.msra.mxu0 %v922
      %947 = vmatpush.bf16.msra.mxu0 %v920
      %948 = vmatpush.bf16.msra.mxu0 %v918
      %949 = vmatmul.bf16.gmra.mxu0 %v930
      %v950 = vpop.f32.mrf.mxu0
      %v951 = vadd.f32 0.0, %v950
      %v952 = vpop.f32.mrf.mxu0
      %v953 = vadd.f32 0.0, %v952
      %954 = vmatmul.bf16.gmra.mxu0 %v933
      %v955 = vpop.f32.mrf.mxu0
      %v956 = vadd.f32 0.0, %v955
      %v957 = vpop.f32.mrf.mxu0
      %v958 = vadd.f32 0.0, %v957
      %959 = vmatmul.bf16.gmra.mxu0 %v936
      %v960 = vpop.f32.mrf.mxu0
      %v961 = vadd.f32 0.0, %v960
      %v962 = vpop.f32.mrf.mxu0
      %v963 = vadd.f32 0.0, %v962
      %964 = vmatmul.bf16.gmra.mxu0 %v939
      %v965 = vpop.f32.mrf.mxu0
      %v966 = vadd.f32 0.0, %v965
      %v967 = vpop.f32.mrf.mxu0
      %v968 = vadd.f32 0.0, %v967
      %969 = vdwg.mxu0
      %978 = vrot.lane.b32.xlu0 %v951, 16
      %v979 = vpop.permute.xlu0 %978
      %980 = vrot.lane.b32.xlu0 %v953, 16
      %v981 = vpop.permute.xlu0 %980
      %982 = vrot.lane.b32.xlu0 %v956, 16
      %v983 = vpop.permute.xlu0 %982
      %984 = vrot.lane.b32.xlu0 %v958, 16
      %v985 = vpop.permute.xlu0 %984
      %986 = vrot.lane.b32.xlu0 %v961, 16
      %v987 = vpop.permute.xlu0 %986
      %988 = vrot.lane.b32.xlu0 %v963, 16
      %v989 = vpop.permute.xlu0 %988
      %990 = vrot.lane.b32.xlu0 %v966, 16
      %v991 = vpop.permute.xlu0 %990
      %992 = vrot.lane.b32.xlu0 %v968, 16
      %v993 = vpop.permute.xlu0 %992
      %vm1002 = vcmask 130048
      %v1003 = vsel %vm1002, %v737, %v979
      %v1004 = vsel %vm1002, %v739, %v981
      %v1005 = vsel %vm1002, %v742, %v983
      %v1006 = vsel %vm1002, %v744, %v985
      %v1007 = vsel %vm1002, %v747, %v987
      %v1008 = vsel %vm1002, %v749, %v989
      %v1009 = vsel %vm1002, %v752, %v991
      %v1010 = vsel %vm1002, %v754, %v993
      %v1011 = vld [vmem:[%s4] sm:$0xf]
      %v1012 = vld [vmem:[%s4 + $0x4] sm:$0xf]
      %v1013 = vld [vmem:[%s4 + $0x8] sm:$0xf]
      %v1014 = vld [vmem:[%s4 + $0xc] sm:$0xf]
      %v1015 = vpack.c.bf16 %v1004, %v1003
      %v1016 = vpack.c.bf16 %v1006, %v1005
      %v1017 = vpack.c.bf16 %v1008, %v1007
      %v1018 = vpack.c.bf16 %v1010, %v1009
      %v1019 = vld [vmem:[%s5] sm:$0x1]
      %v1021 = vperm.slane %v1019, 0
      %v1027 = vunpack.c.l.b16 %v1011
      %v1028 = vunpack.c.l.b16 %v1012
      %v1029 = vunpack.c.l.b16 %v1013
      %v1030 = vunpack.c.l.b16 %v1014
      %v1031 = vpack.c.b16 %v1028, %v1027
      %v1032 = vpack.c.b16 %v1030, %v1029
      %v1036 = vsel %vm471, %v1015, 0
      %v1039 = vsel %vm471, %v1016, 0
      %v1042 = vsel %vm471, %v1017, 0
      %v1045 = vsel %vm471, %v1018, 0
      %1047 = vmatpush.bf16.msra.mxu0 0
      %1048 = vmatpush.bf16.msra.mxu0 0
      %1049 = vmatpush.bf16.msra.mxu0 0
      %1050 = vmatpush.bf16.msra.mxu0 0
      %1051 = vmatpush.bf16.msra.mxu0 0
      %1052 = vmatpush.bf16.msra.mxu0 0
      %1053 = vmatpush.bf16.msra.mxu0 %v1032
      %1054 = vmatpush.bf16.msra.mxu0 %v1031
      %1055 = vmatmul.bf16.gmra.mxu0 %v1036
      %v1056 = vpop.f32.mrf.mxu0
      %v1057 = vadd.f32 %v1021, %v1056
      %v1058 = vpop.f32.mrf.mxu0
      %v1059 = vadd.f32 %v1021, %v1058
      %1060 = vmatmul.bf16.gmra.mxu0 %v1039
      %v1061 = vpop.f32.mrf.mxu0
      %v1062 = vadd.f32 %v1021, %v1061
      %v1063 = vpop.f32.mrf.mxu0
      %v1064 = vadd.f32 %v1021, %v1063
      %1065 = vmatmul.bf16.gmra.mxu0 %v1042
      %v1066 = vpop.f32.mrf.mxu0
      %v1067 = vadd.f32 %v1021, %v1066
      %v1068 = vpop.f32.mrf.mxu0
      %v1069 = vadd.f32 %v1021, %v1068
      %1070 = vmatmul.bf16.gmra.mxu0 %v1045
      %v1071 = vpop.f32.mrf.mxu0
      %v1072 = vadd.f32 %v1021, %v1071
      %v1073 = vpop.f32.mrf.mxu0
      %v1074 = vadd.f32 %v1021, %v1073
      %1075 = vdwg.mxu0
      %vm1076 = vcmp.gt.f32.partialorder %v435, 0.0
      %vm1077 = vcmp.gt.f32.partialorder %v436, 0.0
      %vm1078 = vcmp.gt.f32.partialorder %v437, 0.0
      %vm1079 = vcmp.gt.f32.partialorder %v438, 0.0
      %vm1080 = vcmp.gt.f32.partialorder %v439, 0.0
      %vm1081 = vcmp.gt.f32.partialorder %v440, 0.0
      %vm1082 = vcmp.gt.f32.partialorder %v441, 0.0
      %vm1083 = vcmp.gt.f32.partialorder %v442, 0.0
      %v1084 = vmin.f32 %v435, 0.0
      %v1085 = vmin.f32 %v436, 0.0
      %v1086 = vmin.f32 %v437, 0.0
      %v1087 = vmin.f32 %v438, 0.0
      %v1088 = vmin.f32 %v439, 0.0
      %v1089 = vmin.f32 %v440, 0.0
      %v1090 = vmin.f32 %v441, 0.0
      %v1091 = vmin.f32 %v442, 0.0
      %v1092 = vmul.f32 %v1084, 1.442695
      %v1093 = vpow.pop %v1092
      %v1094 = vmul.f32 %v1085, 1.442695
      %v1095 = vpow.pop %v1094
      %v1096 = vmul.f32 %v1086, 1.442695
      %v1097 = vpow.pop %v1096
      %v1098 = vmul.f32 %v1087, 1.442695
      %v1099 = vpow.pop %v1098
      %v1100 = vmul.f32 %v1088, 1.442695
      %v1101 = vpow.pop %v1100
      %v1102 = vmul.f32 %v1089, 1.442695
      %v1103 = vpow.pop %v1102
      %v1104 = vmul.f32 %v1090, 1.442695
      %v1105 = vpow.pop %v1104
      %v1106 = vmul.f32 %v1091, 1.442695
      %v1107 = vpow.pop %v1106
      %v1108 = vsub.f32 %v1093, 1.0
      %v1109 = vsub.f32 %v1095, 1.0
      %v1110 = vsub.f32 %v1097, 1.0
      %v1111 = vsub.f32 %v1099, 1.0
      %v1112 = vsub.f32 %v1101, 1.0
      %v1113 = vsub.f32 %v1103, 1.0
      %v1114 = vsub.f32 %v1105, 1.0
      %v1115 = vsub.f32 %v1107, 1.0
      %v1116 = vsel %vm1076, %v435, %v1108
      %v1117 = vsel %vm1077, %v436, %v1109
      %v1118 = vsel %vm1078, %v437, %v1110
      %v1119 = vsel %vm1079, %v438, %v1111
      %v1120 = vsel %vm1080, %v439, %v1112
      %v1121 = vsel %vm1081, %v440, %v1113
      %v1122 = vsel %vm1082, %v441, %v1114
      %v1123 = vsel %vm1083, %v442, %v1115
      %v1124 = vld [vmem:[%s6] sm:$0xf]
      %v1125 = vld [vmem:[%s6 + $0x4] sm:$0xf]
      %v1126 = vld [vmem:[%s6 + $0x8] sm:$0xf]
      %v1127 = vld [vmem:[%s6 + $0xc] sm:$0xf]
      %v1128 = vpack.c.bf16 %v1117, %v1116
      %v1129 = vpack.c.bf16 %v1119, %v1118
      %v1130 = vpack.c.bf16 %v1121, %v1120
      %v1131 = vpack.c.bf16 %v1123, %v1122
      %v1132 = vld [vmem:[%s7] sm:$0x1]
      %v1134 = vperm.slane %v1132, 0
      %v1140 = vunpack.c.l.b16 %v1124
      %v1141 = vunpack.c.l.b16 %v1125
      %v1142 = vunpack.c.l.b16 %v1126
      %v1143 = vunpack.c.l.b16 %v1127
      %v1144 = vpack.c.b16 %v1141, %v1140
      %v1145 = vpack.c.b16 %v1143, %v1142
      %v1149 = vsel %vm471, %v1128, 0
      %v1152 = vsel %vm471, %v1129, 0
      %v1155 = vsel %vm471, %v1130, 0
      %v1158 = vsel %vm471, %v1131, 0
      %1160 = vmatpush.bf16.msra.mxu0 0
      %1161 = vmatpush.bf16.msra.mxu0 0
      %1162 = vmatpush.bf16.msra.mxu0 0
      %1163 = vmatpush.bf16.msra.mxu0 0
      %1164 = vmatpush.bf16.msra.mxu0 0
      %1165 = vmatpush.bf16.msra.mxu0 0
      %1166 = vmatpush.bf16.msra.mxu0 %v1145
      %1167 = vmatpush.bf16.msra.mxu0 %v1144
      %1168 = vmatmul.bf16.gmra.mxu0 %v1149
      %v1169 = vpop.f32.mrf.mxu0
      %v1170 = vadd.f32 %v1134, %v1169
      %v1171 = vpop.f32.mrf.mxu0
      %v1172 = vadd.f32 %v1134, %v1171
      %1173 = vmatmul.bf16.gmra.mxu0 %v1152
      %v1174 = vpop.f32.mrf.mxu0
      %v1175 = vadd.f32 %v1134, %v1174
      %v1176 = vpop.f32.mrf.mxu0
      %v1177 = vadd.f32 %v1134, %v1176
      %1178 = vmatmul.bf16.gmra.mxu0 %v1155
      %v1179 = vpop.f32.mrf.mxu0
      %v1180 = vadd.f32 %v1134, %v1179
      %v1181 = vpop.f32.mrf.mxu0
      %v1182 = vadd.f32 %v1134, %v1181
      %1183 = vmatmul.bf16.gmra.mxu0 %v1158
      %v1184 = vpop.f32.mrf.mxu0
      %v1185 = vadd.f32 %v1134, %v1184
      %v1186 = vpop.f32.mrf.mxu0
      %v1187 = vadd.f32 %v1134, %v1186
      %1188 = vdwg.mxu0
      %vm1189 = vcmp.gt.f32.partialorder %v1170, 0.0
      %vm1190 = vcmp.gt.f32.partialorder %v1172, 0.0
      %vm1191 = vcmp.gt.f32.partialorder %v1175, 0.0
      %vm1192 = vcmp.gt.f32.partialorder %v1177, 0.0
      %vm1193 = vcmp.gt.f32.partialorder %v1180, 0.0
      %vm1194 = vcmp.gt.f32.partialorder %v1182, 0.0
      %vm1195 = vcmp.gt.f32.partialorder %v1185, 0.0
      %vm1196 = vcmp.gt.f32.partialorder %v1187, 0.0
      %v1197 = vmin.f32 %v1170, 0.0
      %v1198 = vmin.f32 %v1172, 0.0
      %v1199 = vmin.f32 %v1175, 0.0
      %v1200 = vmin.f32 %v1177, 0.0
      %v1201 = vmin.f32 %v1180, 0.0
      %v1202 = vmin.f32 %v1182, 0.0
      %v1203 = vmin.f32 %v1185, 0.0
      %v1204 = vmin.f32 %v1187, 0.0
      %v1205 = vmul.f32 %v1197, 1.442695
      %v1206 = vpow.pop %v1205
      %v1207 = vmul.f32 %v1198, 1.442695
      %v1208 = vpow.pop %v1207
      %v1209 = vmul.f32 %v1199, 1.442695
      %v1210 = vpow.pop %v1209
      %v1211 = vmul.f32 %v1200, 1.442695
      %v1212 = vpow.pop %v1211
      %v1213 = vmul.f32 %v1201, 1.442695
      %v1214 = vpow.pop %v1213
      %v1215 = vmul.f32 %v1202, 1.442695
      %v1216 = vpow.pop %v1215
      %v1217 = vmul.f32 %v1203, 1.442695
      %v1218 = vpow.pop %v1217
      %v1219 = vmul.f32 %v1204, 1.442695
      %v1220 = vpow.pop %v1219
      %v1221 = vsub.f32 %v1206, 1.0
      %v1222 = vsub.f32 %v1208, 1.0
      %v1223 = vsub.f32 %v1210, 1.0
      %v1224 = vsub.f32 %v1212, 1.0
      %v1225 = vsub.f32 %v1214, 1.0
      %v1226 = vsub.f32 %v1216, 1.0
      %v1227 = vsub.f32 %v1218, 1.0
      %v1228 = vsub.f32 %v1220, 1.0
      %v1229 = vsel %vm1189, %v1170, %v1221
      %v1230 = vsel %vm1190, %v1172, %v1222
      %v1231 = vsel %vm1191, %v1175, %v1223
      %v1232 = vsel %vm1192, %v1177, %v1224
      %v1233 = vsel %vm1193, %v1180, %v1225
      %v1234 = vsel %vm1194, %v1182, %v1226
      %v1235 = vsel %vm1195, %v1185, %v1227
      %v1236 = vsel %vm1196, %v1187, %v1228
      %vm1237 = vcmp.gt.f32.partialorder %v1057, 0.0
      %vm1238 = vcmp.gt.f32.partialorder %v1059, 0.0
      %vm1239 = vcmp.gt.f32.partialorder %v1062, 0.0
      %vm1240 = vcmp.gt.f32.partialorder %v1064, 0.0
      %vm1241 = vcmp.gt.f32.partialorder %v1067, 0.0
      %vm1242 = vcmp.gt.f32.partialorder %v1069, 0.0
      %vm1243 = vcmp.gt.f32.partialorder %v1072, 0.0
      %vm1244 = vcmp.gt.f32.partialorder %v1074, 0.0
      %v1245 = vmin.f32 %v1057, 0.0
      %v1246 = vmin.f32 %v1059, 0.0
      %v1247 = vmin.f32 %v1062, 0.0
      %v1248 = vmin.f32 %v1064, 0.0
      %v1249 = vmin.f32 %v1067, 0.0
      %v1250 = vmin.f32 %v1069, 0.0
      %v1251 = vmin.f32 %v1072, 0.0
      %v1252 = vmin.f32 %v1074, 0.0
      %v1253 = vmul.f32 %v1245, 1.442695
      %v1254 = vpow.pop %v1253
      %v1255 = vmul.f32 %v1246, 1.442695
      %v1256 = vpow.pop %v1255
      %v1257 = vmul.f32 %v1247, 1.442695
      %v1258 = vpow.pop %v1257
      %v1259 = vmul.f32 %v1248, 1.442695
      %v1260 = vpow.pop %v1259
      %v1261 = vmul.f32 %v1249, 1.442695
      %v1262 = vpow.pop %v1261
      %v1263 = vmul.f32 %v1250, 1.442695
      %v1264 = vpow.pop %v1263
      %v1265 = vmul.f32 %v1251, 1.442695
      %v1266 = vpow.pop %v1265
      %v1267 = vmul.f32 %v1252, 1.442695
      %v1268 = vpow.pop %v1267
      %v1269 = vsub.f32 %v1254, 1.0
      %v1270 = vsub.f32 %v1256, 1.0
      %v1271 = vsub.f32 %v1258, 1.0
      %v1272 = vsub.f32 %v1260, 1.0
      %v1273 = vsub.f32 %v1262, 1.0
      %v1274 = vsub.f32 %v1264, 1.0
      %v1275 = vsub.f32 %v1266, 1.0
      %v1276 = vsub.f32 %v1268, 1.0
      %v1277 = vsel %vm1237, %v1057, %v1269
      %v1278 = vsel %vm1238, %v1059, %v1270
      %v1279 = vsel %vm1239, %v1062, %v1271
      %v1280 = vsel %vm1240, %v1064, %v1272
      %v1281 = vsel %vm1241, %v1067, %v1273
      %v1282 = vsel %vm1242, %v1069, %v1274
      %v1283 = vsel %vm1243, %v1072, %v1275
      %v1284 = vsel %vm1244, %v1074, %v1276
      %v1285 = vld [vmem:[%s8] sm:$0xf]
      %v1286 = vld [vmem:[%s8 + $0x4] sm:$0xf]
      %v1287 = vld [vmem:[%s8 + $0x8] sm:$0xf]
      %v1288 = vld [vmem:[%s8 + $0xc] sm:$0xf]
      %v1289 = vpack.c.bf16 %v1278, %v1277
      %v1290 = vpack.c.bf16 %v1280, %v1279
      %v1291 = vpack.c.bf16 %v1282, %v1281
      %v1292 = vpack.c.bf16 %v1284, %v1283
      %v1293 = vld [vmem:[%s9] sm:$0x1]
      %v1295 = vperm.slane %v1293, 0
      %v1301 = vunpack.c.l.b16 %v1285
      %v1302 = vunpack.c.l.b16 %v1286
      %v1303 = vunpack.c.l.b16 %v1287
      %v1304 = vunpack.c.l.b16 %v1288
      %v1305 = vpack.c.b16 %v1302, %v1301
      %v1306 = vpack.c.b16 %v1304, %v1303
      %v1310 = vsel %vm471, %v1289, 0
      %v1313 = vsel %vm471, %v1290, 0
      %v1316 = vsel %vm471, %v1291, 0
      %v1319 = vsel %vm471, %v1292, 0
      %1321 = vmatpush.bf16.msra.mxu0 0
      %1322 = vmatpush.bf16.msra.mxu0 0
      %1323 = vmatpush.bf16.msra.mxu0 0
      %1324 = vmatpush.bf16.msra.mxu0 0
      %1325 = vmatpush.bf16.msra.mxu0 0
      %1326 = vmatpush.bf16.msra.mxu0 0
      %1327 = vmatpush.bf16.msra.mxu0 %v1306
      %1328 = vmatpush.bf16.msra.mxu0 %v1305
      %1329 = vmatmul.bf16.gmra.mxu0 %v1310
      %v1330 = vpop.f32.mrf.mxu0
      %v1331 = vadd.f32 %v1295, %v1330
      %v1332 = vpop.f32.mrf.mxu0
      %v1333 = vadd.f32 %v1295, %v1332
      %1334 = vmatmul.bf16.gmra.mxu0 %v1313
      %v1335 = vpop.f32.mrf.mxu0
      %v1336 = vadd.f32 %v1295, %v1335
      %v1337 = vpop.f32.mrf.mxu0
      %v1338 = vadd.f32 %v1295, %v1337
      %1339 = vmatmul.bf16.gmra.mxu0 %v1316
      %v1340 = vpop.f32.mrf.mxu0
      %v1341 = vadd.f32 %v1295, %v1340
      %v1342 = vpop.f32.mrf.mxu0
      %v1343 = vadd.f32 %v1295, %v1342
      %1344 = vmatmul.bf16.gmra.mxu0 %v1319
      %v1345 = vpop.f32.mrf.mxu0
      %v1346 = vadd.f32 %v1295, %v1345
      %v1347 = vpop.f32.mrf.mxu0
      %v1348 = vadd.f32 %v1295, %v1347
      %1349 = vdwg.mxu0
      %vm1350 = vcmp.gt.f32.partialorder %v1331, 0.0
      %vm1351 = vcmp.gt.f32.partialorder %v1333, 0.0
      %vm1352 = vcmp.gt.f32.partialorder %v1336, 0.0
      %vm1353 = vcmp.gt.f32.partialorder %v1338, 0.0
      %vm1354 = vcmp.gt.f32.partialorder %v1341, 0.0
      %vm1355 = vcmp.gt.f32.partialorder %v1343, 0.0
      %vm1356 = vcmp.gt.f32.partialorder %v1346, 0.0
      %vm1357 = vcmp.gt.f32.partialorder %v1348, 0.0
      %v1358 = vmin.f32 %v1331, 0.0
      %v1359 = vmin.f32 %v1333, 0.0
      %v1360 = vmin.f32 %v1336, 0.0
      %v1361 = vmin.f32 %v1338, 0.0
      %v1362 = vmin.f32 %v1341, 0.0
      %v1363 = vmin.f32 %v1343, 0.0
      %v1364 = vmin.f32 %v1346, 0.0
      %v1365 = vmin.f32 %v1348, 0.0
      %v1366 = vmul.f32 %v1358, 1.442695
      %v1367 = vpow.pop %v1366
      %v1368 = vmul.f32 %v1359, 1.442695
      %v1369 = vpow.pop %v1368
      %v1370 = vmul.f32 %v1360, 1.442695
      %v1371 = vpow.pop %v1370
      %v1372 = vmul.f32 %v1361, 1.442695
      %v1373 = vpow.pop %v1372
      %v1374 = vmul.f32 %v1362, 1.442695
      %v1375 = vpow.pop %v1374
      %v1376 = vmul.f32 %v1363, 1.442695
      %v1377 = vpow.pop %v1376
      %v1378 = vmul.f32 %v1364, 1.442695
      %v1379 = vpow.pop %v1378
      %v1380 = vmul.f32 %v1365, 1.442695
      %v1381 = vpow.pop %v1380
      %v1382 = vsub.f32 %v1367, 1.0
      %v1383 = vsub.f32 %v1369, 1.0
      %v1384 = vsub.f32 %v1371, 1.0
      %v1385 = vsub.f32 %v1373, 1.0
      %v1386 = vsub.f32 %v1375, 1.0
      %v1387 = vsub.f32 %v1377, 1.0
      %v1388 = vsub.f32 %v1379, 1.0
      %v1389 = vsub.f32 %v1381, 1.0
      %v1390 = vsel %vm1350, %v1331, %v1382
      %v1391 = vsel %vm1351, %v1333, %v1383
      %v1392 = vsel %vm1352, %v1336, %v1384
      %v1393 = vsel %vm1353, %v1338, %v1385
      %v1394 = vsel %vm1354, %v1341, %v1386
      %v1395 = vsel %vm1355, %v1343, %v1387
      %v1396 = vsel %vm1356, %v1346, %v1388
      %v1397 = vsel %vm1357, %v1348, %v1389
      %v1398 = vadd.f32 %v1229, %v1390
      %v1399 = vadd.f32 %v1230, %v1391
      %v1400 = vadd.f32 %v1231, %v1392
      %v1401 = vadd.f32 %v1232, %v1393
      %v1402 = vadd.f32 %v1233, %v1394
      %v1403 = vadd.f32 %v1234, %v1395
      %v1404 = vadd.f32 %v1235, %v1396
      %v1405 = vadd.f32 %v1236, %v1397
      %vm1406 = vcmp.gt.f32.partialorder %v1398, 0.0
      %vm1407 = vcmp.gt.f32.partialorder %v1399, 0.0
      %vm1408 = vcmp.gt.f32.partialorder %v1400, 0.0
      %vm1409 = vcmp.gt.f32.partialorder %v1401, 0.0
      %vm1410 = vcmp.gt.f32.partialorder %v1402, 0.0
      %vm1411 = vcmp.gt.f32.partialorder %v1403, 0.0
      %vm1412 = vcmp.gt.f32.partialorder %v1404, 0.0
      %vm1413 = vcmp.gt.f32.partialorder %v1405, 0.0
      %v1414 = vmin.f32 %v1398, 0.0
      %v1415 = vmin.f32 %v1399, 0.0
      %v1416 = vmin.f32 %v1400, 0.0
      %v1417 = vmin.f32 %v1401, 0.0
      %v1418 = vmin.f32 %v1402, 0.0
      %v1419 = vmin.f32 %v1403, 0.0
      %v1420 = vmin.f32 %v1404, 0.0
      %v1421 = vmin.f32 %v1405, 0.0
      %v1422 = vmul.f32 %v1414, 1.442695
      %v1423 = vpow.pop %v1422
      %v1424 = vmul.f32 %v1415, 1.442695
      %v1425 = vpow.pop %v1424
      %v1426 = vmul.f32 %v1416, 1.442695
      %v1427 = vpow.pop %v1426
      %v1428 = vmul.f32 %v1417, 1.442695
      %v1429 = vpow.pop %v1428
      %v1430 = vmul.f32 %v1418, 1.442695
      %v1431 = vpow.pop %v1430
      %v1432 = vmul.f32 %v1419, 1.442695
      %v1433 = vpow.pop %v1432
      %v1434 = vmul.f32 %v1420, 1.442695
      %v1435 = vpow.pop %v1434
      %v1436 = vmul.f32 %v1421, 1.442695
      %v1437 = vpow.pop %v1436
      %v1438 = vsub.f32 %v1423, 1.0
      %v1439 = vsub.f32 %v1425, 1.0
      %v1440 = vsub.f32 %v1427, 1.0
      %v1441 = vsub.f32 %v1429, 1.0
      %v1442 = vsub.f32 %v1431, 1.0
      %v1443 = vsub.f32 %v1433, 1.0
      %v1444 = vsub.f32 %v1435, 1.0
      %v1445 = vsub.f32 %v1437, 1.0
      %v1446 = vsel %vm1406, %v1398, %v1438
      %v1447 = vsel %vm1407, %v1399, %v1439
      %v1448 = vsel %vm1408, %v1400, %v1440
      %v1449 = vsel %vm1409, %v1401, %v1441
      %v1450 = vsel %vm1410, %v1402, %v1442
      %v1451 = vsel %vm1411, %v1403, %v1443
      %v1452 = vsel %vm1412, %v1404, %v1444
      %v1453 = vsel %vm1413, %v1405, %v1445
      %v1454 = vld [vmem:[%s10] sm:$0xf]
      %v1455 = vld [vmem:[%s10 + $0x4] sm:$0xf]
      %v1456 = vld [vmem:[%s10 + $0x8] sm:$0xf]
      %v1457 = vld [vmem:[%s10 + $0xc] sm:$0xf]
      %v1458 = vpack.c.bf16 %v1447, %v1446
      %v1459 = vpack.c.bf16 %v1449, %v1448
      %v1460 = vpack.c.bf16 %v1451, %v1450
      %v1461 = vpack.c.bf16 %v1453, %v1452
      %v1462 = vld [vmem:[%s11] sm:$0x1]
      %v1464 = vperm.slane %v1462, 0
      %v1470 = vunpack.c.l.b16 %v1454
      %v1471 = vunpack.c.l.b16 %v1455
      %v1472 = vunpack.c.l.b16 %v1456
      %v1473 = vunpack.c.l.b16 %v1457
      %v1474 = vpack.c.b16 %v1471, %v1470
      %v1475 = vpack.c.b16 %v1473, %v1472
      %v1479 = vsel %vm471, %v1458, 0
      %v1482 = vsel %vm471, %v1459, 0
      %v1485 = vsel %vm471, %v1460, 0
      %v1488 = vsel %vm471, %v1461, 0
      %1490 = vmatpush.bf16.msra.mxu0 0
      %1491 = vmatpush.bf16.msra.mxu0 0
      %1492 = vmatpush.bf16.msra.mxu0 0
      %1493 = vmatpush.bf16.msra.mxu0 0
      %1494 = vmatpush.bf16.msra.mxu0 0
      %1495 = vmatpush.bf16.msra.mxu0 0
      %1496 = vmatpush.bf16.msra.mxu0 %v1475
      %1497 = vmatpush.bf16.msra.mxu0 %v1474
      %1498 = vmatmul.bf16.gmra.mxu0 %v1479
      %v1499 = vpop.f32.mrf.mxu0
      %v1500 = vadd.f32 %v1464, %v1499
      %v1501 = vpop.f32.mrf.mxu0
      %v1502 = vadd.f32 %v1464, %v1501
      %1503 = vmatmul.bf16.gmra.mxu0 %v1482
      %v1504 = vpop.f32.mrf.mxu0
      %v1505 = vadd.f32 %v1464, %v1504
      %v1506 = vpop.f32.mrf.mxu0
      %v1507 = vadd.f32 %v1464, %v1506
      %1508 = vmatmul.bf16.gmra.mxu0 %v1485
      %v1509 = vpop.f32.mrf.mxu0
      %v1510 = vadd.f32 %v1464, %v1509
      %v1511 = vpop.f32.mrf.mxu0
      %v1512 = vadd.f32 %v1464, %v1511
      %1513 = vmatmul.bf16.gmra.mxu0 %v1488
      %v1514 = vpop.f32.mrf.mxu0
      %v1515 = vadd.f32 %v1464, %v1514
      %v1516 = vpop.f32.mrf.mxu0
      %v1517 = vadd.f32 %v1464, %v1516
      %1518 = vdwg.mxu0
      %vm1519 = vcmp.gt.f32.partialorder %v1500, 0.0
      %vm1520 = vcmp.gt.f32.partialorder %v1502, 0.0
      %vm1521 = vcmp.gt.f32.partialorder %v1505, 0.0
      %vm1522 = vcmp.gt.f32.partialorder %v1507, 0.0
      %vm1523 = vcmp.gt.f32.partialorder %v1510, 0.0
      %vm1524 = vcmp.gt.f32.partialorder %v1512, 0.0
      %vm1525 = vcmp.gt.f32.partialorder %v1515, 0.0
      %vm1526 = vcmp.gt.f32.partialorder %v1517, 0.0
      %v1527 = vmin.f32 %v1500, 0.0
      %v1528 = vmin.f32 %v1502, 0.0
      %v1529 = vmin.f32 %v1505, 0.0
      %v1530 = vmin.f32 %v1507, 0.0
      %v1531 = vmin.f32 %v1510, 0.0
      %v1532 = vmin.f32 %v1512, 0.0
      %v1533 = vmin.f32 %v1515, 0.0
      %v1534 = vmin.f32 %v1517, 0.0
      %v1535 = vmul.f32 %v1527, 1.442695
      %v1536 = vpow.pop %v1535
      %v1537 = vmul.f32 %v1528, 1.442695
      %v1538 = vpow.pop %v1537
      %v1539 = vmul.f32 %v1529, 1.442695
      %v1540 = vpow.pop %v1539
      %v1541 = vmul.f32 %v1530, 1.442695
      %v1542 = vpow.pop %v1541
      %v1543 = vmul.f32 %v1531, 1.442695
      %v1544 = vpow.pop %v1543
      %v1545 = vmul.f32 %v1532, 1.442695
      %v1546 = vpow.pop %v1545
      %v1547 = vmul.f32 %v1533, 1.442695
      %v1548 = vpow.pop %v1547
      %v1549 = vmul.f32 %v1534, 1.442695
      %v1550 = vpow.pop %v1549
      %v1551 = vsub.f32 %v1536, 1.0
      %v1552 = vsub.f32 %v1538, 1.0
      %v1553 = vsub.f32 %v1540, 1.0
      %v1554 = vsub.f32 %v1542, 1.0
      %v1555 = vsub.f32 %v1544, 1.0
      %v1556 = vsub.f32 %v1546, 1.0
      %v1557 = vsub.f32 %v1548, 1.0
      %v1558 = vsub.f32 %v1550, 1.0
      %v1559 = vsel %vm1519, %v1500, %v1551
      %v1560 = vsel %vm1520, %v1502, %v1552
      %v1561 = vsel %vm1521, %v1505, %v1553
      %v1562 = vsel %vm1522, %v1507, %v1554
      %v1563 = vsel %vm1523, %v1510, %v1555
      %v1564 = vsel %vm1524, %v1512, %v1556
      %v1565 = vsel %vm1525, %v1515, %v1557
      %v1566 = vsel %vm1526, %v1517, %v1558
      %v1567 = vld [vmem:[%s428] sm:$0xff]
      %v1568 = vld [vmem:[%s428 + $0x8] sm:$0xff]
      %v1569 = vld [vmem:[%s428 + $0x10] sm:$0xff]
      %v1570 = vld [vmem:[%s428 + $0x18] sm:$0xff]
      %v1571 = vld [vmem:[%s428 + $0x20] sm:$0xff]
      %v1572 = vld [vmem:[%s428 + $0x28] sm:$0xff]
      %v1573 = vld [vmem:[%s428 + $0x30] sm:$0xff]
      %v1574 = vld [vmem:[%s428 + $0x38] sm:$0xff]
      %vm1575 = vcmp.gt.f32.partialorder %v1567, 0.0
      %vm1576 = vcmp.gt.f32.partialorder %v1568, 0.0
      %vm1577 = vcmp.gt.f32.partialorder %v1569, 0.0
      %vm1578 = vcmp.gt.f32.partialorder %v1570, 0.0
      %vm1579 = vcmp.gt.f32.partialorder %v1571, 0.0
      %vm1580 = vcmp.gt.f32.partialorder %v1572, 0.0
      %vm1581 = vcmp.gt.f32.partialorder %v1573, 0.0
      %vm1582 = vcmp.gt.f32.partialorder %v1574, 0.0
      %v1583 = vmin.f32 %v1567, 0.0
      %v1584 = vmin.f32 %v1568, 0.0
      %v1585 = vmin.f32 %v1569, 0.0
      %v1586 = vmin.f32 %v1570, 0.0
      %v1587 = vmin.f32 %v1571, 0.0
      %v1588 = vmin.f32 %v1572, 0.0
      %v1589 = vmin.f32 %v1573, 0.0
      %v1590 = vmin.f32 %v1574, 0.0
      %v1591 = vmul.f32 %v1583, 1.442695
      %v1592 = vpow.pop %v1591
      %v1593 = vmul.f32 %v1584, 1.442695
      %v1594 = vpow.pop %v1593
      %v1595 = vmul.f32 %v1585, 1.442695
      %v1596 = vpow.pop %v1595
      %v1597 = vmul.f32 %v1586, 1.442695
      %v1598 = vpow.pop %v1597
      %v1599 = vmul.f32 %v1587, 1.442695
      %v1600 = vpow.pop %v1599
      %v1601 = vmul.f32 %v1588, 1.442695
      %v1602 = vpow.pop %v1601
      %v1603 = vmul.f32 %v1589, 1.442695
      %v1604 = vpow.pop %v1603
      %v1605 = vmul.f32 %v1590, 1.442695
      %v1606 = vpow.pop %v1605
      %v1607 = vsub.f32 %v1592, 1.0
      %v1608 = vsub.f32 %v1594, 1.0
      %v1609 = vsub.f32 %v1596, 1.0
      %v1610 = vsub.f32 %v1598, 1.0
      %v1611 = vsub.f32 %v1600, 1.0
      %v1612 = vsub.f32 %v1602, 1.0
      %v1613 = vsub.f32 %v1604, 1.0
      %v1614 = vsub.f32 %v1606, 1.0
      %v1615 = vsel %vm1575, %v1567, %v1607
      %v1616 = vsel %vm1576, %v1568, %v1608
      %v1617 = vsel %vm1577, %v1569, %v1609
      %v1618 = vsel %vm1578, %v1570, %v1610
      %v1619 = vsel %vm1579, %v1571, %v1611
      %v1620 = vsel %vm1580, %v1572, %v1612
      %v1621 = vsel %vm1581, %v1573, %v1613
      %v1622 = vsel %vm1582, %v1574, %v1614
      %v1623 = vadd.f32 %v1559, %v1615
      %v1624 = vadd.f32 %v1560, %v1616
      %v1625 = vadd.f32 %v1561, %v1617
      %v1626 = vadd.f32 %v1562, %v1618
      %v1627 = vadd.f32 %v1563, %v1619
      %v1628 = vadd.f32 %v1564, %v1620
      %v1629 = vadd.f32 %v1565, %v1621
      %v1630 = vadd.f32 %v1566, %v1622
      %1631 = vst.msk [vmem:[%s433] sm:$0xff] %vm471, %v1623
      %1632 = vst.msk [vmem:[%s433 + $0x8] sm:$0xff] %vm471, %v1624
      %1633 = vst.msk [vmem:[%s433 + $0x10] sm:$0xff] %vm471, %v1625
      %1634 = vst.msk [vmem:[%s433 + $0x18] sm:$0xff] %vm471, %v1626
      %1635 = vst.msk [vmem:[%s433 + $0x20] sm:$0xff] %vm471, %v1627
      %1636 = vst.msk [vmem:[%s433 + $0x28] sm:$0xff] %vm471, %v1628
      %1637 = vst.msk [vmem:[%s433 + $0x30] sm:$0xff] %vm471, %v1629
      %1638 = vst.msk [vmem:[%s433 + $0x38] sm:$0xff] %vm471, %v1630
      %p1639 = scmp.lt.s32.totalorder %s23, 1
      %s1640 = scalar_select %p1639, %s23, 1
      %s1641 = smul.addr %s1640, 8
      %s1642 = smul.addr %s1641, 8
      %s1643 = scalar_lea.vmem %s12, %s1642
      // Predicated region
      $region69: #{pixel_snail_forward.8} parent=67 // pred_check
        %p1644 = pneg %p303
      $region70: #{pixel_snail_forward.8} parent=67 // pred_check_branch
        %1646 = sbr.rel (%p1644) target = $region72
      $region71: #{pixel_snail_forward.8} parent=67 // pred_region
        _
      $region72: #{pixel_snail_forward.8} parent=67 // pred_fallthru
        _
    $region68: #{pixel_snail_forward.8} parent=5 // pred_fallthru
      _
    %p1647 = scmp.le.s32.totalorder 2, %s18
    // Predicated region
    $region73: #{pixel_snail_forward.8} parent=5 // pred_check
      %p1648 = pneg %p1647
    $region74: #{pixel_snail_forward.8} parent=5 // pred_check_branch
      %1650 = sbr.rel (%p1648) target = $region76
    $region75: #{pixel_snail_forward.8} parent=5 // pred_region
      %s1651 = ssub.s32 %s18, 2
      // Predicated region
      $region77: #{pixel_snail_forward.8} parent=75 // pred_check
        %p1652 = pneg %p309
      $region78: #{pixel_snail_forward.8} parent=75 // pred_check_branch
        %1654 = sbr.rel (%p1652) target = $region80
      $region79: #{pixel_snail_forward.8} parent=75 // pred_region
        %p1655 = scmp.lt.s32.totalorder %s24, 1
        %s1656 = scalar_select %p1655, %s24, 1
        %s1657 = smul.addr %s1656, 8
        %s1658 = smul.addr %s1657, 8
        %s1659 = scalar_lea.vmem %s12, %s1658
      $region80: #{pixel_snail_forward.8} parent=75 // pred_fallthru
        _
    $region76: #{pixel_snail_forward.8} parent=5 // pred_fallthru
      _
  $region6: #{pixel_snail_forward.8} parent=0 // loop_footer
    %s22 = sadd.s32 1, %s18
  $region7: #{pixel_snail_forward.8} parent=0 // loop_footer_branch
    %17 = sbr.rel target = $region3
  $region8: #{pixel_snail_forward.8} parent=0 // loop_exit
    _

// kernel: pixel_snail_forward.7
$region0: #{pixel_snail_forward.7}
  #allocation0 [shape = 'u32[]', space=smem, size = 0x4, offset = 0x4, fixed_abs, tag = 'smem constant byte address 0x4 - core index']
  #allocation1 [shape = 'u32[72,128]{1,0:T(1,128)}', space=vmem, size = 0x9000, scoped, tag = 'internal scratch']
  #allocation2 [shape = 'f32[9,9,32]{2,1,0:T(8,128)}', space=vmem, size = 0x12000, scoped, tag = 'scratch operand']
  %s0 = inlined_call_operand.vmem [shape: f32[2,8,8,32], index: 0, kind: input, shape index: {}]
  %s1 = inlined_call_operand.vmem [shape: bf16[128,32], index: 1, kind: input, shape index: {}]
  %s2 = inlined_call_operand.vmem [shape: f32[1,32], index: 2, kind: input, shape index: {}]
  %s3 = inlined_call_operand.vmem [shape: bf16[128,64], index: 3, kind: input, shape index: {}]
  %s4 = inlined_call_operand.vmem [shape: f32[1,64], index: 4, kind: input, shape index: {}]
  %s5 = inlined_call_operand.vmem [shape: f32[2,8,8,32], index: 5, kind: output, shape index: {}]
  %s6 = sld [smem:[#allocation0]]
  $region53: #{pixel_snail_forward.7} parent=0
    _
  %s8 = ssub.s32 1, %s6
  %s9 = scalar_select 0, %s8, %s6
  loop: start=0, step=1, limit=4
  $region2: #{pixel_snail_forward.7} parent=0 // loop_pre_header
    _
  $region3: #{pixel_snail_forward.7} parent=0 // loop_header
    %s11 = sphi 0, %s15
    %p12 = scmp.ge.s32.totalorder %s11, 4
    %s21 = sphi 0, %s23
    %s24 = sphi 0, %s21
    %s25 = sphi 0, %s24
    %s41 = sphi 0, %s25
    %s45 = sphi 0, %s45
    %s47 = sphi 0, %s45
    %s48 = sphi 0, %s47
    %s62 = sphi 0, %s48
    %s66 = sphi 0, %s66
    %s68 = sphi 0, %s66
    %s69 = sphi 0, %s68
    %s83 = sphi 0, %s69
    %s87 = sphi 0, %s87
    %s89 = sphi 0, %s87
    %s90 = sphi 0, %s89
    %s104 = sphi 0, %s90
    %s108 = sphi 0, %s108
    %s110 = sphi 0, %s108
    %s111 = sphi 0, %s110
    %s125 = sphi 0, %s111
    %s131 = sphi 0, %s133
    %s134 = sphi 0, %s131
    %s135 = sphi 0, %s134
    %s151 = sphi 0, %s135
  $region4: #{pixel_snail_forward.7} parent=0 // loop_header_branch
    %14 = sbr.rel (%p12) target = $region8
  $region5: #{pixel_snail_forward.7} parent=0 // loop_body
    %s16 = ssub.s32 %s11, 1
    %s17 = ssub.s32 %s11, 2
    %s18 = sadd.s32 %s11, 1
    %s19 = ssub.s32 %s11, %s18
    %p20 = scmp.eq.s32.totalorder %s19, 0
    %s22 = sadd.s32 %s21, 1
    %s23 = scalar_select %p20, %s21, %s22
    %p26 = pneg %p20
    %p27 = scmp.eq.s32.totalorder %s11, 1
    %p28 = por %p26, %p27
    %p29 = scmp.ne.s32.totalorder %s21, %s24
    %p30 = scmp.eq.s32.totalorder %s11, 0
    %p31 = por %p29, %p30
    %p32 = scmp.ne.s32.totalorder %s21, %s24
    %p33 = scmp.eq.s32.totalorder %s16, 1
    %p34 = por %p32, %p33
    %p35 = scmp.ne.s32.totalorder %s24, %s25
    %p36 = scmp.eq.s32.totalorder %s16, 0
    %p37 = por %p35, %p36
    %p38 = scmp.ne.s32.totalorder %s24, %s25
    %p39 = scmp.eq.s32.totalorder %s17, 1
    %p40 = por %p38, %p39
    %p42 = scmp.ne.s32.totalorder %s25, %s41
    %p43 = scmp.eq.s32.totalorder %s17, 0
    %p44 = por %p42, %p43
    %s46 = sadd.s32 %s45, 1
    %p49 = scmp.eq.s32.totalorder %s11, 1
    %p50 = scmp.ne.s32.totalorder %s45, %s47
    %p51 = scmp.eq.s32.totalorder %s11, 0
    %p52 = por %p50, %p51
    %p53 = scmp.ne.s32.totalorder %s45, %s47
    %p54 = scmp.eq.s32.totalorder %s16, 1
    %p55 = por %p53, %p54
    %p56 = scmp.ne.s32.totalorder %s47, %s48
    %p57 = scmp.eq.s32.totalorder %s16, 0
    %p58 = por %p56, %p57
    %p59 = scmp.ne.s32.totalorder %s47, %s48
    %p60 = scmp.eq.s32.totalorder %s17, 1
    %p61 = por %p59, %p60
    %p63 = scmp.ne.s32.totalorder %s48, %s62
    %p64 = scmp.eq.s32.totalorder %s17, 0
    %p65 = por %p63, %p64
    %s67 = sadd.s32 %s66, 1
    %p70 = scmp.eq.s32.totalorder %s11, 1
    %p71 = scmp.ne.s32.totalorder %s66, %s68
    %p72 = scmp.eq.s32.totalorder %s11, 0
    %p73 = por %p71, %p72
    %p74 = scmp.ne.s32.totalorder %s66, %s68
    %p75 = scmp.eq.s32.totalorder %s16, 1
    %p76 = por %p74, %p75
    %p77 = scmp.ne.s32.totalorder %s68, %s69
    %p78 = scmp.eq.s32.totalorder %s16, 0
    %p79 = por %p77, %p78
    %p80 = scmp.ne.s32.totalorder %s68, %s69
    %p81 = scmp.eq.s32.totalorder %s17, 1
    %p82 = por %p80, %p81
    %p84 = scmp.ne.s32.totalorder %s69, %s83
    %p85 = scmp.eq.s32.totalorder %s17, 0
    %p86 = por %p84, %p85
    %s88 = sadd.s32 %s87, 1
    %p91 = scmp.eq.s32.totalorder %s11, 1
    %p92 = scmp.ne.s32.totalorder %s87, %s89
    %p93 = scmp.eq.s32.totalorder %s11, 0
    %p94 = por %p92, %p93
    %p95 = scmp.ne.s32.totalorder %s87, %s89
    %p96 = scmp.eq.s32.totalorder %s16, 1
    %p97 = por %p95, %p96
    %p98 = scmp.ne.s32.totalorder %s89, %s90
    %p99 = scmp.eq.s32.totalorder %s16, 0
    %p100 = por %p98, %p99
    %p101 = scmp.ne.s32.totalorder %s89, %s90
    %p102 = scmp.eq.s32.totalorder %s17, 1
    %p103 = por %p101, %p102
    %p105 = scmp.ne.s32.totalorder %s90, %s104
    %p106 = scmp.eq.s32.totalorder %s17, 0
    %p107 = por %p105, %p106
    %s109 = sadd.s32 %s108, 1
    %p112 = scmp.eq.s32.totalorder %s11, 1
    %p113 = scmp.ne.s32.totalorder %s108, %s110
    %p114 = scmp.eq.s32.totalorder %s11, 0
    %p115 = por %p113, %p114
    %p116 = scmp.ne.s32.totalorder %s108, %s110
    %p117 = scmp.eq.s32.totalorder %s16, 1
    %p118 = por %p116, %p117
    %p119 = scmp.ne.s32.totalorder %s110, %s111
    %p120 = scmp.eq.s32.totalorder %s16, 0
    %p121 = por %p119, %p120
    %p122 = scmp.ne.s32.totalorder %s110, %s111
    %p123 = scmp.eq.s32.totalorder %s17, 1
    %p124 = por %p122, %p123
    %p126 = scmp.ne.s32.totalorder %s111, %s125
    %p127 = scmp.eq.s32.totalorder %s17, 0
    %p128 = por %p126, %p127
    %s129 = ssub.s32 %s11, %s18
    %p130 = scmp.eq.s32.totalorder %s129, 0
    %s132 = sadd.s32 %s131, 1
    %s133 = scalar_select %p130, %s131, %s132
    %p136 = pneg %p130
    %p137 = scmp.eq.s32.totalorder %s11, 1
    %p138 = por %p136, %p137
    %p139 = scmp.ne.s32.totalorder %s131, %s134
    %p140 = scmp.eq.s32.totalorder %s11, 0
    %p141 = por %p139, %p140
    %p142 = scmp.ne.s32.totalorder %s131, %s134
    %p143 = scmp.eq.s32.totalorder %s16, 1
    %p144 = por %p142, %p143
    %p145 = scmp.ne.s32.totalorder %s134, %s135
    %p146 = scmp.eq.s32.totalorder %s16, 0
    %p147 = por %p145, %p146
    %p148 = scmp.ne.s32.totalorder %s134, %s135
    %p149 = scmp.eq.s32.totalorder %s17, 1
    %p150 = por %p148, %p149
    %p152 = scmp.ne.s32.totalorder %s135, %s151
    %p153 = scmp.eq.s32.totalorder %s17, 0
    %p154 = por %p152, %p153
    %p155 = scmp.le.s32.totalorder 1, %s11
    %p156 = scmp.lt.s32.totalorder %s11, 3
    %p157 = pnand %p155, %p156
    %p158 = pneg %p157
    // Predicated region
    $region9: #{pixel_snail_forward.7} parent=5 // pred_check
      _
    $region10: #{pixel_snail_forward.7} parent=5 // pred_check_branch
      %160 = sbr.rel (%p157) target = $region12
    $region11: #{pixel_snail_forward.7} parent=5 // pred_region
      %s161 = ssub.s32 %s11, 1
      // Predicated region
      $region13: #{pixel_snail_forward.7} parent=11 // pred_check
        %p162 = pneg %p58
      $region14: #{pixel_snail_forward.7} parent=11 // pred_check_branch
        %164 = sbr.rel (%p162) target = $region16
      $region15: #{pixel_snail_forward.7} parent=11 // pred_region
        _
      $region16: #{pixel_snail_forward.7} parent=11 // pred_fallthru
        _
      // Predicated region
      $region17: #{pixel_snail_forward.7} parent=11 // pred_check
        %p165 = pneg %p79
      $region18: #{pixel_snail_forward.7} parent=11 // pred_check_branch
        %167 = sbr.rel (%p165) target = $region20
      $region19: #{pixel_snail_forward.7} parent=11 // pred_region
        _
      $region20: #{pixel_snail_forward.7} parent=11 // pred_fallthru
        _
      // Predicated region
      $region21: #{pixel_snail_forward.7} parent=11 // pred_check
        %p168 = pneg %p100
      $region22: #{pixel_snail_forward.7} parent=11 // pred_check_branch
        %170 = sbr.rel (%p168) target = $region24
      $region23: #{pixel_snail_forward.7} parent=11 // pred_region
        _
      $region24: #{pixel_snail_forward.7} parent=11 // pred_fallthru
        _
      // Predicated region
      $region25: #{pixel_snail_forward.7} parent=11 // pred_check
        %p171 = pneg %p121
      $region26: #{pixel_snail_forward.7} parent=11 // pred_check_branch
        %173 = sbr.rel (%p171) target = $region28
      $region27: #{pixel_snail_forward.7} parent=11 // pred_region
        _
      $region28: #{pixel_snail_forward.7} parent=11 // pred_fallthru
        _
    $region12: #{pixel_snail_forward.7} parent=5 // pred_fallthru
      _
    %p174 = scmp.lt.s32.totalorder %s11, 2
    // Predicated region
    $region29: #{pixel_snail_forward.7} parent=5 // pred_check
      %p175 = pneg %p174
    $region30: #{pixel_snail_forward.7} parent=5 // pred_check_branch
      %177 = sbr.rel (%p175) target = $region32
    $region31: #{pixel_snail_forward.7} parent=5 // pred_region
      // Predicated region
      $region33: #{pixel_snail_forward.7} parent=31 // pred_check
        %p178 = pneg %p31
      $region34: #{pixel_snail_forward.7} parent=31 // pred_check_branch
        %180 = sbr.rel (%p178) target = $region36
      $region35: #{pixel_snail_forward.7} parent=31 // pred_region
        %p181 = scmp.lt.s32.totalorder %s11, 1
        %s182 = scalar_select %p181, %s11, 1
        %s183 = smul.addr %s182, 8
        %s184 = smul.addr %s183, 8
        %s185 = scalar_lea.vmem %s0, %s184
      $region36: #{pixel_snail_forward.7} parent=31 // pred_fallthru
        _
    $region32: #{pixel_snail_forward.7} parent=5 // pred_fallthru
      _
    %p186 = scmp.le.s32.totalorder 1, %s11
    %p187 = scmp.lt.s32.totalorder %s11, 3
    %p188 = pnand %p186, %p187
    %p189 = pneg %p188
    // Predicated region
    $region37: #{pixel_snail_forward.7} parent=5 // pred_check
      _
    $region38: #{pixel_snail_forward.7} parent=5 // pred_check_branch
      %191 = sbr.rel (%p188) target = $region40
    $region39: #{pixel_snail_forward.7} parent=5 // pred_region
      %s192 = ssub.s32 %s11, 1
      %p193 = scmp.lt.s32.totalorder %s16, 1
      %s194 = scalar_select %p193, %s16, 1
      %s195 = smul.addr %s194, 8
      %s196 = smul.addr %s195, 8
      %s197 = scalar_lea.vmem %s0, %s196
      %p198 = pneg %p37
      %p199 = pneg %p34
      %p200 = pneg %p58
      %p201 = pneg %p55
      %p202 = pneg %p79
      %p203 = pneg %p76
      %p204 = pneg %p100
      %p205 = pneg %p97
      %p206 = pneg %p121
      %p207 = pneg %p118
      %p208 = pneg %p147
      %p209 = pneg %p144
      %p210 = scmp.lt.s32.totalorder %s16, 1
      %s211 = scalar_select %p210, %s16, 1
      %s212 = smul.addr %s211, 8
      %s213 = smul.addr %s212, 8
      %s214 = scalar_lea.vmem %s5, %s213
      %p215 = scmp.lt.s32.totalorder %s16, 1
      %s216 = scalar_select %p215, %s16, 1
      %s217 = smul.addr %s216, 8
      %s218 = smul.addr %s217, 8
      %s219 = scalar_lea.vmem %s0, %s218
      %p220 = scmp.lt.s32.totalorder %s16, 1
      %s221 = scalar_select %p220, %s16, 1
      %s222 = smul.addr %s221, 8
      %s223 = smul.addr %s222, 8
      %s224 = scalar_lea.vmem %s5, %s223
      %vm225 = vcmask 261120
      %226 = vst.msk [vmem:[#allocation2] sm:$0xff] %vm225, 0.0
      %vm227 = vcmask 253952
      %228 = vst.msk [vmem:[#allocation2 + $0x8] sm:$0x1] %vm227, 0.0
      %229 = vst.msk [vmem:[#allocation2 + $0x10] sm:$0xff] %vm225, 0.0
      %230 = vst.msk [vmem:[#allocation2 + $0x18] sm:$0x1] %vm227, 0.0
      %231 = vst.msk [vmem:[#allocation2 + $0x20] sm:$0xff] %vm225, 0.0
      %232 = vst.msk [vmem:[#allocation2 + $0x28] sm:$0x1] %vm227, 0.0
      %233 = vst.msk [vmem:[#allocation2 + $0x30] sm:$0xff] %vm225, 0.0
      %234 = vst.msk [vmem:[#allocation2 + $0x38] sm:$0x1] %vm227, 0.0
      %235 = vst.msk [vmem:[#allocation2 + $0x40] sm:$0xff] %vm225, 0.0
      %236 = vst.msk [vmem:[#allocation2 + $0x48] sm:$0x1] %vm227, 0.0
      %237 = vst.msk [vmem:[#allocation2 + $0x50] sm:$0xff] %vm225, 0.0
      %238 = vst.msk [vmem:[#allocation2 + $0x58] sm:$0x1] %vm227, 0.0
      %239 = vst.msk [vmem:[#allocation2 + $0x60] sm:$0xff] %vm225, 0.0
      %240 = vst.msk [vmem:[#allocation2 + $0x68] sm:$0x1] %vm227, 0.0
      %241 = vst.msk [vmem:[#allocation2 + $0x70] sm:$0xff] %vm225, 0.0
      %242 = vst.msk [vmem:[#allocation2 + $0x78] sm:$0x1] %vm227, 0.0
      %243 = vst.msk [vmem:[#allocation2 + $0x80] sm:$0xff] %vm225, 0.0
      %244 = vst.msk [vmem:[#allocation2 + $0x88] sm:$0x1] %vm227, 0.0
      %v245 = vld [vmem:[%s219] sm:$0xff]
      %v246 = vld [vmem:[%s219 + $0x8] sm:$0xff]
      %v247 = vld [vmem:[%s219 + $0x10] sm:$0xff]
      %v248 = vld [vmem:[%s219 + $0x18] sm:$0xff]
      %v249 = vld [vmem:[%s219 + $0x20] sm:$0xff]
      %v250 = vld [vmem:[%s219 + $0x28] sm:$0xff]
      %v251 = vld [vmem:[%s219 + $0x30] sm:$0xff]
      %v252 = vld [vmem:[%s219 + $0x38] sm:$0xff]
      %vm253 = vcmp.gt.f32.partialorder %v245, 0.0
      %vm254 = vcmp.gt.f32.partialorder %v246, 0.0
      %vm255 = vcmp.gt.f32.partialorder %v247, 0.0
      %vm256 = vcmp.gt.f32.partialorder %v248, 0.0
      %vm257 = vcmp.gt.f32.partialorder %v249, 0.0
      %vm258 = vcmp.gt.f32.partialorder %v250, 0.0
      %vm259 = vcmp.gt.f32.partialorder %v251, 0.0
      %vm260 = vcmp.gt.f32.partialorder %v252, 0.0
      %v261 = vmin.f32 %v245, 0.0
      %v262 = vmin.f32 %v246, 0.0
      %v263 = vmin.f32 %v247, 0.0
      %v264 = vmin.f32 %v248, 0.0
      %v265 = vmin.f32 %v249, 0.0
      %v266 = vmin.f32 %v250, 0.0
      %v267 = vmin.f32 %v251, 0.0
      %v268 = vmin.f32 %v252, 0.0
      %v269 = vmul.f32 %v261, 1.442695
      %v270 = vpow.pop %v269
      %v271 = vmul.f32 %v262, 1.442695
      %v272 = vpow.pop %v271
      %v273 = vmul.f32 %v263, 1.442695
      %v274 = vpow.pop %v273
      %v275 = vmul.f32 %v264, 1.442695
      %v276 = vpow.pop %v275
      %v277 = vmul.f32 %v265, 1.442695
      %v278 = vpow.pop %v277
      %v279 = vmul.f32 %v266, 1.442695
      %v280 = vpow.pop %v279
      %v281 = vmul.f32 %v267, 1.442695
      %v282 = vpow.pop %v281
      %v283 = vmul.f32 %v268, 1.442695
      %v284 = vpow.pop %v283
      %v285 = vsub.f32 %v270, 1.0
      %v286 = vsub.f32 %v272, 1.0
      %v287 = vsub.f32 %v274, 1.0
      %v288 = vsub.f32 %v276, 1.0
      %v289 = vsub.f32 %v278, 1.0
      %v290 = vsub.f32 %v280, 1.0
      %v291 = vsub.f32 %v282, 1.0
      %v292 = vsub.f32 %v284, 1.0
      %v293 = vsel %vm253, %v245, %v285
      %v294 = vsel %vm254, %v246, %v286
      %v295 = vsel %vm255, %v247, %v287
      %v296 = vsel %vm256, %v248, %v288
      %v297 = vsel %vm257, %v249, %v289
      %v298 = vsel %vm258, %v250, %v290
      %v299 = vsel %vm259, %v251, %v291
      %v300 = vsel %vm260, %v252, %v292
      %s301 = scalar_lea.vmem [#allocation2], 16
      %302 = vst.msk [vmem:[%s301 + $0x1] sm:$0xff] %vm225, %v293
      %303 = vst.msk [vmem:[%s301 + $0x11] sm:$0xff] %vm225, %v294
      %304 = vst.msk [vmem:[%s301 + $0x21] sm:$0xff] %vm225, %v295
      %305 = vst.msk [vmem:[%s301 + $0x31] sm:$0xff] %vm225, %v296
      %306 = vst.msk [vmem:[%s301 + $0x41] sm:$0xff] %vm225, %v297
      %307 = vst.msk [vmem:[%s301 + $0x51] sm:$0xff] %vm225, %v298
      %308 = vst.msk [vmem:[%s301 + $0x61] sm:$0xff] %vm225, %v299
      %309 = vst.msk [vmem:[%s301 + $0x71] sm:$0xff] %vm225, %v300
      %v310 = vld [vmem:[#allocation2] sm:$0xff]
      %v311 = vld [vmem:[#allocation2 + $0x8] sm:$0x1]
      %v312 = vld [vmem:[#allocation2 + $0x10] sm:$0xff]
      %v313 = vld [vmem:[#allocation2 + $0x18] sm:$0x1]
      %v314 = vld [vmem:[#allocation2 + $0x20] sm:$0xff]
      %v315 = vld [vmem:[#allocation2 + $0x28] sm:$0x1]
      %v316 = vld [vmem:[#allocation2 + $0x30] sm:$0xff]
      %v317 = vld [vmem:[#allocation2 + $0x38] sm:$0x1]
      %v318 = vld [vmem:[#allocation2 + $0x40] sm:$0xff]
      %v319 = vld [vmem:[#allocation2 + $0x48] sm:$0x1]
      %v320 = vld [vmem:[#allocation2 + $0x50] sm:$0xff]
      %v321 = vld [vmem:[#allocation2 + $0x58] sm:$0x1]
      %v322 = vld [vmem:[#allocation2 + $0x60] sm:$0xff]
      %v323 = vld [vmem:[#allocation2 + $0x68] sm:$0x1]
      %v324 = vld [vmem:[#allocation2 + $0x70] sm:$0xff]
      %v325 = vld [vmem:[#allocation2 + $0x78] sm:$0x1]
      %v326 = vld [vmem:[#allocation2 + $0x80] sm:$0xff]
      %v327 = vld [vmem:[#allocation2 + $0x88] sm:$0x1]
      %vm344 = vcmask 1046528
      %v345 = vrot.slane %v310, 1
      %v346 = vrot.slane %v311, 1
      %v347 = vsel %vm344, %v345, %v346
      %v348 = vrot.slane %v312, 1
      %v349 = vrot.slane %v313, 1
      %v350 = vsel %vm344, %v348, %v349
      %v351 = vrot.slane %v314, 1
      %v352 = vrot.slane %v315, 1
      %v353 = vsel %vm344, %v351, %v352
      %v354 = vrot.slane %v316, 1
      %v355 = vrot.slane %v317, 1
      %v356 = vsel %vm344, %v354, %v355
      %v357 = vrot.slane %v318, 1
      %v358 = vrot.slane %v319, 1
      %v359 = vsel %vm344, %v357, %v358
      %v360 = vrot.slane %v320, 1
      %v361 = vrot.slane %v321, 1
      %v362 = vsel %vm344, %v360, %v361
      %v363 = vrot.slane %v322, 1
      %v364 = vrot.slane %v323, 1
      %v365 = vsel %vm344, %v363, %v364
      %v366 = vrot.slane %v324, 1
      %v367 = vrot.slane %v325, 1
      %v368 = vsel %vm344, %v366, %v367
      %v371 = vrot.slane %v326, 1
      %v372 = vrot.slane %v327, 1
      %v373 = vsel %vm344, %v371, %v372
      %374 = vrot.lane.b32.xlu0 %v347, 32
      %v375 = vpop.permute.xlu0 %374
      %376 = vrot.lane.b32.xlu0 %v350, 32
      %v377 = vpop.permute.xlu0 %376
      %378 = vrot.lane.b32.xlu0 %v353, 32
      %v379 = vpop.permute.xlu0 %378
      %380 = vrot.lane.b32.xlu0 %v356, 32
      %v381 = vpop.permute.xlu0 %380
      %382 = vrot.lane.b32.xlu0 %v359, 32
      %v383 = vpop.permute.xlu0 %382
      %384 = vrot.lane.b32.xlu0 %v362, 32
      %v385 = vpop.permute.xlu0 %384
      %386 = vrot.lane.b32.xlu0 %v365, 32
      %v387 = vpop.permute.xlu0 %386
      %388 = vrot.lane.b32.xlu0 %v368, 32
      %v389 = vpop.permute.xlu0 %388
      %398 = vrot.lane.b32.xlu0 %v312, 64
      %v399 = vpop.permute.xlu0 %398
      %400 = vrot.lane.b32.xlu0 %v314, 64
      %v401 = vpop.permute.xlu0 %400
      %402 = vrot.lane.b32.xlu0 %v316, 64
      %v403 = vpop.permute.xlu0 %402
      %404 = vrot.lane.b32.xlu0 %v318, 64
      %v405 = vpop.permute.xlu0 %404
      %406 = vrot.lane.b32.xlu0 %v320, 64
      %v407 = vpop.permute.xlu0 %406
      %408 = vrot.lane.b32.xlu0 %v322, 64
      %v409 = vpop.permute.xlu0 %408
      %410 = vrot.lane.b32.xlu0 %v324, 64
      %v411 = vpop.permute.xlu0 %410
      %412 = vrot.lane.b32.xlu0 %v326, 64
      %v413 = vpop.permute.xlu0 %412
      %422 = vrot.lane.b32.xlu0 %v350, 96
      %v423 = vpop.permute.xlu0 %422
      %424 = vrot.lane.b32.xlu0 %v353, 96
      %v425 = vpop.permute.xlu0 %424
      %426 = vrot.lane.b32.xlu0 %v356, 96
      %v427 = vpop.permute.xlu0 %426
      %428 = vrot.lane.b32.xlu0 %v359, 96
      %v429 = vpop.permute.xlu0 %428
      %430 = vrot.lane.b32.xlu0 %v362, 96
      %v431 = vpop.permute.xlu0 %430
      %432 = vrot.lane.b32.xlu0 %v365, 96
      %v433 = vpop.permute.xlu0 %432
      %434 = vrot.lane.b32.xlu0 %v368, 96
      %v435 = vpop.permute.xlu0 %434
      %436 = vrot.lane.b32.xlu0 %v373, 96
      %v437 = vpop.permute.xlu0 %436
      %v446 = vsel %vm225, %v310, %v375
      %v447 = vsel %vm225, %v312, %v377
      %v448 = vsel %vm225, %v314, %v379
      %v449 = vsel %vm225, %v316, %v381
      %v450 = vsel %vm225, %v318, %v383
      %v451 = vsel %vm225, %v320, %v385
      %v452 = vsel %vm225, %v322, %v387
      %v453 = vsel %vm225, %v324, %v389
      %vm454 = vcmask 523264
      %v455 = vsel %vm454, %v446, %v399
      %v456 = vsel %vm454, %v447, %v401
      %v457 = vsel %vm454, %v448, %v403
      %v458 = vsel %vm454, %v449, %v405
      %v459 = vsel %vm454, %v450, %v407
      %v460 = vsel %vm454, %v451, %v409
      %v461 = vsel %vm454, %v452, %v411
      %v462 = vsel %vm454, %v453, %v413
      %vm463 = vcmask 785408
      %v464 = vsel %vm463, %v455, %v423
      %v465 = vsel %vm463, %v456, %v425
      %v466 = vsel %vm463, %v457, %v427
      %v467 = vsel %vm463, %v458, %v429
      %v468 = vsel %vm463, %v459, %v431
      %v469 = vsel %vm463, %v460, %v433
      %v470 = vsel %vm463, %v461, %v435
      %v471 = vsel %vm463, %v462, %v437
      %v472 = vld [vmem:[%s1] sm:$0xf]
      %v473 = vld [vmem:[%s1 + $0x4] sm:$0xf]
      %v474 = vld [vmem:[%s1 + $0x8] sm:$0xf]
      %v475 = vld [vmem:[%s1 + $0xc] sm:$0xf]
      %v476 = vld [vmem:[%s1 + $0x10] sm:$0xf]
      %v477 = vld [vmem:[%s1 + $0x14] sm:$0xf]
      %v478 = vld [vmem:[%s1 + $0x18] sm:$0xf]
      %v479 = vld [vmem:[%s1 + $0x1c] sm:$0xf]
      %v480 = vld [vmem:[%s1 + $0x20] sm:$0xf]
      %v481 = vld [vmem:[%s1 + $0x24] sm:$0xf]
      %v482 = vld [vmem:[%s1 + $0x28] sm:$0xf]
      %v483 = vld [vmem:[%s1 + $0x2c] sm:$0xf]
      %v484 = vld [vmem:[%s1 + $0x30] sm:$0xf]
      %v485 = vld [vmem:[%s1 + $0x34] sm:$0xf]
      %v486 = vld [vmem:[%s1 + $0x38] sm:$0xf]
      %v487 = vld [vmem:[%s1 + $0x3c] sm:$0xf]
      %v488 = vpack.c.bf16 %v465, %v464
      %v489 = vpack.c.bf16 %v467, %v466
      %v490 = vpack.c.bf16 %v469, %v468
      %v491 = vpack.c.bf16 %v471, %v470
      %v492 = vld [vmem:[%s2] sm:$0x1]
      %v494 = vperm.slane %v492, 0
      %v512 = vunpack.c.l.b16 %v472
      %v513 = vunpack.c.l.b16 %v473
      %v514 = vunpack.c.l.b16 %v474
      %v515 = vunpack.c.l.b16 %v475
      %v516 = vunpack.c.l.b16 %v476
      %v517 = vunpack.c.l.b16 %v477
      %v518 = vunpack.c.l.b16 %v478
      %v519 = vunpack.c.l.b16 %v479
      %v520 = vunpack.c.l.b16 %v480
      %v521 = vunpack.c.l.b16 %v481
      %v522 = vunpack.c.l.b16 %v482
      %v523 = vunpack.c.l.b16 %v483
      %v524 = vunpack.c.l.b16 %v484
      %v525 = vunpack.c.l.b16 %v485
      %v526 = vunpack.c.l.b16 %v486
      %v527 = vunpack.c.l.b16 %v487
      %v528 = vpack.c.b16 %v513, %v512
      %v529 = vpack.c.b16 %v515, %v514
      %v530 = vpack.c.b16 %v517, %v516
      %v531 = vpack.c.b16 %v519, %v518
      %v532 = vpack.c.b16 %v521, %v520
      %v533 = vpack.c.b16 %v523, %v522
      %v534 = vpack.c.b16 %v525, %v524
      %v535 = vpack.c.b16 %v527, %v526
      %544 = vmatpush.bf16.msra.mxu0 %v535
      %545 = vmatpush.bf16.msra.mxu0 %v534
      %546 = vmatpush.bf16.msra.mxu0 %v533
      %547 = vmatpush.bf16.msra.mxu0 %v532
      %548 = vmatpush.bf16.msra.mxu0 %v531
      %549 = vmatpush.bf16.msra.mxu0 %v530
      %550 = vmatpush.bf16.msra.mxu0 %v529
      %551 = vmatpush.bf16.msra.mxu0 %v528
      %552 = vmatmul.bf16.gmra.mxu0 %v488
      %v553 = vpop.f32.mrf.mxu0
      %v554 = vadd.f32 %v494, %v553
      %v555 = vpop.f32.mrf.mxu0
      %v556 = vadd.f32 %v494, %v555
      %557 = vmatmul.bf16.gmra.mxu0 %v489
      %v558 = vpop.f32.mrf.mxu0
      %v559 = vadd.f32 %v494, %v558
      %v560 = vpop.f32.mrf.mxu0
      %v561 = vadd.f32 %v494, %v560
      %562 = vmatmul.bf16.gmra.mxu0 %v490
      %v563 = vpop.f32.mrf.mxu0
      %v564 = vadd.f32 %v494, %v563
      %v565 = vpop.f32.mrf.mxu0
      %v566 = vadd.f32 %v494, %v565
      %567 = vmatmul.bf16.gmra.mxu0 %v491
      %v568 = vpop.f32.mrf.mxu0
      %v569 = vadd.f32 %v494, %v568
      %v570 = vpop.f32.mrf.mxu0
      %v571 = vadd.f32 %v494, %v570
      %572 = vdwg.mxu0
      %vm573 = vcmp.gt.f32.partialorder %v554, 0.0
      %vm574 = vcmp.gt.f32.partialorder %v556, 0.0
      %vm575 = vcmp.gt.f32.partialorder %v559, 0.0
      %vm576 = vcmp.gt.f32.partialorder %v561, 0.0
      %vm577 = vcmp.gt.f32.partialorder %v564, 0.0
      %vm578 = vcmp.gt.f32.partialorder %v566, 0.0
      %vm579 = vcmp.gt.f32.partialorder %v569, 0.0
      %vm580 = vcmp.gt.f32.partialorder %v571, 0.0
      %v581 = vmin.f32 %v554, 0.0
      %v582 = vmin.f32 %v556, 0.0
      %v583 = vmin.f32 %v559, 0.0
      %v584 = vmin.f32 %v561, 0.0
      %v585 = vmin.f32 %v564, 0.0
      %v586 = vmin.f32 %v566, 0.0
      %v587 = vmin.f32 %v569, 0.0
      %v588 = vmin.f32 %v571, 0.0
      %v589 = vmul.f32 %v581, 1.442695
      %v590 = vpow.pop %v589
      %v591 = vmul.f32 %v582, 1.442695
      %v592 = vpow.pop %v591
      %v593 = vmul.f32 %v583, 1.442695
      %v594 = vpow.pop %v593
      %v595 = vmul.f32 %v584, 1.442695
      %v596 = vpow.pop %v595
      %v597 = vmul.f32 %v585, 1.442695
      %v598 = vpow.pop %v597
      %v599 = vmul.f32 %v586, 1.442695
      %v600 = vpow.pop %v599
      %v601 = vmul.f32 %v587, 1.442695
      %v602 = vpow.pop %v601
      %v603 = vmul.f32 %v588, 1.442695
      %v604 = vpow.pop %v603
      %v605 = vsub.f32 %v590, 1.0
      %v606 = vsub.f32 %v592, 1.0
      %v607 = vsub.f32 %v594, 1.0
      %v608 = vsub.f32 %v596, 1.0
      %v609 = vsub.f32 %v598, 1.0
      %v610 = vsub.f32 %v600, 1.0
      %v611 = vsub.f32 %v602, 1.0
      %v612 = vsub.f32 %v604, 1.0
      %v613 = vsel %vm573, %v554, %v605
      %v614 = vsel %vm574, %v556, %v606
      %v615 = vsel %vm575, %v559, %v607
      %v616 = vsel %vm576, %v561, %v608
      %v617 = vsel %vm577, %v564, %v609
      %v618 = vsel %vm578, %v566, %v610
      %v619 = vsel %vm579, %v569, %v611
      %v620 = vsel %vm580, %v571, %v612
      %621 = vst.msk [vmem:[%s301 + $0x1] sm:$0xff] %vm225, %v613
      %622 = vst.msk [vmem:[%s301 + $0x11] sm:$0xff] %vm225, %v614
      %623 = vst.msk [vmem:[%s301 + $0x21] sm:$0xff] %vm225, %v615
      %624 = vst.msk [vmem:[%s301 + $0x31] sm:$0xff] %vm225, %v616
      %625 = vst.msk [vmem:[%s301 + $0x41] sm:$0xff] %vm225, %v617
      %626 = vst.msk [vmem:[%s301 + $0x51] sm:$0xff] %vm225, %v618
      %627 = vst.msk [vmem:[%s301 + $0x61] sm:$0xff] %vm225, %v619
      %628 = vst.msk [vmem:[%s301 + $0x71] sm:$0xff] %vm225, %v620
      %v629 = vld [vmem:[#allocation2] sm:$0xff]
      %v630 = vld [vmem:[#allocation2 + $0x8] sm:$0x1]
      %v631 = vld [vmem:[#allocation2 + $0x10] sm:$0xff]
      %v632 = vld [vmem:[#allocation2 + $0x18] sm:$0x1]
      %v633 = vld [vmem:[#allocation2 + $0x20] sm:$0xff]
      %v634 = vld [vmem:[#allocation2 + $0x28] sm:$0x1]
      %v635 = vld [vmem:[#allocation2 + $0x30] sm:$0xff]
      %v636 = vld [vmem:[#allocation2 + $0x38] sm:$0x1]
      %v637 = vld [vmem:[#allocation2 + $0x40] sm:$0xff]
      %v638 = vld [vmem:[#allocation2 + $0x48] sm:$0x1]
      %v639 = vld [vmem:[#allocation2 + $0x50] sm:$0xff]
      %v640 = vld [vmem:[#allocation2 + $0x58] sm:$0x1]
      %v641 = vld [vmem:[#allocation2 + $0x60] sm:$0xff]
      %v642 = vld [vmem:[#allocation2 + $0x68] sm:$0x1]
      %v643 = vld [vmem:[#allocation2 + $0x70] sm:$0xff]
      %v644 = vld [vmem:[#allocation2 + $0x78] sm:$0x1]
      %v645 = vld [vmem:[#allocation2 + $0x80] sm:$0xff]
      %v646 = vld [vmem:[#allocation2 + $0x88] sm:$0x1]
      %v663 = vrot.slane %v629, 1
      %v664 = vrot.slane %v630, 1
      %v665 = vsel %vm344, %v663, %v664
      %v666 = vrot.slane %v631, 1
      %v667 = vrot.slane %v632, 1
      %v668 = vsel %vm344, %v666, %v667
      %v669 = vrot.slane %v633, 1
      %v670 = vrot.slane %v634, 1
      %v671 = vsel %vm344, %v669, %v670
      %v672 = vrot.slane %v635, 1
      %v673 = vrot.slane %v636, 1
      %v674 = vsel %vm344, %v672, %v673
      %v675 = vrot.slane %v637, 1
      %v676 = vrot.slane %v638, 1
      %v677 = vsel %vm344, %v675, %v676
      %v678 = vrot.slane %v639, 1
      %v679 = vrot.slane %v640, 1
      %v680 = vsel %vm344, %v678, %v679
      %v681 = vrot.slane %v641, 1
      %v682 = vrot.slane %v642, 1
      %v683 = vsel %vm344, %v681, %v682
      %v684 = vrot.slane %v643, 1
      %v685 = vrot.slane %v644, 1
      %v686 = vsel %vm344, %v684, %v685
      %v689 = vrot.slane %v645, 1
      %v690 = vrot.slane %v646, 1
      %v691 = vsel %vm344, %v689, %v690
      %692 = vrot.lane.b32.xlu0 %v665, 32
      %v693 = vpop.permute.xlu0 %692
      %694 = vrot.lane.b32.xlu0 %v668, 32
      %v695 = vpop.permute.xlu0 %694
      %696 = vrot.lane.b32.xlu0 %v671, 32
      %v697 = vpop.permute.xlu0 %696
      %698 = vrot.lane.b32.xlu0 %v674, 32
      %v699 = vpop.permute.xlu0 %698
      %700 = vrot.lane.b32.xlu0 %v677, 32
      %v701 = vpop.permute.xlu0 %700
      %702 = vrot.lane.b32.xlu0 %v680, 32
      %v703 = vpop.permute.xlu0 %702
      %704 = vrot.lane.b32.xlu0 %v683, 32
      %v705 = vpop.permute.xlu0 %704
      %706 = vrot.lane.b32.xlu0 %v686, 32
      %v707 = vpop.permute.xlu0 %706
      %716 = vrot.lane.b32.xlu0 %v631, 64
      %v717 = vpop.permute.xlu0 %716
      %718 = vrot.lane.b32.xlu0 %v633, 64
      %v719 = vpop.permute.xlu0 %718
      %720 = vrot.lane.b32.xlu0 %v635, 64
      %v721 = vpop.permute.xlu0 %720
      %722 = vrot.lane.b32.xlu0 %v637, 64
      %v723 = vpop.permute.xlu0 %722
      %724 = vrot.lane.b32.xlu0 %v639, 64
      %v725 = vpop.permute.xlu0 %724
      %726 = vrot.lane.b32.xlu0 %v641, 64
      %v727 = vpop.permute.xlu0 %726
      %728 = vrot.lane.b32.xlu0 %v643, 64
      %v729 = vpop.permute.xlu0 %728
      %730 = vrot.lane.b32.xlu0 %v645, 64
      %v731 = vpop.permute.xlu0 %730
      %740 = vrot.lane.b32.xlu0 %v668, 96
      %v741 = vpop.permute.xlu0 %740
      %742 = vrot.lane.b32.xlu0 %v671, 96
      %v743 = vpop.permute.xlu0 %742
      %744 = vrot.lane.b32.xlu0 %v674, 96
      %v745 = vpop.permute.xlu0 %744
      %746 = vrot.lane.b32.xlu0 %v677, 96
      %v747 = vpop.permute.xlu0 %746
      %748 = vrot.lane.b32.xlu0 %v680, 96
      %v749 = vpop.permute.xlu0 %748
      %750 = vrot.lane.b32.xlu0 %v683, 96
      %v751 = vpop.permute.xlu0 %750
      %752 = vrot.lane.b32.xlu0 %v686, 96
      %v753 = vpop.permute.xlu0 %752
      %754 = vrot.lane.b32.xlu0 %v691, 96
      %v755 = vpop.permute.xlu0 %754
      %v764 = vsel %vm225, %v629, %v693
      %v765 = vsel %vm225, %v631, %v695
      %v766 = vsel %vm225, %v633, %v697
      %v767 = vsel %vm225, %v635, %v699
      %v768 = vsel %vm225, %v637, %v701
      %v769 = vsel %vm225, %v639, %v703
      %v770 = vsel %vm225, %v641, %v705
      %v771 = vsel %vm225, %v643, %v707
      %v772 = vsel %vm454, %v764, %v717
      %v773 = vsel %vm454, %v765, %v719
      %v774 = vsel %vm454, %v766, %v721
      %v775 = vsel %vm454, %v767, %v723
      %v776 = vsel %vm454, %v768, %v725
      %v777 = vsel %vm454, %v769, %v727
      %v778 = vsel %vm454, %v770, %v729
      %v779 = vsel %vm454, %v771, %v731
      %v780 = vsel %vm463, %v772, %v741
      %v781 = vsel %vm463, %v773, %v743
      %v782 = vsel %vm463, %v774, %v745
      %v783 = vsel %vm463, %v775, %v747
      %v784 = vsel %vm463, %v776, %v749
      %v785 = vsel %vm463, %v777, %v751
      %v786 = vsel %vm463, %v778, %v753
      %v787 = vsel %vm463, %v779, %v755
      %v788 = vld [vmem:[%s3] sm:$0xf]
      %v789 = vld [vmem:[%s3 + $0x4] sm:$0xf]
      %v790 = vld [vmem:[%s3 + $0x8] sm:$0xf]
      %v791 = vld [vmem:[%s3 + $0xc] sm:$0xf]
      %v792 = vld [vmem:[%s3 + $0x10] sm:$0xf]
      %v793 = vld [vmem:[%s3 + $0x14] sm:$0xf]
      %v794 = vld [vmem:[%s3 + $0x18] sm:$0xf]
      %v795 = vld [vmem:[%s3 + $0x1c] sm:$0xf]
      %v796 = vld [vmem:[%s3 + $0x20] sm:$0xf]
      %v797 = vld [vmem:[%s3 + $0x24] sm:$0xf]
      %v798 = vld [vmem:[%s3 + $0x28] sm:$0xf]
      %v799 = vld [vmem:[%s3 + $0x2c] sm:$0xf]
      %v800 = vld [vmem:[%s3 + $0x30] sm:$0xf]
      %v801 = vld [vmem:[%s3 + $0x34] sm:$0xf]
      %v802 = vld [vmem:[%s3 + $0x38] sm:$0xf]
      %v803 = vld [vmem:[%s3 + $0x3c] sm:$0xf]
      %v804 = vpack.c.bf16 %v781, %v780
      %v805 = vpack.c.bf16 %v783, %v782
      %v806 = vpack.c.bf16 %v785, %v784
      %v807 = vpack.c.bf16 %v787, %v786
      %v808 = vld [vmem:[%s4] sm:$0x1]
      %v810 = vperm.slane %v808, 0
      %v828 = vunpack.c.l.b16 %v788
      %v829 = vunpack.c.l.b16 %v789
      %v830 = vunpack.c.l.b16 %v790
      %v831 = vunpack.c.l.b16 %v791
      %v832 = vunpack.c.l.b16 %v792
      %v833 = vunpack.c.l.b16 %v793
      %v834 = vunpack.c.l.b16 %v794
      %v835 = vunpack.c.l.b16 %v795
      %v836 = vunpack.c.l.b16 %v796
      %v837 = vunpack.c.l.b16 %v797
      %v838 = vunpack.c.l.b16 %v798
      %v839 = vunpack.c.l.b16 %v799
      %v840 = vunpack.c.l.b16 %v800
      %v841 = vunpack.c.l.b16 %v801
      %v842 = vunpack.c.l.b16 %v802
      %v843 = vunpack.c.l.b16 %v803
      %v844 = vpack.c.b16 %v829, %v828
      %v845 = vpack.c.b16 %v831, %v830
      %v846 = vpack.c.b16 %v833, %v832
      %v847 = vpack.c.b16 %v835, %v834
      %v848 = vpack.c.b16 %v837, %v836
      %v849 = vpack.c.b16 %v839, %v838
      %v850 = vpack.c.b16 %v841, %v840
      %v851 = vpack.c.b16 %v843, %v842
      %860 = vmatpush.bf16.msra.mxu0 %v851
      %861 = vmatpush.bf16.msra.mxu0 %v850
      %862 = vmatpush.bf16.msra.mxu0 %v849
      %863 = vmatpush.bf16.msra.mxu0 %v848
      %864 = vmatpush.bf16.msra.mxu0 %v847
      %865 = vmatpush.bf16.msra.mxu0 %v846
      %866 = vmatpush.bf16.msra.mxu0 %v845
      %867 = vmatpush.bf16.msra.mxu0 %v844
      %868 = vmatmul.bf16.gmra.mxu0 %v804
      %v869 = vpop.f32.mrf.mxu0
      %v870 = vadd.f32 %v810, %v869
      %v871 = vpop.f32.mrf.mxu0
      %v872 = vadd.f32 %v810, %v871
      %873 = vmatmul.bf16.gmra.mxu0 %v805
      %v874 = vpop.f32.mrf.mxu0
      %v875 = vadd.f32 %v810, %v874
      %v876 = vpop.f32.mrf.mxu0
      %v877 = vadd.f32 %v810, %v876
      %878 = vmatmul.bf16.gmra.mxu0 %v806
      %v879 = vpop.f32.mrf.mxu0
      %v880 = vadd.f32 %v810, %v879
      %v881 = vpop.f32.mrf.mxu0
      %v882 = vadd.f32 %v810, %v881
      %883 = vmatmul.bf16.gmra.mxu0 %v807
      %v884 = vpop.f32.mrf.mxu0
      %v885 = vadd.f32 %v810, %v884
      %v886 = vpop.f32.mrf.mxu0
      %v887 = vadd.f32 %v810, %v886
      %888 = vdwg.mxu0
      %v889 = vsub.f32 0.0, %v870
      %v890 = vsub.f32 0.0, %v872
      %v891 = vsub.f32 0.0, %v875
      %v892 = vsub.f32 0.0, %v877
      %v893 = vsub.f32 0.0, %v880
      %v894 = vsub.f32 0.0, %v882
      %v895 = vsub.f32 0.0, %v885
      %v896 = vsub.f32 0.0, %v887
      %v897 = vmul.f32 %v889, 1.442695
      %v898 = vpow.pop %v897
      %v899 = vmul.f32 %v890, 1.442695
      %v900 = vpow.pop %v899
      %v901 = vmul.f32 %v891, 1.442695
      %v902 = vpow.pop %v901
      %v903 = vmul.f32 %v892, 1.442695
      %v904 = vpow.pop %v903
      %v905 = vmul.f32 %v893, 1.442695
      %v906 = vpow.pop %v905
      %v907 = vmul.f32 %v894, 1.442695
      %v908 = vpow.pop %v907
      %v909 = vmul.f32 %v895, 1.442695
      %v910 = vpow.pop %v909
      %v911 = vmul.f32 %v896, 1.442695
      %v912 = vpow.pop %v911
      %v913 = vadd.f32 %v898, 1.0
      %v914 = vadd.f32 %v900, 1.0
      %v915 = vadd.f32 %v902, 1.0
      %v916 = vadd.f32 %v904, 1.0
      %v917 = vadd.f32 %v906, 1.0
      %v918 = vadd.f32 %v908, 1.0
      %v919 = vadd.f32 %v910, 1.0
      %v920 = vadd.f32 %v912, 1.0
      %v921 = vrcp.pop %v913
      %v922 = vmul.f32 %v913, %v921
      %v923 = vsub.f32 1.0, %v922
      %v924 = vmul.f32 %v921, %v923
      %v925 = vadd.f32 %v921, %v924
      %vm926 = vweird.f32 %v913
      %vm927 = vweird.f32 %v921
      %vm928 = vmor %vm926, %vm927
      %v929 = vsel %vm928, %v921, %v925
      %v930 = vand.u32 2147483647, %v913
      %vm931 = vcmp.eq.f32.partialorder %v930, 8.507059e+37
      %v932 = vand.u32 %v913, 2147483648
      %v933 = vor.u32 1.1754944e-38, %v932
      %v934 = vsel %vm931, %v933, %v929
      %v935 = vmul.f32 1.0, %v934
      %v936 = vrcp.pop %v914
      %v937 = vmul.f32 %v914, %v936
      %v938 = vsub.f32 1.0, %v937
      %v939 = vmul.f32 %v936, %v938
      %v940 = vadd.f32 %v936, %v939
      %vm941 = vweird.f32 %v914
      %vm942 = vweird.f32 %v936
      %vm943 = vmor %vm941, %vm942
      %v944 = vsel %vm943, %v936, %v940
      %v945 = vand.u32 2147483647, %v914
      %vm946 = vcmp.eq.f32.partialorder %v945, 8.507059e+37
      %v947 = vand.u32 %v914, 2147483648
      %v948 = vor.u32 1.1754944e-38, %v947
      %v949 = vsel %vm946, %v948, %v944
      %v950 = vmul.f32 1.0, %v949
      %v951 = vrcp.pop %v915
      %v952 = vmul.f32 %v915, %v951
      %v953 = vsub.f32 1.0, %v952
      %v954 = vmul.f32 %v951, %v953
      %v955 = vadd.f32 %v951, %v954
      %vm956 = vweird.f32 %v915
      %vm957 = vweird.f32 %v951
      %vm958 = vmor %vm956, %vm957
      %v959 = vsel %vm958, %v951, %v955
      %v960 = vand.u32 2147483647, %v915
      %vm961 = vcmp.eq.f32.partialorder %v960, 8.507059e+37
      %v962 = vand.u32 %v915, 2147483648
      %v963 = vor.u32 1.1754944e-38, %v962
      %v964 = vsel %vm961, %v963, %v959
      %v965 = vmul.f32 1.0, %v964
      %v966 = vrcp.pop %v916
      %v967 = vmul.f32 %v916, %v966
      %v968 = vsub.f32 1.0, %v967
      %v969 = vmul.f32 %v966, %v968
      %v970 = vadd.f32 %v966, %v969
      %vm971 = vweird.f32 %v916
      %vm972 = vweird.f32 %v966
      %vm973 = vmor %vm971, %vm972
      %v974 = vsel %vm973, %v966, %v970
      %v975 = vand.u32 2147483647, %v916
      %vm976 = vcmp.eq.f32.partialorder %v975, 8.507059e+37
      %v977 = vand.u32 %v916, 2147483648
      %v978 = vor.u32 1.1754944e-38, %v977
      %v979 = vsel %vm976, %v978, %v974
      %v980 = vmul.f32 1.0, %v979
      %v981 = vrcp.pop %v917
      %v982 = vmul.f32 %v917, %v981
      %v983 = vsub.f32 1.0, %v982
      %v984 = vmul.f32 %v981, %v983
      %v985 = vadd.f32 %v981, %v984
      %vm986 = vweird.f32 %v917
      %vm987 = vweird.f32 %v981
      %vm988 = vmor %vm986, %vm987
      %v989 = vsel %vm988, %v981, %v985
      %v990 = vand.u32 2147483647, %v917
      %vm991 = vcmp.eq.f32.partialorder %v990, 8.507059e+37
      %v992 = vand.u32 %v917, 2147483648
      %v993 = vor.u32 1.1754944e-38, %v992
      %v994 = vsel %vm991, %v993, %v989
      %v995 = vmul.f32 1.0, %v994
      %v996 = vrcp.pop %v918
      %v997 = vmul.f32 %v918, %v996
      %v998 = vsub.f32 1.0, %v997
      %v999 = vmul.f32 %v996, %v998
      %v1000 = vadd.f32 %v996, %v999
      %vm1001 = vweird.f32 %v918
      %vm1002 = vweird.f32 %v996
      %vm1003 = vmor %vm1001, %vm1002
      %v1004 = vsel %vm1003, %v996, %v1000
      %v1005 = vand.u32 2147483647, %v918
      %vm1006 = vcmp.eq.f32.partialorder %v1005, 8.507059e+37
      %v1007 = vand.u32 %v918, 2147483648
      %v1008 = vor.u32 1.1754944e-38, %v1007
      %v1009 = vsel %vm1006, %v1008, %v1004
      %v1010 = vmul.f32 1.0, %v1009
      %v1011 = vrcp.pop %v919
      %v1012 = vmul.f32 %v919, %v1011
      %v1013 = vsub.f32 1.0, %v1012
      %v1014 = vmul.f32 %v1011, %v1013
      %v1015 = vadd.f32 %v1011, %v1014
      %vm1016 = vweird.f32 %v919
      %vm1017 = vweird.f32 %v1011
      %vm1018 = vmor %vm1016, %vm1017
      %v1019 = vsel %vm1018, %v1011, %v1015
      %v1020 = vand.u32 2147483647, %v919
      %vm1021 = vcmp.eq.f32.partialorder %v1020, 8.507059e+37
      %v1022 = vand.u32 %v919, 2147483648
      %v1023 = vor.u32 1.1754944e-38, %v1022
      %v1024 = vsel %vm1021, %v1023, %v1019
      %v1025 = vmul.f32 1.0, %v1024
      %v1026 = vrcp.pop %v920
      %v1027 = vmul.f32 %v920, %v1026
      %v1028 = vsub.f32 1.0, %v1027
      %v1029 = vmul.f32 %v1026, %v1028
      %v1030 = vadd.f32 %v1026, %v1029
      %vm1031 = vweird.f32 %v920
      %vm1032 = vweird.f32 %v1026
      %vm1033 = vmor %vm1031, %vm1032
      %v1034 = vsel %vm1033, %v1026, %v1030
      %v1035 = vand.u32 2147483647, %v920
      %vm1036 = vcmp.eq.f32.partialorder %v1035, 8.507059e+37
      %v1037 = vand.u32 %v920, 2147483648
      %v1038 = vor.u32 1.1754944e-38, %v1037
      %v1039 = vsel %vm1036, %v1038, %v1034
      %v1040 = vmul.f32 1.0, %v1039
      %1049 = vrot.lane.b32.xlu0 %v935, 96
      %v1050 = vpop.permute.xlu0 %1049
      %1051 = vrot.lane.b32.xlu0 %v950, 96
      %v1052 = vpop.permute.xlu0 %1051
      %1053 = vrot.lane.b32.xlu0 %v965, 96
      %v1054 = vpop.permute.xlu0 %1053
      %1055 = vrot.lane.b32.xlu0 %v980, 96
      %v1056 = vpop.permute.xlu0 %1055
      %1057 = vrot.lane.b32.xlu0 %v995, 96
      %v1058 = vpop.permute.xlu0 %1057
      %1059 = vrot.lane.b32.xlu0 %v1010, 96
      %v1060 = vpop.permute.xlu0 %1059
      %1061 = vrot.lane.b32.xlu0 %v1025, 96
      %v1062 = vpop.permute.xlu0 %1061
      %1063 = vrot.lane.b32.xlu0 %v1040, 96
      %v1064 = vpop.permute.xlu0 %1063
      %v1073 = vmul.f32 %v870, %v1050
      %v1074 = vmul.f32 %v872, %v1052
      %v1075 = vmul.f32 %v875, %v1054
      %v1076 = vmul.f32 %v877, %v1056
      %v1077 = vmul.f32 %v880, %v1058
      %v1078 = vmul.f32 %v882, %v1060
      %v1079 = vmul.f32 %v885, %v1062
      %v1080 = vmul.f32 %v887, %v1064
      %v1081 = vadd.f32 %v293, %v1073
      %v1082 = vadd.f32 %v294, %v1074
      %v1083 = vadd.f32 %v295, %v1075
      %v1084 = vadd.f32 %v296, %v1076
      %v1085 = vadd.f32 %v297, %v1077
      %v1086 = vadd.f32 %v298, %v1078
      %v1087 = vadd.f32 %v299, %v1079
      %v1088 = vadd.f32 %v300, %v1080
      %1089 = vst.msk [vmem:[%s224] sm:$0xff] %vm225, %v1081
      %1090 = vst.msk [vmem:[%s224 + $0x8] sm:$0xff] %vm225, %v1082
      %1091 = vst.msk [vmem:[%s224 + $0x10] sm:$0xff] %vm225, %v1083
      %1092 = vst.msk [vmem:[%s224 + $0x18] sm:$0xff] %vm225, %v1084
      %1093 = vst.msk [vmem:[%s224 + $0x20] sm:$0xff] %vm225, %v1085
      %1094 = vst.msk [vmem:[%s224 + $0x28] sm:$0xff] %vm225, %v1086
      %1095 = vst.msk [vmem:[%s224 + $0x30] sm:$0xff] %vm225, %v1087
      %1096 = vst.msk [vmem:[%s224 + $0x38] sm:$0xff] %vm225, %v1088
      %p1097 = scmp.lt.s32.totalorder %s16, 1
      %s1098 = scalar_select %p1097, %s16, 1
      %s1099 = smul.addr %s1098, 8
      %s1100 = smul.addr %s1099, 8
      %s1101 = scalar_lea.vmem %s5, %s1100
      // Predicated region
      $region41: #{pixel_snail_forward.7} parent=39 // pred_check
        %p1102 = pneg %p144
      $region42: #{pixel_snail_forward.7} parent=39 // pred_check_branch
        %1104 = sbr.rel (%p1102) target = $region44
      $region43: #{pixel_snail_forward.7} parent=39 // pred_region
        _
      $region44: #{pixel_snail_forward.7} parent=39 // pred_fallthru
        _
    $region40: #{pixel_snail_forward.7} parent=5 // pred_fallthru
      _
    %p1105 = scmp.le.s32.totalorder 2, %s11
    // Predicated region
    $region45: #{pixel_snail_forward.7} parent=5 // pred_check
      %p1106 = pneg %p1105
    $region46: #{pixel_snail_forward.7} parent=5 // pred_check_branch
      %1108 = sbr.rel (%p1106) target = $region48
    $region47: #{pixel_snail_forward.7} parent=5 // pred_region
      %s1109 = ssub.s32 %s11, 2
      // Predicated region
      $region49: #{pixel_snail_forward.7} parent=47 // pred_check
        %p1110 = pneg %p150
      $region50: #{pixel_snail_forward.7} parent=47 // pred_check_branch
        %1112 = sbr.rel (%p1110) target = $region52
      $region51: #{pixel_snail_forward.7} parent=47 // pred_region
        %p1113 = scmp.lt.s32.totalorder %s17, 1
        %s1114 = scalar_select %p1113, %s17, 1
        %s1115 = smul.addr %s1114, 8
        %s1116 = smul.addr %s1115, 8
        %s1117 = scalar_lea.vmem %s5, %s1116
      $region52: #{pixel_snail_forward.7} parent=47 // pred_fallthru
        _
    $region48: #{pixel_snail_forward.7} parent=5 // pred_fallthru
      _
  $region6: #{pixel_snail_forward.7} parent=0 // loop_footer
    %s15 = sadd.s32 1, %s11
  $region7: #{pixel_snail_forward.7} parent=0 // loop_footer_branch
    %10 = sbr.rel target = $region3
  $region8: #{pixel_snail_forward.7} parent=0 // loop_exit
    _

// kernel: pixel_snail_forward.11
$region0: #{pixel_snail_forward.11}
  #allocation0 [shape = 'u32[]', space=smem, size = 0x4, offset = 0x4, fixed_abs, tag = 'smem constant byte address 0x4 - core index']
  #allocation1 [shape = 'u32[72,128]{1,0:T(1,128)}', space=vmem, size = 0x9000, scoped, tag = 'internal scratch']
  #allocation2 [shape = 'f32[1,1]{1,0:T(1,128)S(1)}', space=vmem, size = 0x200, scoped, tag = 'scoped memory for pixel_snail_forward.11']
  %s0 = inlined_call_operand.vmem [shape: f32[128,32], index: 0, kind: input, shape index: {}]
  %s1 = inlined_call_operand.vmem [shape: bf16[32,1], index: 1, kind: input, shape index: {}]
  %s2 = inlined_call_operand.<no memory space> [shape: f32[1,1], index: 2, kind: input, shape index: {}]
  %s3 = inlined_call_operand.vmem [shape: f32[128,1], index: 3, kind: input, shape index: {}]
  %s4 = inlined_call_operand.vmem [shape: f32[128,1], index: 4, kind: output, shape index: {0}]
  %s5 = inlined_call_operand.vmem [shape: f32[128,1], index: 5, kind: output, shape index: {1}]
  %6 = xla_tuple %s4, %s5
  %s7 = sld [smem:[#allocation0]]
  $region34: #{pixel_snail_forward.11} parent=0
    _
  %s9 = ssub.s32 1, %s7
  %s10 = scalar_select 0, %s9, %s7
  %v11 = vstv %s2
  %12 = vst [vmem:[#allocation2] sm:$0x1] %v11
  // Predicated region
  $region2: #{pixel_snail_forward.11} parent=0 // pred_check
    _
  $region3: #{pixel_snail_forward.11} parent=0 // pred_check_branch
    %14 = sbr.rel (0) target = $region5
  $region4: #{pixel_snail_forward.11} parent=0 // pred_region
    _
  $region5: #{pixel_snail_forward.11} parent=0 // pred_fallthru
    _
  // Predicated region
  $region6: #{pixel_snail_forward.11} parent=0 // pred_check
    _
  $region7: #{pixel_snail_forward.11} parent=0 // pred_check_branch
    %16 = sbr.rel (0) target = $region9
  $region8: #{pixel_snail_forward.11} parent=0 // pred_region
    _
  $region9: #{pixel_snail_forward.11} parent=0 // pred_fallthru
    _
  // Predicated region
  $region10: #{pixel_snail_forward.11} parent=0 // pred_check
    _
  $region11: #{pixel_snail_forward.11} parent=0 // pred_check_branch
    %18 = sbr.rel (0) target = $region13
  $region12: #{pixel_snail_forward.11} parent=0 // pred_region
    _
  $region13: #{pixel_snail_forward.11} parent=0 // pred_fallthru
    _
  // Predicated region
  $region14: #{pixel_snail_forward.11} parent=0 // pred_check
    _
  $region15: #{pixel_snail_forward.11} parent=0 // pred_check_branch
    %20 = sbr.rel (0) target = $region17
  $region16: #{pixel_snail_forward.11} parent=0 // pred_region
    _
  $region17: #{pixel_snail_forward.11} parent=0 // pred_fallthru
    _
  %v22 = vld [vmem:[%s0] sm:$0xff]
  %v23 = vld [vmem:[%s0 + $0x8] sm:$0xff]
  %v24 = vld [vmem:[%s0 + $0x10] sm:$0xff]
  %v25 = vld [vmem:[%s0 + $0x18] sm:$0xff]
  %v26 = vld [vmem:[%s0 + $0x20] sm:$0xff]
  %v27 = vld [vmem:[%s0 + $0x28] sm:$0xff]
  %v28 = vld [vmem:[%s0 + $0x30] sm:$0xff]
  %v29 = vld [vmem:[%s0 + $0x38] sm:$0xff]
  %v30 = vld [vmem:[%s0 + $0x40] sm:$0xff]
  %v31 = vld [vmem:[%s0 + $0x48] sm:$0xff]
  %v32 = vld [vmem:[%s0 + $0x50] sm:$0xff]
  %v33 = vld [vmem:[%s0 + $0x58] sm:$0xff]
  %v34 = vld [vmem:[%s0 + $0x60] sm:$0xff]
  %v35 = vld [vmem:[%s0 + $0x68] sm:$0xff]
  %v36 = vld [vmem:[%s0 + $0x70] sm:$0xff]
  %v37 = vld [vmem:[%s0 + $0x78] sm:$0xff]
  %vm38 = vcmp.gt.f32.partialorder %v22, 0.0
  %vm39 = vcmp.gt.f32.partialorder %v23, 0.0
  %vm40 = vcmp.gt.f32.partialorder %v24, 0.0
  %vm41 = vcmp.gt.f32.partialorder %v25, 0.0
  %vm42 = vcmp.gt.f32.partialorder %v26, 0.0
  %vm43 = vcmp.gt.f32.partialorder %v27, 0.0
  %vm44 = vcmp.gt.f32.partialorder %v28, 0.0
  %vm45 = vcmp.gt.f32.partialorder %v29, 0.0
  %vm46 = vcmp.gt.f32.partialorder %v30, 0.0
  %vm47 = vcmp.gt.f32.partialorder %v31, 0.0
  %vm48 = vcmp.gt.f32.partialorder %v32, 0.0
  %vm49 = vcmp.gt.f32.partialorder %v33, 0.0
  %vm50 = vcmp.gt.f32.partialorder %v34, 0.0
  %vm51 = vcmp.gt.f32.partialorder %v35, 0.0
  %vm52 = vcmp.gt.f32.partialorder %v36, 0.0
  %vm53 = vcmp.gt.f32.partialorder %v37, 0.0
  %v54 = vmin.f32 %v22, 0.0
  %v55 = vmin.f32 %v23, 0.0
  %v56 = vmin.f32 %v24, 0.0
  %v57 = vmin.f32 %v25, 0.0
  %v58 = vmin.f32 %v26, 0.0
  %v59 = vmin.f32 %v27, 0.0
  %v60 = vmin.f32 %v28, 0.0
  %v61 = vmin.f32 %v29, 0.0
  %v62 = vmin.f32 %v30, 0.0
  %v63 = vmin.f32 %v31, 0.0
  %v64 = vmin.f32 %v32, 0.0
  %v65 = vmin.f32 %v33, 0.0
  %v66 = vmin.f32 %v34, 0.0
  %v67 = vmin.f32 %v35, 0.0
  %v68 = vmin.f32 %v36, 0.0
  %v69 = vmin.f32 %v37, 0.0
  %v70 = vmul.f32 %v54, 1.442695
  %v71 = vpow.pop %v70
  %v72 = vmul.f32 %v55, 1.442695
  %v73 = vpow.pop %v72
  %v74 = vmul.f32 %v56, 1.442695
  %v75 = vpow.pop %v74
  %v76 = vmul.f32 %v57, 1.442695
  %v77 = vpow.pop %v76
  %v78 = vmul.f32 %v58, 1.442695
  %v79 = vpow.pop %v78
  %v80 = vmul.f32 %v59, 1.442695
  %v81 = vpow.pop %v80
  %v82 = vmul.f32 %v60, 1.442695
  %v83 = vpow.pop %v82
  %v84 = vmul.f32 %v61, 1.442695
  %v85 = vpow.pop %v84
  %v86 = vmul.f32 %v62, 1.442695
  %v87 = vpow.pop %v86
  %v88 = vmul.f32 %v63, 1.442695
  %v89 = vpow.pop %v88
  %v90 = vmul.f32 %v64, 1.442695
  %v91 = vpow.pop %v90
  %v92 = vmul.f32 %v65, 1.442695
  %v93 = vpow.pop %v92
  %v94 = vmul.f32 %v66, 1.442695
  %v95 = vpow.pop %v94
  %v96 = vmul.f32 %v67, 1.442695
  %v97 = vpow.pop %v96
  %v98 = vmul.f32 %v68, 1.442695
  %v99 = vpow.pop %v98
  %v100 = vmul.f32 %v69, 1.442695
  %v101 = vpow.pop %v100
  %v102 = vsub.f32 %v71, 1.0
  %v103 = vsub.f32 %v73, 1.0
  %v104 = vsub.f32 %v75, 1.0
  %v105 = vsub.f32 %v77, 1.0
  %v106 = vsub.f32 %v79, 1.0
  %v107 = vsub.f32 %v81, 1.0
  %v108 = vsub.f32 %v83, 1.0
  %v109 = vsub.f32 %v85, 1.0
  %v110 = vsub.f32 %v87, 1.0
  %v111 = vsub.f32 %v89, 1.0
  %v112 = vsub.f32 %v91, 1.0
  %v113 = vsub.f32 %v93, 1.0
  %v114 = vsub.f32 %v95, 1.0
  %v115 = vsub.f32 %v97, 1.0
  %v116 = vsub.f32 %v99, 1.0
  %v117 = vsub.f32 %v101, 1.0
  %v118 = vsel %vm38, %v22, %v102
  %v119 = vsel %vm39, %v23, %v103
  %v120 = vsel %vm40, %v24, %v104
  %v121 = vsel %vm41, %v25, %v105
  %v122 = vsel %vm42, %v26, %v106
  %v123 = vsel %vm43, %v27, %v107
  %v124 = vsel %vm44, %v28, %v108
  %v125 = vsel %vm45, %v29, %v109
  %v126 = vsel %vm46, %v30, %v110
  %v127 = vsel %vm47, %v31, %v111
  %v128 = vsel %vm48, %v32, %v112
  %v129 = vsel %vm49, %v33, %v113
  %v130 = vsel %vm50, %v34, %v114
  %v131 = vsel %vm51, %v35, %v115
  %v132 = vsel %vm52, %v36, %v116
  %v133 = vsel %vm53, %v37, %v117
  %v134 = vld [vmem:[%s1] sm:$0xf]
  %v135 = vld [vmem:[%s1 + $0x4] sm:$0xf]
  %v136 = vld [vmem:[%s1 + $0x8] sm:$0xf]
  %v137 = vld [vmem:[%s1 + $0xc] sm:$0xf]
  %v138 = vpack.c.bf16 %v119, %v118
  %v139 = vpack.c.bf16 %v121, %v120
  %v140 = vpack.c.bf16 %v123, %v122
  %v141 = vpack.c.bf16 %v125, %v124
  %v142 = vpack.c.bf16 %v127, %v126
  %v143 = vpack.c.bf16 %v129, %v128
  %v144 = vpack.c.bf16 %v131, %v130
  %v145 = vpack.c.bf16 %v133, %v132
  %v146 = vld [vmem:[#allocation2] sm:$0x1]
  %v148 = vperm.slane %v146, 0
  %v154 = vunpack.c.l.b16 %v134
  %v155 = vunpack.c.l.b16 %v135
  %v156 = vunpack.c.l.b16 %v136
  %v157 = vunpack.c.l.b16 %v137
  %v158 = vpack.c.b16 %v155, %v154
  %v159 = vpack.c.b16 %v157, %v156
  %vm162 = vcmask 261120
  %v164 = vsel %vm162, %v138, 0
  %v167 = vsel %vm162, %v139, 0
  %v170 = vsel %vm162, %v140, 0
  %v173 = vsel %vm162, %v141, 0
  %v176 = vsel %vm162, %v142, 0
  %v179 = vsel %vm162, %v143, 0
  %v182 = vsel %vm162, %v144, 0
  %v185 = vsel %vm162, %v145, 0
  %187 = vmatpush.bf16.msra.mxu0 0
  %188 = vmatpush.bf16.msra.mxu0 0
  %189 = vmatpush.bf16.msra.mxu0 0
  %190 = vmatpush.bf16.msra.mxu0 0
  %191 = vmatpush.bf16.msra.mxu0 0
  %192 = vmatpush.bf16.msra.mxu0 0
  %193 = vmatpush.bf16.msra.mxu0 %v159
  %194 = vmatpush.bf16.msra.mxu0 %v158
  %195 = vmatmul.bf16.gmra.mxu0 %v164
  %v196 = vpop.f32.mrf.mxu0
  %v197 = vadd.f32 %v148, %v196
  %v198 = vpop.f32.mrf.mxu0
  %v199 = vadd.f32 %v148, %v198
  %200 = vmatmul.bf16.gmra.mxu0 %v167
  %v201 = vpop.f32.mrf.mxu0
  %v202 = vadd.f32 %v148, %v201
  %v203 = vpop.f32.mrf.mxu0
  %v204 = vadd.f32 %v148, %v203
  %205 = vmatmul.bf16.gmra.mxu0 %v170
  %v206 = vpop.f32.mrf.mxu0
  %v207 = vadd.f32 %v148, %v206
  %v208 = vpop.f32.mrf.mxu0
  %v209 = vadd.f32 %v148, %v208
  %210 = vmatmul.bf16.gmra.mxu0 %v173
  %v211 = vpop.f32.mrf.mxu0
  %v212 = vadd.f32 %v148, %v211
  %v213 = vpop.f32.mrf.mxu0
  %v214 = vadd.f32 %v148, %v213
  %215 = vmatmul.bf16.gmra.mxu0 %v176
  %v216 = vpop.f32.mrf.mxu0
  %v217 = vadd.f32 %v148, %v216
  %v218 = vpop.f32.mrf.mxu0
  %v219 = vadd.f32 %v148, %v218
  %220 = vmatmul.bf16.gmra.mxu0 %v179
  %v221 = vpop.f32.mrf.mxu0
  %v222 = vadd.f32 %v148, %v221
  %v223 = vpop.f32.mrf.mxu0
  %v224 = vadd.f32 %v148, %v223
  %225 = vmatmul.bf16.gmra.mxu0 %v182
  %v226 = vpop.f32.mrf.mxu0
  %v227 = vadd.f32 %v148, %v226
  %v228 = vpop.f32.mrf.mxu0
  %v229 = vadd.f32 %v148, %v228
  %230 = vmatmul.bf16.gmra.mxu0 %v185
  %v231 = vpop.f32.mrf.mxu0
  %v232 = vadd.f32 %v148, %v231
  %v233 = vpop.f32.mrf.mxu0
  %v234 = vadd.f32 %v148, %v233
  %235 = vdwg.mxu0
  %vm236 = vcmask 7168
  %237 = vst.msk [vmem:[%s4] sm:$0xff] %vm236, %v197
  %238 = vst.msk [vmem:[%s4 + $0x8] sm:$0xff] %vm236, %v199
  %239 = vst.msk [vmem:[%s4 + $0x10] sm:$0xff] %vm236, %v202
  %240 = vst.msk [vmem:[%s4 + $0x18] sm:$0xff] %vm236, %v204
  %241 = vst.msk [vmem:[%s4 + $0x20] sm:$0xff] %vm236, %v207
  %242 = vst.msk [vmem:[%s4 + $0x28] sm:$0xff] %vm236, %v209
  %243 = vst.msk [vmem:[%s4 + $0x30] sm:$0xff] %vm236, %v212
  %244 = vst.msk [vmem:[%s4 + $0x38] sm:$0xff] %vm236, %v214
  %245 = vst.msk [vmem:[%s4 + $0x40] sm:$0xff] %vm236, %v217
  %246 = vst.msk [vmem:[%s4 + $0x48] sm:$0xff] %vm236, %v219
  %247 = vst.msk [vmem:[%s4 + $0x50] sm:$0xff] %vm236, %v222
  %248 = vst.msk [vmem:[%s4 + $0x58] sm:$0xff] %vm236, %v224
  %249 = vst.msk [vmem:[%s4 + $0x60] sm:$0xff] %vm236, %v227
  %250 = vst.msk [vmem:[%s4 + $0x68] sm:$0xff] %vm236, %v229
  %251 = vst.msk [vmem:[%s4 + $0x70] sm:$0xff] %vm236, %v232
  %252 = vst.msk [vmem:[%s4 + $0x78] sm:$0xff] %vm236, %v234
  %v253 = vld [vmem:[%s3] sm:$0xff]
  %v254 = vld [vmem:[%s3 + $0x8] sm:$0xff]
  %v255 = vld [vmem:[%s3 + $0x10] sm:$0xff]
  %v256 = vld [vmem:[%s3 + $0x18] sm:$0xff]
  %v257 = vld [vmem:[%s3 + $0x20] sm:$0xff]
  %v258 = vld [vmem:[%s3 + $0x28] sm:$0xff]
  %v259 = vld [vmem:[%s3 + $0x30] sm:$0xff]
  %v260 = vld [vmem:[%s3 + $0x38] sm:$0xff]
  %v261 = vld [vmem:[%s3 + $0x40] sm:$0xff]
  %v262 = vld [vmem:[%s3 + $0x48] sm:$0xff]
  %v263 = vld [vmem:[%s3 + $0x50] sm:$0xff]
  %v264 = vld [vmem:[%s3 + $0x58] sm:$0xff]
  %v265 = vld [vmem:[%s3 + $0x60] sm:$0xff]
  %v266 = vld [vmem:[%s3 + $0x68] sm:$0xff]
  %v267 = vld [vmem:[%s3 + $0x70] sm:$0xff]
  %v268 = vld [vmem:[%s3 + $0x78] sm:$0xff]
  %v269 = vsub.f32 0.0, %v197
  %v270 = vsub.f32 0.0, %v199
  %v271 = vsub.f32 0.0, %v202
  %v272 = vsub.f32 0.0, %v204
  %v273 = vsub.f32 0.0, %v207
  %v274 = vsub.f32 0.0, %v209
  %v275 = vsub.f32 0.0, %v212
  %v276 = vsub.f32 0.0, %v214
  %v277 = vsub.f32 0.0, %v217
  %v278 = vsub.f32 0.0, %v219
  %v279 = vsub.f32 0.0, %v222
  %v280 = vsub.f32 0.0, %v224
  %v281 = vsub.f32 0.0, %v227
  %v282 = vsub.f32 0.0, %v229
  %v283 = vsub.f32 0.0, %v232
  %v284 = vsub.f32 0.0, %v234
  %v285 = vmul.f32 %v269, 1.442695
  %v286 = vpow.pop %v285
  %v287 = vmul.f32 %v270, 1.442695
  %v288 = vpow.pop %v287
  %v289 = vmul.f32 %v271, 1.442695
  %v290 = vpow.pop %v289
  %v291 = vmul.f32 %v272, 1.442695
  %v292 = vpow.pop %v291
  %v293 = vmul.f32 %v273, 1.442695
  %v294 = vpow.pop %v293
  %v295 = vmul.f32 %v274, 1.442695
  %v296 = vpow.pop %v295
  %v297 = vmul.f32 %v275, 1.442695
  %v298 = vpow.pop %v297
  %v299 = vmul.f32 %v276, 1.442695
  %v300 = vpow.pop %v299
  %v301 = vmul.f32 %v277, 1.442695
  %v302 = vpow.pop %v301
  %v303 = vmul.f32 %v278, 1.442695
  %v304 = vpow.pop %v303
  %v305 = vmul.f32 %v279, 1.442695
  %v306 = vpow.pop %v305
  %v307 = vmul.f32 %v280, 1.442695
  %v308 = vpow.pop %v307
  %v309 = vmul.f32 %v281, 1.442695
  %v310 = vpow.pop %v309
  %v311 = vmul.f32 %v282, 1.442695
  %v312 = vpow.pop %v311
  %v313 = vmul.f32 %v283, 1.442695
  %v314 = vpow.pop %v313
  %v315 = vmul.f32 %v284, 1.442695
  %v316 = vpow.pop %v315
  %v317 = vadd.f32 %v286, 1.0
  %v318 = vadd.f32 %v288, 1.0
  %v319 = vadd.f32 %v290, 1.0
  %v320 = vadd.f32 %v292, 1.0
  %v321 = vadd.f32 %v294, 1.0
  %v322 = vadd.f32 %v296, 1.0
  %v323 = vadd.f32 %v298, 1.0
  %v324 = vadd.f32 %v300, 1.0
  %v325 = vadd.f32 %v302, 1.0
  %v326 = vadd.f32 %v304, 1.0
  %v327 = vadd.f32 %v306, 1.0
  %v328 = vadd.f32 %v308, 1.0
  %v329 = vadd.f32 %v310, 1.0
  %v330 = vadd.f32 %v312, 1.0
  %v331 = vadd.f32 %v314, 1.0
  %v332 = vadd.f32 %v316, 1.0
  %v333 = vrcp.pop %v317
  %v334 = vmul.f32 %v317, %v333
  %v335 = vsub.f32 1.0, %v334
  %v336 = vmul.f32 %v333, %v335
  %v337 = vadd.f32 %v333, %v336
  %vm338 = vweird.f32 %v317
  %vm339 = vweird.f32 %v333
  %vm340 = vmor %vm338, %vm339
  %v341 = vsel %vm340, %v333, %v337
  %v342 = vand.u32 2147483647, %v317
  %vm343 = vcmp.eq.f32.partialorder %v342, 8.507059e+37
  %v344 = vand.u32 %v317, 2147483648
  %v345 = vor.u32 1.1754944e-38, %v344
  %v346 = vsel %vm343, %v345, %v341
  %v347 = vmul.f32 1.0, %v346
  %v348 = vrcp.pop %v318
  %v349 = vmul.f32 %v318, %v348
  %v350 = vsub.f32 1.0, %v349
  %v351 = vmul.f32 %v348, %v350
  %v352 = vadd.f32 %v348, %v351
  %vm353 = vweird.f32 %v318
  %vm354 = vweird.f32 %v348
  %vm355 = vmor %vm353, %vm354
  %v356 = vsel %vm355, %v348, %v352
  %v357 = vand.u32 2147483647, %v318
  %vm358 = vcmp.eq.f32.partialorder %v357, 8.507059e+37
  %v359 = vand.u32 %v318, 2147483648
  %v360 = vor.u32 1.1754944e-38, %v359
  %v361 = vsel %vm358, %v360, %v356
  %v362 = vmul.f32 1.0, %v361
  %v363 = vrcp.pop %v319
  %v364 = vmul.f32 %v319, %v363
  %v365 = vsub.f32 1.0, %v364
  %v366 = vmul.f32 %v363, %v365
  %v367 = vadd.f32 %v363, %v366
  %vm368 = vweird.f32 %v319
  %vm369 = vweird.f32 %v363
  %vm370 = vmor %vm368, %vm369
  %v371 = vsel %vm370, %v363, %v367
  %v372 = vand.u32 2147483647, %v319
  %vm373 = vcmp.eq.f32.partialorder %v372, 8.507059e+37
  %v374 = vand.u32 %v319, 2147483648
  %v375 = vor.u32 1.1754944e-38, %v374
  %v376 = vsel %vm373, %v375, %v371
  %v377 = vmul.f32 1.0, %v376
  %v378 = vrcp.pop %v320
  %v379 = vmul.f32 %v320, %v378
  %v380 = vsub.f32 1.0, %v379
  %v381 = vmul.f32 %v378, %v380
  %v382 = vadd.f32 %v378, %v381
  %vm383 = vweird.f32 %v320
  %vm384 = vweird.f32 %v378
  %vm385 = vmor %vm383, %vm384
  %v386 = vsel %vm385, %v378, %v382
  %v387 = vand.u32 2147483647, %v320
  %vm388 = vcmp.eq.f32.partialorder %v387, 8.507059e+37
  %v389 = vand.u32 %v320, 2147483648
  %v390 = vor.u32 1.1754944e-38, %v389
  %v391 = vsel %vm388, %v390, %v386
  %v392 = vmul.f32 1.0, %v391
  %v393 = vrcp.pop %v321
  %v394 = vmul.f32 %v321, %v393
  %v395 = vsub.f32 1.0, %v394
  %v396 = vmul.f32 %v393, %v395
  %v397 = vadd.f32 %v393, %v396
  %vm398 = vweird.f32 %v321
  %vm399 = vweird.f32 %v393
  %vm400 = vmor %vm398, %vm399
  %v401 = vsel %vm400, %v393, %v397
  %v402 = vand.u32 2147483647, %v321
  %vm403 = vcmp.eq.f32.partialorder %v402, 8.507059e+37
  %v404 = vand.u32 %v321, 2147483648
  %v405 = vor.u32 1.1754944e-38, %v404
  %v406 = vsel %vm403, %v405, %v401
  %v407 = vmul.f32 1.0, %v406
  %v408 = vrcp.pop %v322
  %v409 = vmul.f32 %v322, %v408
  %v410 = vsub.f32 1.0, %v409
  %v411 = vmul.f32 %v408, %v410
  %v412 = vadd.f32 %v408, %v411
  %vm413 = vweird.f32 %v322
  %vm414 = vweird.f32 %v408
  %vm415 = vmor %vm413, %vm414
  %v416 = vsel %vm415, %v408, %v412
  %v417 = vand.u32 2147483647, %v322
  %vm418 = vcmp.eq.f32.partialorder %v417, 8.507059e+37
  %v419 = vand.u32 %v322, 2147483648
  %v420 = vor.u32 1.1754944e-38, %v419
  %v421 = vsel %vm418, %v420, %v416
  %v422 = vmul.f32 1.0, %v421
  %v423 = vrcp.pop %v323
  %v424 = vmul.f32 %v323, %v423
  %v425 = vsub.f32 1.0, %v424
  %v426 = vmul.f32 %v423, %v425
  %v427 = vadd.f32 %v423, %v426
  %vm428 = vweird.f32 %v323
  %vm429 = vweird.f32 %v423
  %vm430 = vmor %vm428, %vm429
  %v431 = vsel %vm430, %v423, %v427
  %v432 = vand.u32 2147483647, %v323
  %vm433 = vcmp.eq.f32.partialorder %v432, 8.507059e+37
  %v434 = vand.u32 %v323, 2147483648
  %v435 = vor.u32 1.1754944e-38, %v434
  %v436 = vsel %vm433, %v435, %v431
  %v437 = vmul.f32 1.0, %v436
  %v438 = vrcp.pop %v324
  %v439 = vmul.f32 %v324, %v438
  %v440 = vsub.f32 1.0, %v439
  %v441 = vmul.f32 %v438, %v440
  %v442 = vadd.f32 %v438, %v441
  %vm443 = vweird.f32 %v324
  %vm444 = vweird.f32 %v438
  %vm445 = vmor %vm443, %vm444
  %v446 = vsel %vm445, %v438, %v442
  %v447 = vand.u32 2147483647, %v324
  %vm448 = vcmp.eq.f32.partialorder %v447, 8.507059e+37
  %v449 = vand.u32 %v324, 2147483648
  %v450 = vor.u32 1.1754944e-38, %v449
  %v451 = vsel %vm448, %v450, %v446
  %v452 = vmul.f32 1.0, %v451
  %v453 = vrcp.pop %v325
  %v454 = vmul.f32 %v325, %v453
  %v455 = vsub.f32 1.0, %v454
  %v456 = vmul.f32 %v453, %v455
  %v457 = vadd.f32 %v453, %v456
  %vm458 = vweird.f32 %v325
  %vm459 = vweird.f32 %v453
  %vm460 = vmor %vm458, %vm459
  %v461 = vsel %vm460, %v453, %v457
  %v462 = vand.u32 2147483647, %v325
  %vm463 = vcmp.eq.f32.partialorder %v462, 8.507059e+37
  %v464 = vand.u32 %v325, 2147483648
  %v465 = vor.u32 1.1754944e-38, %v464
  %v466 = vsel %vm463, %v465, %v461
  %v467 = vmul.f32 1.0, %v466
  %v468 = vrcp.pop %v326
  %v469 = vmul.f32 %v326, %v468
  %v470 = vsub.f32 1.0, %v469
  %v471 = vmul.f32 %v468, %v470
  %v472 = vadd.f32 %v468, %v471
  %vm473 = vweird.f32 %v326
  %vm474 = vweird.f32 %v468
  %vm475 = vmor %vm473, %vm474
  %v476 = vsel %vm475, %v468, %v472
  %v477 = vand.u32 2147483647, %v326
  %vm478 = vcmp.eq.f32.partialorder %v477, 8.507059e+37
  %v479 = vand.u32 %v326, 2147483648
  %v480 = vor.u32 1.1754944e-38, %v479
  %v481 = vsel %vm478, %v480, %v476
  %v482 = vmul.f32 1.0, %v481
  %v483 = vrcp.pop %v327
  %v484 = vmul.f32 %v327, %v483
  %v485 = vsub.f32 1.0, %v484
  %v486 = vmul.f32 %v483, %v485
  %v487 = vadd.f32 %v483, %v486
  %vm488 = vweird.f32 %v327
  %vm489 = vweird.f32 %v483
  %vm490 = vmor %vm488, %vm489
  %v491 = vsel %vm490, %v483, %v487
  %v492 = vand.u32 2147483647, %v327
  %vm493 = vcmp.eq.f32.partialorder %v492, 8.507059e+37
  %v494 = vand.u32 %v327, 2147483648
  %v495 = vor.u32 1.1754944e-38, %v494
  %v496 = vsel %vm493, %v495, %v491
  %v497 = vmul.f32 1.0, %v496
  %v498 = vrcp.pop %v328
  %v499 = vmul.f32 %v328, %v498
  %v500 = vsub.f32 1.0, %v499
  %v501 = vmul.f32 %v498, %v500
  %v502 = vadd.f32 %v498, %v501
  %vm503 = vweird.f32 %v328
  %vm504 = vweird.f32 %v498
  %vm505 = vmor %vm503, %vm504
  %v506 = vsel %vm505, %v498, %v502
  %v507 = vand.u32 2147483647, %v328
  %vm508 = vcmp.eq.f32.partialorder %v507, 8.507059e+37
  %v509 = vand.u32 %v328, 2147483648
  %v510 = vor.u32 1.1754944e-38, %v509
  %v511 = vsel %vm508, %v510, %v506
  %v512 = vmul.f32 1.0, %v511
  %v513 = vrcp.pop %v329
  %v514 = vmul.f32 %v329, %v513
  %v515 = vsub.f32 1.0, %v514
  %v516 = vmul.f32 %v513, %v515
  %v517 = vadd.f32 %v513, %v516
  %vm518 = vweird.f32 %v329
  %vm519 = vweird.f32 %v513
  %vm520 = vmor %vm518, %vm519
  %v521 = vsel %vm520, %v513, %v517
  %v522 = vand.u32 2147483647, %v329
  %vm523 = vcmp.eq.f32.partialorder %v522, 8.507059e+37
  %v524 = vand.u32 %v329, 2147483648
  %v525 = vor.u32 1.1754944e-38, %v524
  %v526 = vsel %vm523, %v525, %v521
  %v527 = vmul.f32 1.0, %v526
  %v528 = vrcp.pop %v330
  %v529 = vmul.f32 %v330, %v528
  %v530 = vsub.f32 1.0, %v529
  %v531 = vmul.f32 %v528, %v530
  %v532 = vadd.f32 %v528, %v531
  %vm533 = vweird.f32 %v330
  %vm534 = vweird.f32 %v528
  %vm535 = vmor %vm533, %vm534
  %v536 = vsel %vm535, %v528, %v532
  %v537 = vand.u32 2147483647, %v330
  %vm538 = vcmp.eq.f32.partialorder %v537, 8.507059e+37
  %v539 = vand.u32 %v330, 2147483648
  %v540 = vor.u32 1.1754944e-38, %v539
  %v541 = vsel %vm538, %v540, %v536
  %v542 = vmul.f32 1.0, %v541
  %v543 = vrcp.pop %v331
  %v544 = vmul.f32 %v331, %v543
  %v545 = vsub.f32 1.0, %v544
  %v546 = vmul.f32 %v543, %v545
  %v547 = vadd.f32 %v543, %v546
  %vm548 = vweird.f32 %v331
  %vm549 = vweird.f32 %v543
  %vm550 = vmor %vm548, %vm549
  %v551 = vsel %vm550, %v543, %v547
  %v552 = vand.u32 2147483647, %v331
  %vm553 = vcmp.eq.f32.partialorder %v552, 8.507059e+37
  %v554 = vand.u32 %v331, 2147483648
  %v555 = vor.u32 1.1754944e-38, %v554
  %v556 = vsel %vm553, %v555, %v551
  %v557 = vmul.f32 1.0, %v556
  %v558 = vrcp.pop %v332
  %v559 = vmul.f32 %v332, %v558
  %v560 = vsub.f32 1.0, %v559
  %v561 = vmul.f32 %v558, %v560
  %v562 = vadd.f32 %v558, %v561
  %vm563 = vweird.f32 %v332
  %vm564 = vweird.f32 %v558
  %vm565 = vmor %vm563, %vm564
  %v566 = vsel %vm565, %v558, %v562
  %v567 = vand.u32 2147483647, %v332
  %vm568 = vcmp.eq.f32.partialorder %v567, 8.507059e+37
  %v569 = vand.u32 %v332, 2147483648
  %v570 = vor.u32 1.1754944e-38, %v569
  %v571 = vsel %vm568, %v570, %v566
  %v572 = vmul.f32 1.0, %v571
  %vm573 = vcmp.lt.f32.partialorder %v253, %v347
  %vm574 = vcmp.lt.f32.partialorder %v254, %v362
  %vm575 = vcmp.lt.f32.partialorder %v255, %v377
  %vm576 = vcmp.lt.f32.partialorder %v256, %v392
  %vm577 = vcmp.lt.f32.partialorder %v257, %v407
  %vm578 = vcmp.lt.f32.partialorder %v258, %v422
  %vm579 = vcmp.lt.f32.partialorder %v259, %v437
  %vm580 = vcmp.lt.f32.partialorder %v260, %v452
  %vm581 = vcmp.lt.f32.partialorder %v261, %v467
  %vm582 = vcmp.lt.f32.partialorder %v262, %v482
  %vm583 = vcmp.lt.f32.partialorder %v263, %v497
  %vm584 = vcmp.lt.f32.partialorder %v264, %v512
  %vm585 = vcmp.lt.f32.partialorder %v265, %v527
  %vm586 = vcmp.lt.f32.partialorder %v266, %v542
  %vm587 = vcmp.lt.f32.partialorder %v267, %v557
  %vm588 = vcmp.lt.f32.partialorder %v268, %v572
  %v589 = vsel %vm573, 1, 0
  %v590 = vsel %vm574, 1, 0
  %v591 = vsel %vm575, 1, 0
  %v592 = vsel %vm576, 1, 0
  %v593 = vsel %vm577, 1, 0
  %v594 = vsel %vm578, 1, 0
  %v595 = vsel %vm579, 1, 0
  %v596 = vsel %vm580, 1, 0
  %v597 = vsel %vm581, 1, 0
  %v598 = vsel %vm582, 1, 0
  %v599 = vsel %vm583, 1, 0
  %v600 = vsel %vm584, 1, 0
  %v601 = vsel %vm585, 1, 0
  %v602 = vsel %vm586, 1, 0
  %v603 = vsel %vm587, 1, 0
  %v604 = vsel %vm588, 1, 0
  %v605 = vcvt.s32.f32 %v589
  %v606 = vcvt.s32.f32 %v590
  %v607 = vcvt.s32.f32 %v591
  %v608 = vcvt.s32.f32 %v592
  %v609 = vcvt.s32.f32 %v593
  %v610 = vcvt.s32.f32 %v594
  %v611 = vcvt.s32.f32 %v595
  %v612 = vcvt.s32.f32 %v596
  %v613 = vcvt.s32.f32 %v597
  %v614 = vcvt.s32.f32 %v598
  %v615 = vcvt.s32.f32 %v599
  %v616 = vcvt.s32.f32 %v600
  %v617 = vcvt.s32.f32 %v601
  %v618 = vcvt.s32.f32 %v602
  %v619 = vcvt.s32.f32 %v603
  %v620 = vcvt.s32.f32 %v604
  %621 = vst.msk [vmem:[%s5] sm:$0xff] %vm236, %v605
  %622 = vst.msk [vmem:[%s5 + $0x8] sm:$0xff] %vm236, %v606
  %623 = vst.msk [vmem:[%s5 + $0x10] sm:$0xff] %vm236, %v607
  %624 = vst.msk [vmem:[%s5 + $0x18] sm:$0xff] %vm236, %v608
  %625 = vst.msk [vmem:[%s5 + $0x20] sm:$0xff] %vm236, %v609
  %626 = vst.msk [vmem:[%s5 + $0x28] sm:$0xff] %vm236, %v610
  %627 = vst.msk [vmem:[%s5 + $0x30] sm:$0xff] %vm236, %v611
  %628 = vst.msk [vmem:[%s5 + $0x38] sm:$0xff] %vm236, %v612
  %629 = vst.msk [vmem:[%s5 + $0x40] sm:$0xff] %vm236, %v613
  %630 = vst.msk [vmem:[%s5 + $0x48] sm:$0xff] %vm236, %v614
  %631 = vst.msk [vmem:[%s5 + $0x50] sm:$0xff] %vm236, %v615
  %632 = vst.msk [vmem:[%s5 + $0x58] sm:$0xff] %vm236, %v616
  %633 = vst.msk [vmem:[%s5 + $0x60] sm:$0xff] %vm236, %v617
  %634 = vst.msk [vmem:[%s5 + $0x68] sm:$0xff] %vm236, %v618
  %635 = vst.msk [vmem:[%s5 + $0x70] sm:$0xff] %vm236, %v619
  %636 = vst.msk [vmem:[%s5 + $0x78] sm:$0xff] %vm236, %v620
  // Predicated region
  $region18: #{pixel_snail_forward.11} parent=0 // pred_check
    _
  $region19: #{pixel_snail_forward.11} parent=0 // pred_check_branch
    %638 = sbr.rel (0) target = $region21
  $region20: #{pixel_snail_forward.11} parent=0 // pred_region
    _
  $region21: #{pixel_snail_forward.11} parent=0 // pred_fallthru
    _
  // Predicated region
  $region22: #{pixel_snail_forward.11} parent=0 // pred_check
    _
  $region23: #{pixel_snail_forward.11} parent=0 // pred_check_branch
    %640 = sbr.rel (0) target = $region25
  $region24: #{pixel_snail_forward.11} parent=0 // pred_region
    _
  $region25: #{pixel_snail_forward.11} parent=0 // pred_fallthru
    _
  // Predicated region
  $region26: #{pixel_snail_forward.11} parent=0 // pred_check
    _
  $region27: #{pixel_snail_forward.11} parent=0 // pred_check_branch
    %642 = sbr.rel (0) target = $region29
  $region28: #{pixel_snail_forward.11} parent=0 // pred_region
    _
  $region29: #{pixel_snail_forward.11} parent=0 // pred_fallthru
    _
  // Predicated region
  $region30: #{pixel_snail_forward.11} parent=0 // pred_check
    _
  $region31: #{pixel_snail_forward.11} parent=0 // pred_check_branch
    %644 = sbr.rel (0) target = $region33
  $region32: #{pixel_snail_forward.11} parent=0 // pred_region
    _
  $region33: #{pixel_snail_forward.11} parent=0 // pred_fallthru
    _

</llo_original>
